<compile_context>
chip_gen: v6e
topology: v6e:2x2x1
jax: 0.10.0
libtpu: 0.0.40
codegen_flags: <defaults>
</compile_context>

<pallas_src>
import functools

import jax
import jax.numpy as jnp
from jax.experimental import pallas as pl
from jax.experimental.pallas import tpu as pltpu


def _mhsa_kernel(q_ref, k_ref, v_ref, bias_ref,
                 wq_ref, bq_ref, wk_ref, bk_ref, wv_ref, bv_ref,
                 wo_ref, bo_ref, gamma_ref, beta_ref,
                 out_ref, ctx_ref, *, n_heads, d_k, d_v, eps):
    resid = q_ref[0]                               # (Np, D) fp32 residual path
    q_bf = resid.astype(jnp.bfloat16)
    k_bf = k_ref[0]                                # (Np, D) bf16
    v_bf = v_ref[0]                                # (Np, D) bf16

    # Fused full-width projections: one wide MXU matmul per tensor.
    # (1/sqrt(d_k) is pre-folded into wq/bq by the wrapper.)
    q_all = jnp.dot(q_bf, wq_ref[...], preferred_element_type=jnp.float32) + bq_ref[...]
    k_all = jnp.dot(k_bf, wk_ref[...], preferred_element_type=jnp.float32) + bk_ref[...]
    v_all = jnp.dot(v_bf, wv_ref[...], preferred_element_type=jnp.float32) + bv_ref[...]

    # Per-head biased softmax attention (static unrolled loop, static slices).
    # TODO(synk): for very large n_blocks, switch this to a flash-style online
    # softmax over key/value tiles to cap the (N,N) fp32 transient.
    for h in range(n_heads):
        qh = q_all[:, h * d_k:(h + 1) * d_k].astype(jnp.bfloat16)
        kh = k_all[:, h * d_k:(h + 1) * d_k].astype(jnp.bfloat16)
        vh = v_all[:, h * d_v:(h + 1) * d_v].astype(jnp.bfloat16)

        logits = jax.lax.dot_general(qh, kh, (((1,), (1,)), ((), ())),
                                     preferred_element_type=jnp.float32)
        logits = logits + bias_ref[0, h]           # fused structural bias (f32)

        m = jnp.max(logits, axis=-1, keepdims=True)
        p = jnp.exp(logits - m)
        inv = pl.reciprocal(jnp.sum(p, axis=-1, keepdims=True), approx=True)
        attn = (p * inv).astype(jnp.bfloat16)

        ctx_ref[:, h * d_v:(h + 1) * d_v] = jnp.dot(
            attn, vh, preferred_element_type=jnp.float32)

    # Single wide output projection over all heads, then bias+residual+LN.
    out = jnp.dot(ctx_ref[...].astype(jnp.bfloat16), wo_ref[...],
                  preferred_element_type=jnp.float32)
    out = out + bo_ref[...] + resid
    mean = jnp.mean(out, axis=-1, keepdims=True)
    var = jnp.mean((out - mean) ** 2, axis=-1, keepdims=True)
    normed = (out - mean) * jax.lax.rsqrt(var + eps)
    out_ref[0] = normed * gamma_ref[...] + beta_ref[...]


def multi_head_structure_attention(q, k, v, bias, graph_attn_bias, params,
                                   *, n_heads, d_k, d_v, eps=1e-6):
    B, N, D = q.shape
    wq, bq, wk, bk, wv, bv, wo, bo, gamma, beta = params
    HDK, HDV = n_heads * d_k, n_heads * d_v

    # --- wrapper-side prep (cheap fused XLA ops) -----------------------------
    # 1) Fuse the two structural bias tensors into one stream.
    fused_bias = (bias + graph_attn_bias).astype(jnp.float32)
    # 2) Fold the 1/sqrt(d_k) scale into the Q projection.
    scale = 1.0 / (float(d_k) ** 0.5)
    wq_b = (wq * scale).astype(jnp.bfloat16)
    bq_s = (bq * scale).astype(jnp.float32)
    wk_b = wk.astype(jnp.bfloat16)
    wv_b = wv.astype(jnp.bfloat16)
    wo_b = wo.astype(jnp.bfloat16)
    # 3) Pad n_blocks up to a lane-dense multiple of 128. Padded keys are
    #    masked with a large negative bias; padded query rows are discarded.
    Np = ((N + 127) // 128) * 128
    if Np != N:
        pad = Np - N
        q_in = jnp.pad(q, ((0, 0), (0, pad), (0, 0)))
        k_in = jnp.pad(k, ((0, 0), (0, pad), (0, 0)))
        v_in = jnp.pad(v, ((0, 0), (0, pad), (0, 0)))
        fused_bias = jnp.pad(fused_bias, ((0, 0), (0, 0), (0, pad), (0, pad)),
                             constant_values=-1e30)
    else:
        q_in, k_in, v_in = q, k, v
    q_in = q_in.astype(jnp.float32)        # residual path stays fp32
    k_in = k_in.astype(jnp.bfloat16)
    v_in = v_in.astype(jnp.bfloat16)
    # TODO(synk): if d_model is not a multiple of 128, the output stores are
    # lane-masked; pad d_model (with a masked LayerNorm) for production shapes.

    seq_spec = pl.BlockSpec((1, Np, D), lambda b: (b, 0, 0))
    bias_spec = pl.BlockSpec((1, n_heads, Np, Np), lambda b: (b, 0, 0, 0))

    def const2(shape):
        return pl.BlockSpec(shape, lambda b: (0, 0))

    kernel = functools.partial(_mhsa_kernel, n_heads=n_heads,
                               d_k=d_k, d_v=d_v, eps=eps)

    out = pl.pallas_call(
        kernel,
        out_shape=jax.ShapeDtypeStruct((B, Np, D), jnp.float32),
        grid_spec=pltpu.PrefetchScalarGridSpec(
            num_scalar_prefetch=0,
            grid=(B,),
            in_specs=[
                seq_spec, seq_spec, seq_spec,          # q (f32), k, v (bf16)
                bias_spec,                             # fused structural bias
                const2((D, HDK)), const2((1, HDK)),    # w_qs (scaled), b_qs
                const2((D, HDK)), const2((1, HDK)),    # w_ks, b_ks
                const2((D, HDV)), const2((1, HDV)),    # w_vs, b_vs
                const2((HDV, D)), const2((1, D)),      # fc weight, fc bias
                const2((1, D)), const2((1, D)),        # layer_norm gamma, beta
            ],
            out_specs=pl.BlockSpec((1, Np, D), lambda b: (b, 0, 0)),
            scratch_shapes=[pltpu.VMEM((Np, HDV), jnp.float32)],   # ctx scratch
        ),
        compiler_params=pltpu.CompilerParams(
            dimension_semantics=("parallel",),
            vmem_limit_bytes=64 * 1024 * 1024),
        # TODO(synk): for v7x small-batch cases, add a parallel query-row tile
        # grid axis so megacore sharding can use both TensorCores.
    )(q_in, k_in, v_in, fused_bias,
      wq_b, bq_s, wk_b, bk, wv_b, bv, wo_b, bo, gamma, beta)

    return out[:, :N, :]


def reference(q, k, v, bias, gbias, params, *, n_heads, d_k, d_v):
    """Pure-JAX fp32 reference matching the PyTorch forward pass."""
    wq, bq, wk, bk, wv, bv, wo, bo, gamma, beta = params
    B, N, D = q.shape
    qp = (q @ wq + bq).reshape(B, N, n_heads, d_k).transpose(0, 2, 1, 3)
    kp = (k @ wk + bk).reshape(B, N, n_heads, d_k).transpose(0, 2, 1, 3)
    vp = (v @ wv + bv).reshape(B, N, n_heads, d_v).transpose(0, 2, 1, 3)
    logits = jnp.einsum('bhqd,bhkd->bhqk', qp, kp) / jnp.sqrt(d_k) + bias + gbias
    attn = jax.nn.softmax(logits, axis=-1)
    ctx = jnp.einsum('bhqk,bhkd->bhqd', attn, vp)
    ctx = ctx.transpose(0, 2, 1, 3).reshape(B, N, n_heads * d_v)
    out = ctx @ wo + bo + q
    mean = jnp.mean(out, axis=-1, keepdims=True)
    var = jnp.mean((out - mean) ** 2, axis=-1, keepdims=True)
    return (out - mean) * jax.lax.rsqrt(var + 1e-6) * gamma + beta


def init_params(key, n_heads, d_model, d_k, d_v):
    """Deterministic PyTorch-Linear-style uniform init; LN gamma=1, beta=0."""
    ks = jax.random.split(key, 8)
    lim_in = 1.0 / (d_model ** 0.5)
    lim_fc = 1.0 / ((n_heads * d_v) ** 0.5)
    u = lambda k, s, lim: jax.random.uniform(k, s, jnp.float32, -lim, lim)
    wq = u(ks[0], (d_model, n_heads * d_k), lim_in)
    bq = u(ks[1], (1, n_heads * d_k), lim_in)
    wk = u(ks[2], (d_model, n_heads * d_k), lim_in)
    bk = u(ks[3], (1, n_heads * d_k), lim_in)
    wv = u(ks[4], (d_model, n_heads * d_v), lim_in)
    bv = u(ks[5], (1, n_heads * d_v), lim_in)
    wo = u(ks[6], (n_heads * d_v, d_model), lim_fc)
    bo = u(ks[7], (1, d_model), lim_fc)
    gamma = jnp.ones((1, d_model), jnp.float32)
    beta = jnp.zeros((1, d_model), jnp.float32)
    return (wq, bq, wk, bk, wv, bv, wo, bo, gamma, beta)


if __name__ == "__main__":
    # Small shapes: d_model = n_heads * d_k = n_heads * d_v
    B, N, H, DK, DV = 2, 8, 4, 8, 8
    D = H * DK
    POS_WIN = 2.0  # unused by the encoder graph attention (decoder-only param)

    key = jax.random.PRNGKey(0)
    kq, kk, kv, kb, kg, kp = jax.random.split(key, 6)
    q = jax.random.normal(kq, (B, N, D), jnp.float32)
    k = jax.random.normal(kk, (B, N, D), jnp.float32)
    v = jax.random.normal(kv, (B, N, D), jnp.float32)
    bias = jax.random.normal(kb, (B, H, N, N), jnp.float32)
    graph_attn_bias = jax.random.normal(kg, (B, H, N, N), jnp.float32)
    params = init_params(kp, H, D, DK, DV)

    out = multi_head_structure_attention(
        q, k, v, bias, graph_attn_bias, params, n_heads=H, d_k=DK, d_v=DV)
    out = jax.block_until_ready(out)

    ref = reference(q, k, v, bias, graph_attn_bias, params,
                    n_heads=H, d_k=DK, d_v=DV)
    assert out.shape == (B, N, D)
    # bf16 matmul operands in the kernel vs fp32 reference -> loosened tolerance.
    assert jnp.allclose(out, ref, atol=3e-2, rtol=3e-2), "mismatch vs reference"

    # TODO(synk): dropout (rate 0 by default) is omitted; add pltpu PRNG-based
    # masking if a nonzero rate is ever needed.
    print("KERNEL_OK")
</pallas_src>

<mosaic_0001>
module attributes {stable_mosaic.version = 11 : i64} {
  func.func @_mhsa_kernel(%arg0: i32, %arg1: memref<1x128x32xf32, #tpu.memory_space<vmem>>, %arg2: memref<1x128x32xbf16, #tpu.memory_space<vmem>>, %arg3: memref<1x128x32xbf16, #tpu.memory_space<vmem>>, %arg4: memref<1x4x128x128xf32, #tpu.memory_space<vmem>>, %arg5: memref<32x32xbf16, #tpu.memory_space<vmem>>, %arg6: memref<1x32xf32, #tpu.memory_space<vmem>>, %arg7: memref<32x32xbf16, #tpu.memory_space<vmem>>, %arg8: memref<1x32xf32, #tpu.memory_space<vmem>>, %arg9: memref<32x32xbf16, #tpu.memory_space<vmem>>, %arg10: memref<1x32xf32, #tpu.memory_space<vmem>>, %arg11: memref<32x32xbf16, #tpu.memory_space<vmem>>, %arg12: memref<1x32xf32, #tpu.memory_space<vmem>>, %arg13: memref<1x32xf32, #tpu.memory_space<vmem>>, %arg14: memref<1x32xf32, #tpu.memory_space<vmem>>, %arg15: memref<1x128x32xf32, #tpu.memory_space<vmem>>, %arg16: memref<128x32xf32, #tpu.memory_space<vmem>>) attributes {dimension_semantics = [#tpu.dimension_semantics<parallel>], iteration_bounds = array<i64: 2>, scalar_prefetch = 0 : i64, scratch_operands = 1 : i64, tpu.core_type = #tpu.core_type<tc>, window_params = [{transform_indices = @transform_0, window_bounds = array<i64: 1, 128, 32>}, {transform_indices = @transform_1, window_bounds = array<i64: 1, 128, 32>}, {transform_indices = @transform_2, window_bounds = array<i64: 1, 128, 32>}, {transform_indices = @transform_3, window_bounds = array<i64: 1, 4, 128, 128>}, {pipeline_mode = #tpu.pipeline_mode<synchronous>, transform_indices = @transform_4, window_bounds = array<i64: 32, 32>}, {pipeline_mode = #tpu.pipeline_mode<synchronous>, transform_indices = @transform_5, window_bounds = array<i64: 1, 32>}, {pipeline_mode = #tpu.pipeline_mode<synchronous>, transform_indices = @transform_6, window_bounds = array<i64: 32, 32>}, {pipeline_mode = #tpu.pipeline_mode<synchronous>, transform_indices = @transform_7, window_bounds = array<i64: 1, 32>}, {pipeline_mode = #tpu.pipeline_mode<synchronous>, transform_indices = @transform_8, window_bounds = array<i64: 32, 32>}, {pipeline_mode = #tpu.pipeline_mode<synchronous>, transform_indices = @transform_9, window_bounds = array<i64: 1, 32>}, {pipeline_mode = #tpu.pipeline_mode<synchronous>, transform_indices = @transform_10, window_bounds = array<i64: 32, 32>}, {pipeline_mode = #tpu.pipeline_mode<synchronous>, transform_indices = @transform_11, window_bounds = array<i64: 1, 32>}, {pipeline_mode = #tpu.pipeline_mode<synchronous>, transform_indices = @transform_12, window_bounds = array<i64: 1, 32>}, {pipeline_mode = #tpu.pipeline_mode<synchronous>, transform_indices = @transform_13, window_bounds = array<i64: 1, 32>}, {transform_indices = @transform_14, window_bounds = array<i64: 1, 128, 32>}]} {
    %c0 = arith.constant 0 : index
    %c0_0 = arith.constant 0 : index
    %c0_1 = arith.constant 0 : index
    %0 = vector.load %arg1[%c0, %c0_0, %c0_1] : memref<1x128x32xf32, #tpu.memory_space<vmem>>, vector<1x128x32xf32>
    %1 = vector.shape_cast %0 : vector<1x128x32xf32> to vector<128x32xf32>
    %2 = arith.truncf %1 : vector<128x32xf32> to vector<128x32xbf16>
    %c0_2 = arith.constant 0 : index
    %c0_3 = arith.constant 0 : index
    %c0_4 = arith.constant 0 : index
    %3 = vector.load %arg2[%c0_2, %c0_3, %c0_4] : memref<1x128x32xbf16, #tpu.memory_space<vmem>>, vector<1x128x32xbf16>
    %4 = vector.shape_cast %3 : vector<1x128x32xbf16> to vector<128x32xbf16>
    %c0_5 = arith.constant 0 : index
    %c0_6 = arith.constant 0 : index
    %c0_7 = arith.constant 0 : index
    %5 = vector.load %arg3[%c0_5, %c0_6, %c0_7] : memref<1x128x32xbf16, #tpu.memory_space<vmem>>, vector<1x128x32xbf16>
    %6 = vector.shape_cast %5 : vector<1x128x32xbf16> to vector<128x32xbf16>
    %c0_8 = arith.constant 0 : index
    %c0_9 = arith.constant 0 : index
    %7 = vector.load %arg5[%c0_8, %c0_9] : memref<32x32xbf16, #tpu.memory_space<vmem>>, vector<32x32xbf16>
    %cst = arith.constant dense<0.000000e+00> : vector<128x32xf32>
    %8 = tpu.matmul %2, %7, %cst {dimension_numbers = #tpu.dot_dimension_numbers<[1], [0], [0], [1], [0, 0, 1, 1], [], []>} : vector<128x32xbf16>, vector<32x32xbf16>, vector<128x32xf32> -> vector<128x32xf32>
    %c0_10 = arith.constant 0 : index
    %c0_11 = arith.constant 0 : index
    %9 = vector.load %arg6[%c0_10, %c0_11] : memref<1x32xf32, #tpu.memory_space<vmem>>, vector<1x32xf32>
    %10 = vector.broadcast %9 : vector<1x32xf32> to vector<128x32xf32>
    %11 = arith.addf %8, %10 : vector<128x32xf32>
    %c0_12 = arith.constant 0 : index
    %c0_13 = arith.constant 0 : index
    %12 = vector.load %arg7[%c0_12, %c0_13] : memref<32x32xbf16, #tpu.memory_space<vmem>>, vector<32x32xbf16>
    %cst_14 = arith.constant dense<0.000000e+00> : vector<128x32xf32>
    %13 = tpu.matmul %4, %12, %cst_14 {dimension_numbers = #tpu.dot_dimension_numbers<[1], [0], [0], [1], [0, 0, 1, 1], [], []>} : vector<128x32xbf16>, vector<32x32xbf16>, vector<128x32xf32> -> vector<128x32xf32>
    %c0_15 = arith.constant 0 : index
    %c0_16 = arith.constant 0 : index
    %14 = vector.load %arg8[%c0_15, %c0_16] : memref<1x32xf32, #tpu.memory_space<vmem>>, vector<1x32xf32>
    %15 = vector.broadcast %14 : vector<1x32xf32> to vector<128x32xf32>
    %16 = arith.addf %13, %15 : vector<128x32xf32>
    %c0_17 = arith.constant 0 : index
    %c0_18 = arith.constant 0 : index
    %17 = vector.load %arg9[%c0_17, %c0_18] : memref<32x32xbf16, #tpu.memory_space<vmem>>, vector<32x32xbf16>
    %cst_19 = arith.constant dense<0.000000e+00> : vector<128x32xf32>
    %18 = tpu.matmul %6, %17, %cst_19 {dimension_numbers = #tpu.dot_dimension_numbers<[1], [0], [0], [1], [0, 0, 1, 1], [], []>} : vector<128x32xbf16>, vector<32x32xbf16>, vector<128x32xf32> -> vector<128x32xf32>
    %c0_20 = arith.constant 0 : index
    %c0_21 = arith.constant 0 : index
    %19 = vector.load %arg10[%c0_20, %c0_21] : memref<1x32xf32, #tpu.memory_space<vmem>>, vector<1x32xf32>
    %20 = vector.broadcast %19 : vector<1x32xf32> to vector<128x32xf32>
    %21 = arith.addf %18, %20 : vector<128x32xf32>
    %22 = vector.extract_strided_slice %11 {offsets = [0, 0], sizes = [128, 8], strides = [1, 1]} : vector<128x32xf32> to vector<128x8xf32>
    %23 = arith.truncf %22 : vector<128x8xf32> to vector<128x8xbf16>
    %24 = vector.extract_strided_slice %16 {offsets = [0, 0], sizes = [128, 8], strides = [1, 1]} : vector<128x32xf32> to vector<128x8xf32>
    %25 = arith.truncf %24 : vector<128x8xf32> to vector<128x8xbf16>
    %26 = vector.extract_strided_slice %21 {offsets = [0, 0], sizes = [128, 8], strides = [1, 1]} : vector<128x32xf32> to vector<128x8xf32>
    %27 = arith.truncf %26 : vector<128x8xf32> to vector<128x8xbf16>
    %cst_22 = arith.constant dense<0.000000e+00> : vector<128x128xf32>
    %28 = tpu.matmul %23, %25, %cst_22 {dimension_numbers = #tpu.dot_dimension_numbers<[1], [1], [0], [0], [0, 0, 1, 0], [], []>} : vector<128x8xbf16>, vector<128x8xbf16>, vector<128x128xf32> -> vector<128x128xf32>
    %c0_23 = arith.constant 0 : index
    %c0_24 = arith.constant 0 : index
    %c0_25 = arith.constant 0 : index
    %c0_26 = arith.constant 0 : index
    %29 = vector.load %arg4[%c0_23, %c0_24, %c0_25, %c0_26] : memref<1x4x128x128xf32, #tpu.memory_space<vmem>>, vector<1x1x128x128xf32>
    %30 = vector.shape_cast %29 : vector<1x1x128x128xf32> to vector<128x128xf32>
    %31 = arith.addf %28, %30 : vector<128x128xf32>
    %cst_27 = arith.constant dense<0xFF800000> : vector<128xf32>
    %32 = vector.multi_reduction <maximumf>, %31, %cst_27 [1] : vector<128x128xf32> to vector<128xf32>
    %33 = vector.shape_cast %32 : vector<128xf32> to vector<128x1xf32>
    %34 = vector.broadcast %33 : vector<128x1xf32> to vector<128x128xf32>
    %35 = arith.subf %31, %34 : vector<128x128xf32>
    %36 = math.exp %35 : vector<128x128xf32>
    %cst_28 = arith.constant dense<0.000000e+00> : vector<128xf32>
    %37 = vector.multi_reduction <add>, %36, %cst_28 [1] : vector<128x128xf32> to vector<128xf32>
    %38 = vector.shape_cast %37 : vector<128xf32> to vector<128x1xf32>
    %39 = tpu.reciprocal %38 {approx = true} : vector<128x1xf32> -> vector<128x1xf32>
    %40 = vector.broadcast %39 : vector<128x1xf32> to vector<128x128xf32>
    %41 = arith.mulf %36, %40 : vector<128x128xf32>
    %42 = arith.truncf %41 : vector<128x128xf32> to vector<128x128xbf16>
    %cst_29 = arith.constant dense<0.000000e+00> : vector<128x8xf32>
    %43 = tpu.matmul %42, %27, %cst_29 {dimension_numbers = #tpu.dot_dimension_numbers<[1], [0], [0], [1], [0, 0, 1, 1], [], []>} : vector<128x128xbf16>, vector<128x8xbf16>, vector<128x8xf32> -> vector<128x8xf32>
    %c0_30 = arith.constant 0 : index
    %c0_31 = arith.constant 0 : index
    %44 = vector.load %arg16[%c0_30, %c0_31] : memref<128x32xf32, #tpu.memory_space<vmem>>, vector<128x8xf32>
    tpu.vector_store %arg16[%c0_30, %c0_31], %43 {strides = array<i32>} : memref<128x32xf32, #tpu.memory_space<vmem>>, vector<128x8xf32>,
    %45 = vector.extract_strided_slice %11 {offsets = [0, 8], sizes = [128, 8], strides = [1, 1]} : vector<128x32xf32> to vector<128x8xf32>
    %46 = arith.truncf %45 : vector<128x8xf32> to vector<128x8xbf16>
    %47 = vector.extract_strided_slice %16 {offsets = [0, 8], sizes = [128, 8], strides = [1, 1]} : vector<128x32xf32> to vector<128x8xf32>
    %48 = arith.truncf %47 : vector<128x8xf32> to vector<128x8xbf16>
    %49 = vector.extract_strided_slice %21 {offsets = [0, 8], sizes = [128, 8], strides = [1, 1]} : vector<128x32xf32> to vector<128x8xf32>
    %50 = arith.truncf %49 : vector<128x8xf32> to vector<128x8xbf16>
    %cst_32 = arith.constant dense<0.000000e+00> : vector<128x128xf32>
    %51 = tpu.matmul %46, %48, %cst_32 {dimension_numbers = #tpu.dot_dimension_numbers<[1], [1], [0], [0], [0, 0, 1, 0], [], []>} : vector<128x8xbf16>, vector<128x8xbf16>, vector<128x128xf32> -> vector<128x128xf32>
    %c0_33 = arith.constant 0 : index
    %c1 = arith.constant 1 : index
    %c0_34 = arith.constant 0 : index
    %c0_35 = arith.constant 0 : index
    %52 = vector.load %arg4[%c0_33, %c1, %c0_34, %c0_35] : memref<1x4x128x128xf32, #tpu.memory_space<vmem>>, vector<1x1x128x128xf32>
    %53 = vector.shape_cast %52 : vector<1x1x128x128xf32> to vector<128x128xf32>
    %54 = arith.addf %51, %53 : vector<128x128xf32>
    %cst_36 = arith.constant dense<0xFF800000> : vector<128xf32>
    %55 = vector.multi_reduction <maximumf>, %54, %cst_36 [1] : vector<128x128xf32> to vector<128xf32>
    %56 = vector.shape_cast %55 : vector<128xf32> to vector<128x1xf32>
    %57 = vector.broadcast %56 : vector<128x1xf32> to vector<128x128xf32>
    %58 = arith.subf %54, %57 : vector<128x128xf32>
    %59 = math.exp %58 : vector<128x128xf32>
    %cst_37 = arith.constant dense<0.000000e+00> : vector<128xf32>
    %60 = vector.multi_reduction <add>, %59, %cst_37 [1] : vector<128x128xf32> to vector<128xf32>
    %61 = vector.shape_cast %60 : vector<128xf32> to vector<128x1xf32>
    %62 = tpu.reciprocal %61 {approx = true} : vector<128x1xf32> -> vector<128x1xf32>
    %63 = vector.broadcast %62 : vector<128x1xf32> to vector<128x128xf32>
    %64 = arith.mulf %59, %63 : vector<128x128xf32>
    %65 = arith.truncf %64 : vector<128x128xf32> to vector<128x128xbf16>
    %cst_38 = arith.constant dense<0.000000e+00> : vector<128x8xf32>
    %66 = tpu.matmul %65, %50, %cst_38 {dimension_numbers = #tpu.dot_dimension_numbers<[1], [0], [0], [1], [0, 0, 1, 1], [], []>} : vector<128x128xbf16>, vector<128x8xbf16>, vector<128x8xf32> -> vector<128x8xf32>
    %c0_39 = arith.constant 0 : index
    %c8 = arith.constant 8 : index
    %67 = vector.load %arg16[%c0_39, %c8] : memref<128x32xf32, #tpu.memory_space<vmem>>, vector<128x8xf32>
    tpu.vector_store %arg16[%c0_39, %c8], %66 {strides = array<i32>} : memref<128x32xf32, #tpu.memory_space<vmem>>, vector<128x8xf32>,
    %68 = vector.extract_strided_slice %11 {offsets = [0, 16], sizes = [128, 8], strides = [1, 1]} : vector<128x32xf32> to vector<128x8xf32>
    %69 = arith.truncf %68 : vector<128x8xf32> to vector<128x8xbf16>
    %70 = vector.extract_strided_slice %16 {offsets = [0, 16], sizes = [128, 8], strides = [1, 1]} : vector<128x32xf32> to vector<128x8xf32>
    %71 = arith.truncf %70 : vector<128x8xf32> to vector<128x8xbf16>
    %72 = vector.extract_strided_slice %21 {offsets = [0, 16], sizes = [128, 8], strides = [1, 1]} : vector<128x32xf32> to vector<128x8xf32>
    %73 = arith.truncf %72 : vector<128x8xf32> to vector<128x8xbf16>
    %cst_40 = arith.constant dense<0.000000e+00> : vector<128x128xf32>
    %74 = tpu.matmul %69, %71, %cst_40 {dimension_numbers = #tpu.dot_dimension_numbers<[1], [1], [0], [0], [0, 0, 1, 0], [], []>} : vector<128x8xbf16>, vector<128x8xbf16>, vector<128x128xf32> -> vector<128x128xf32>
    %c0_41 = arith.constant 0 : index
    %c2 = arith.constant 2 : index
    %c0_42 = arith.constant 0 : index
    %c0_43 = arith.constant 0 : index
    %75 = vector.load %arg4[%c0_41, %c2, %c0_42, %c0_43] : memref<1x4x128x128xf32, #tpu.memory_space<vmem>>, vector<1x1x128x128xf32>
    %76 = vector.shape_cast %75 : vector<1x1x128x128xf32> to vector<128x128xf32>
    %77 = arith.addf %74, %76 : vector<128x128xf32>
    %cst_44 = arith.constant dense<0xFF800000> : vector<128xf32>
    %78 = vector.multi_reduction <maximumf>, %77, %cst_44 [1] : vector<128x128xf32> to vector<128xf32>
    %79 = vector.shape_cast %78 : vector<128xf32> to vector<128x1xf32>
    %80 = vector.broadcast %79 : vector<128x1xf32> to vector<128x128xf32>
    %81 = arith.subf %77, %80 : vector<128x128xf32>
    %82 = math.exp %81 : vector<128x128xf32>
    %cst_45 = arith.constant dense<0.000000e+00> : vector<128xf32>
    %83 = vector.multi_reduction <add>, %82, %cst_45 [1] : vector<128x128xf32> to vector<128xf32>
    %84 = vector.shape_cast %83 : vector<128xf32> to vector<128x1xf32>
    %85 = tpu.reciprocal %84 {approx = true} : vector<128x1xf32> -> vector<128x1xf32>
    %86 = vector.broadcast %85 : vector<128x1xf32> to vector<128x128xf32>
    %87 = arith.mulf %82, %86 : vector<128x128xf32>
    %88 = arith.truncf %87 : vector<128x128xf32> to vector<128x128xbf16>
    %cst_46 = arith.constant dense<0.000000e+00> : vector<128x8xf32>
    %89 = tpu.matmul %88, %73, %cst_46 {dimension_numbers = #tpu.dot_dimension_numbers<[1], [0], [0], [1], [0, 0, 1, 1], [], []>} : vector<128x128xbf16>, vector<128x8xbf16>, vector<128x8xf32> -> vector<128x8xf32>
    %c0_47 = arith.constant 0 : index
    %c16 = arith.constant 16 : index
    %90 = vector.load %arg16[%c0_47, %c16] : memref<128x32xf32, #tpu.memory_space<vmem>>, vector<128x8xf32>
    tpu.vector_store %arg16[%c0_47, %c16], %89 {strides = array<i32>} : memref<128x32xf32, #tpu.memory_space<vmem>>, vector<128x8xf32>,
    %91 = vector.extract_strided_slice %11 {offsets = [0, 24], sizes = [128, 8], strides = [1, 1]} : vector<128x32xf32> to vector<128x8xf32>
    %92 = arith.truncf %91 : vector<128x8xf32> to vector<128x8xbf16>
    %93 = vector.extract_strided_slice %16 {offsets = [0, 24], sizes = [128, 8], strides = [1, 1]} : vector<128x32xf32> to vector<128x8xf32>
    %94 = arith.truncf %93 : vector<128x8xf32> to vector<128x8xbf16>
    %95 = vector.extract_strided_slice %21 {offsets = [0, 24], sizes = [128, 8], strides = [1, 1]} : vector<128x32xf32> to vector<128x8xf32>
    %96 = arith.truncf %95 : vector<128x8xf32> to vector<128x8xbf16>
    %cst_48 = arith.constant dense<0.000000e+00> : vector<128x128xf32>
    %97 = tpu.matmul %92, %94, %cst_48 {dimension_numbers = #tpu.dot_dimension_numbers<[1], [1], [0], [0], [0, 0, 1, 0], [], []>} : vector<128x8xbf16>, vector<128x8xbf16>, vector<128x128xf32> -> vector<128x128xf32>
    %c0_49 = arith.constant 0 : index
    %c3 = arith.constant 3 : index
    %c0_50 = arith.constant 0 : index
    %c0_51 = arith.constant 0 : index
    %98 = vector.load %arg4[%c0_49, %c3, %c0_50, %c0_51] : memref<1x4x128x128xf32, #tpu.memory_space<vmem>>, vector<1x1x128x128xf32>
    %99 = vector.shape_cast %98 : vector<1x1x128x128xf32> to vector<128x128xf32>
    %100 = arith.addf %97, %99 : vector<128x128xf32>
    %cst_52 = arith.constant dense<0xFF800000> : vector<128xf32>
    %101 = vector.multi_reduction <maximumf>, %100, %cst_52 [1] : vector<128x128xf32> to vector<128xf32>
    %102 = vector.shape_cast %101 : vector<128xf32> to vector<128x1xf32>
    %103 = vector.broadcast %102 : vector<128x1xf32> to vector<128x128xf32>
    %104 = arith.subf %100, %103 : vector<128x128xf32>
    %105 = math.exp %104 : vector<128x128xf32>
    %cst_53 = arith.constant dense<0.000000e+00> : vector<128xf32>
    %106 = vector.multi_reduction <add>, %105, %cst_53 [1] : vector<128x128xf32> to vector<128xf32>
    %107 = vector.shape_cast %106 : vector<128xf32> to vector<128x1xf32>
    %108 = tpu.reciprocal %107 {approx = true} : vector<128x1xf32> -> vector<128x1xf32>
    %109 = vector.broadcast %108 : vector<128x1xf32> to vector<128x128xf32>
    %110 = arith.mulf %105, %109 : vector<128x128xf32>
    %111 = arith.truncf %110 : vector<128x128xf32> to vector<128x128xbf16>
    %cst_54 = arith.constant dense<0.000000e+00> : vector<128x8xf32>
    %112 = tpu.matmul %111, %96, %cst_54 {dimension_numbers = #tpu.dot_dimension_numbers<[1], [0], [0], [1], [0, 0, 1, 1], [], []>} : vector<128x128xbf16>, vector<128x8xbf16>, vector<128x8xf32> -> vector<128x8xf32>
    %c0_55 = arith.constant 0 : index
    %c24 = arith.constant 24 : index
    %113 = vector.load %arg16[%c0_55, %c24] : memref<128x32xf32, #tpu.memory_space<vmem>>, vector<128x8xf32>
    tpu.vector_store %arg16[%c0_55, %c24], %112 {strides = array<i32>} : memref<128x32xf32, #tpu.memory_space<vmem>>, vector<128x8xf32>,
    %c0_56 = arith.constant 0 : index
    %c0_57 = arith.constant 0 : index
    %114 = vector.load %arg16[%c0_56, %c0_57] : memref<128x32xf32, #tpu.memory_space<vmem>>, vector<128x32xf32>
    %115 = arith.truncf %114 : vector<128x32xf32> to vector<128x32xbf16>
    %c0_58 = arith.constant 0 : index
    %c0_59 = arith.constant 0 : index
    %116 = vector.load %arg11[%c0_58, %c0_59] : memref<32x32xbf16, #tpu.memory_space<vmem>>, vector<32x32xbf16>
    %cst_60 = arith.constant dense<0.000000e+00> : vector<128x32xf32>
    %117 = tpu.matmul %115, %116, %cst_60 {dimension_numbers = #tpu.dot_dimension_numbers<[1], [0], [0], [1], [0, 0, 1, 1], [], []>} : vector<128x32xbf16>, vector<32x32xbf16>, vector<128x32xf32> -> vector<128x32xf32>
    %c0_61 = arith.constant 0 : index
    %c0_62 = arith.constant 0 : index
    %118 = vector.load %arg12[%c0_61, %c0_62] : memref<1x32xf32, #tpu.memory_space<vmem>>, vector<1x32xf32>
    %119 = vector.broadcast %118 : vector<1x32xf32> to vector<128x32xf32>
    %120 = arith.addf %117, %119 : vector<128x32xf32>
    %121 = arith.addf %120, %1 : vector<128x32xf32>
    %cst_63 = arith.constant dense<0.000000e+00> : vector<128xf32>
    %122 = vector.multi_reduction <add>, %121, %cst_63 [1] : vector<128x32xf32> to vector<128xf32>
    %123 = vector.shape_cast %122 : vector<128xf32> to vector<128x1xf32>
    %cst_64 = arith.constant 3.200000e+01 : f32
    %124 = vector.broadcast %cst_64 : f32 to vector<128x1xf32>
    %125 = arith.divf %123, %124 : vector<128x1xf32>
    %126 = vector.broadcast %125 : vector<128x1xf32> to vector<128x32xf32>
    %127 = arith.subf %121, %126 : vector<128x32xf32>
    %128 = arith.mulf %127, %127 : vector<128x32xf32>
    %cst_65 = arith.constant dense<0.000000e+00> : vector<128xf32>
    %129 = vector.multi_reduction <add>, %128, %cst_65 [1] : vector<128x32xf32> to vector<128xf32>
    %130 = vector.shape_cast %129 : vector<128xf32> to vector<128x1xf32>
    %cst_66 = arith.constant 3.200000e+01 : f32
    %131 = vector.broadcast %cst_66 : f32 to vector<128x1xf32>
    %132 = arith.divf %130, %131 : vector<128x1xf32>
    %133 = vector.broadcast %125 : vector<128x1xf32> to vector<128x32xf32>
    %134 = arith.subf %121, %133 : vector<128x32xf32>
    %cst_67 = arith.constant 9.99999997E-7 : f32
    %135 = vector.broadcast %cst_67 : f32 to vector<128x1xf32>
    %136 = arith.addf %132, %135 : vector<128x1xf32>
    %137 = math.rsqrt %136 : vector<128x1xf32>
    %138 = vector.broadcast %137 : vector<128x1xf32> to vector<128x32xf32>
    %139 = arith.mulf %134, %138 : vector<128x32xf32>
    %c0_68 = arith.constant 0 : index
    %c0_69 = arith.constant 0 : index
    %140 = vector.load %arg13[%c0_68, %c0_69] : memref<1x32xf32, #tpu.memory_space<vmem>>, vector<1x32xf32>
    %141 = vector.broadcast %140 : vector<1x32xf32> to vector<128x32xf32>
    %142 = arith.mulf %139, %141 : vector<128x32xf32>
    %c0_70 = arith.constant 0 : index
    %c0_71 = arith.constant 0 : index
    %143 = vector.load %arg14[%c0_70, %c0_71] : memref<1x32xf32, #tpu.memory_space<vmem>>, vector<1x32xf32>
    %144 = vector.broadcast %143 : vector<1x32xf32> to vector<128x32xf32>
    %145 = arith.addf %142, %144 : vector<128x32xf32>
    %c0_72 = arith.constant 0 : index
    %c0_73 = arith.constant 0 : index
    %c0_74 = arith.constant 0 : index
    %146 = vector.load %arg15[%c0_72, %c0_73, %c0_74] : memref<1x128x32xf32, #tpu.memory_space<vmem>>, vector<1x128x32xf32>
    %147 = vector.shape_cast %146 : vector<1x128x32xf32> to vector<128x32xf32>
    %148 = vector.shape_cast %145 : vector<128x32xf32> to vector<1x128x32xf32>
    tpu.vector_store %arg15[%c0_72, %c0_73, %c0_74], %148 {strides = array<i32>} : memref<1x128x32xf32, #tpu.memory_space<vmem>>, vector<1x128x32xf32>,
    return
  }
  func.func @transform_0(%arg0: i32) -> (i32, i32, i32) {
    %c0_i32 = arith.constant 0 : i32
    %c0_i32_0 = arith.constant 0 : i32
    %c0_i32_1 = arith.constant 0 : i32
    return %arg0, %c0_i32, %c0_i32_0 : i32, i32, i32
  }
  func.func @transform_1(%arg0: i32) -> (i32, i32, i32) {
    %c0_i32 = arith.constant 0 : i32
    %c0_i32_0 = arith.constant 0 : i32
    %c0_i32_1 = arith.constant 0 : i32
    return %arg0, %c0_i32, %c0_i32_0 : i32, i32, i32
  }
  func.func @transform_2(%arg0: i32) -> (i32, i32, i32) {
    %c0_i32 = arith.constant 0 : i32
    %c0_i32_0 = arith.constant 0 : i32
    %c0_i32_1 = arith.constant 0 : i32
    return %arg0, %c0_i32, %c0_i32_0 : i32, i32, i32
  }
  func.func @transform_3(%arg0: i32) -> (i32, i32, i32, i32) {
    %c0_i32 = arith.constant 0 : i32
    %c0_i32_0 = arith.constant 0 : i32
    %c0_i32_1 = arith.constant 0 : i32
    %c0_i32_2 = arith.constant 0 : i32
    return %arg0, %c0_i32, %c0_i32_0, %c0_i32_1 : i32, i32, i32, i32
  }
  func.func @transform_4(%arg0: i32) -> (i32, i32) {
    %c0_i32 = arith.constant 0 : i32
    %c0_i32_0 = arith.constant 0 : i32
    %c0_i32_1 = arith.constant 0 : i32
    return %c0_i32, %c0_i32_0 : i32, i32
  }
  func.func @transform_5(%arg0: i32) -> (i32, i32) {
    %c0_i32 = arith.constant 0 : i32
    %c0_i32_0 = arith.constant 0 : i32
    %c0_i32_1 = arith.constant 0 : i32
    return %c0_i32, %c0_i32_0 : i32, i32
  }
  func.func @transform_6(%arg0: i32) -> (i32, i32) {
    %c0_i32 = arith.constant 0 : i32
    %c0_i32_0 = arith.constant 0 : i32
    %c0_i32_1 = arith.constant 0 : i32
    return %c0_i32, %c0_i32_0 : i32, i32
  }
  func.func @transform_7(%arg0: i32) -> (i32, i32) {
    %c0_i32 = arith.constant 0 : i32
    %c0_i32_0 = arith.constant 0 : i32
    %c0_i32_1 = arith.constant 0 : i32
    return %c0_i32, %c0_i32_0 : i32, i32
  }
  func.func @transform_8(%arg0: i32) -> (i32, i32) {
    %c0_i32 = arith.constant 0 : i32
    %c0_i32_0 = arith.constant 0 : i32
    %c0_i32_1 = arith.constant 0 : i32
    return %c0_i32, %c0_i32_0 : i32, i32
  }
  func.func @transform_9(%arg0: i32) -> (i32, i32) {
    %c0_i32 = arith.constant 0 : i32
    %c0_i32_0 = arith.constant 0 : i32
    %c0_i32_1 = arith.constant 0 : i32
    return %c0_i32, %c0_i32_0 : i32, i32
  }
  func.func @transform_10(%arg0: i32) -> (i32, i32) {
    %c0_i32 = arith.constant 0 : i32
    %c0_i32_0 = arith.constant 0 : i32
    %c0_i32_1 = arith.constant 0 : i32
    return %c0_i32, %c0_i32_0 : i32, i32
  }
  func.func @transform_11(%arg0: i32) -> (i32, i32) {
    %c0_i32 = arith.constant 0 : i32
    %c0_i32_0 = arith.constant 0 : i32
    %c0_i32_1 = arith.constant 0 : i32
    return %c0_i32, %c0_i32_0 : i32, i32
  }
  func.func @transform_12(%arg0: i32) -> (i32, i32) {
    %c0_i32 = arith.constant 0 : i32
    %c0_i32_0 = arith.constant 0 : i32
    %c0_i32_1 = arith.constant 0 : i32
    return %c0_i32, %c0_i32_0 : i32, i32
  }
  func.func @transform_13(%arg0: i32) -> (i32, i32) {
    %c0_i32 = arith.constant 0 : i32
    %c0_i32_0 = arith.constant 0 : i32
    %c0_i32_1 = arith.constant 0 : i32
    return %c0_i32, %c0_i32_0 : i32, i32
  }
  func.func @transform_14(%arg0: i32) -> (i32, i32, i32) {
    %c0_i32 = arith.constant 0 : i32
    %c0_i32_0 = arith.constant 0 : i32
    %c0_i32_1 = arith.constant 0 : i32
    return %arg0, %c0_i32, %c0_i32_0 : i32, i32, i32
  }
}

</mosaic_0001>

<llo_original>
// kernel: tpu_custom_call.1
$region0: #{tpu_custom_call.1}
  #allocation0 [shape = 'u32[]', space=smem, size = 0x4, offset = 0x4, fixed_abs, tag = 'smem constant byte address 0x4 - core index']
  #allocation1 [shape = 'u32[144,128]{1,0:T(1,128)}', space=vmem, size = 0x12000, scoped, tag = 'internal scratch']
  #allocation2 [shape = 'f32[128,32]{1,0:T(8,128)}', space=vmem, size = 0x10000, scoped, tag = 'scratch operand']
  %s0 = inlined_call_operand.vmem [shape: f32[2,128,32], index: 0, kind: input, shape index: {}]
  %s1 = inlined_call_operand.vmem [shape: bf16[2,128,32], index: 1, kind: input, shape index: {}]
  %s2 = inlined_call_operand.vmem [shape: bf16[2,128,32], index: 2, kind: input, shape index: {}]
  %s3 = inlined_call_operand.hbm [shape: f32[2,4,128,128], index: 3, kind: input, shape index: {}]
  %s4 = inlined_call_operand.vmem [shape: bf16[32,32], index: 4, kind: input, shape index: {}]
  %s5 = inlined_call_operand.vmem [shape: f32[1,32], index: 5, kind: input, shape index: {}]
  %s6 = inlined_call_operand.vmem [shape: bf16[32,32], index: 6, kind: input, shape index: {}]
  %s7 = inlined_call_operand.vmem [shape: f32[1,32], index: 7, kind: input, shape index: {}]
  %s8 = inlined_call_operand.vmem [shape: bf16[32,32], index: 8, kind: input, shape index: {}]
  %s9 = inlined_call_operand.vmem [shape: f32[1,32], index: 9, kind: input, shape index: {}]
  %s10 = inlined_call_operand.vmem [shape: bf16[32,32], index: 10, kind: input, shape index: {}]
  %s11 = inlined_call_operand.vmem [shape: f32[1,32], index: 11, kind: input, shape index: {}]
  %s12 = inlined_call_operand.vmem [shape: f32[1,32], index: 12, kind: input, shape index: {}]
  %s13 = inlined_call_operand.vmem [shape: f32[1,32], index: 13, kind: input, shape index: {}]
  %s14 = inlined_call_operand.vmem [shape: f32[2,128,32], index: 14, kind: output, shape index: {}]
  %s15 = sld [smem:[#allocation0]]
  $region93: #{tpu_custom_call.1} parent=0
    _
  %s17 = ssub.s32 1, %s15
  %s18 = scalar_select 0, %s17, %s15
  $region1: #{tpu_custom_call.1} parent=0
    #allocation3 [shape = 'u8[524288]{0}', space=vmem, size = 0x80000, scoped, tag = 'input window, operand 3']
    #allocation4 [shape = 's32[2]{0}', space=sflag, size = 0x8, scoped, tag = 'scoped memory for tpu_custom_call.1']
    %19 = vsyncpa [#allocation4], 0
    %s20 = scalar_lea.sflag [#allocation4], 1
    %21 = vsyncpa %s20, 0
    loop: start=0, step=1, limit=4
    $region2: #{tpu_custom_call.1} parent=1 // loop_pre_header
      _
    $region3: #{tpu_custom_call.1} parent=1 // loop_header
      %s23 = sphi 0, %s27
      %p24 = scmp.ge.s32.totalorder %s23, 4
      %s33 = sphi 0, %s35
      %s36 = sphi 0, %s33
      %s37 = sphi 0, %s36
      %s53 = sphi 0, %s37
      %s59 = sphi 0, %s61
      %s62 = sphi 0, %s59
      %s63 = sphi 0, %s62
      %s79 = sphi 0, %s63
      %s85 = sphi 0, %s87
      %s88 = sphi 0, %s85
      %s89 = sphi 0, %s88
      %s105 = sphi 0, %s89
      %s111 = sphi 0, %s113
      %s114 = sphi 0, %s111
      %s115 = sphi 0, %s114
      %s131 = sphi 0, %s115
      %s135 = sphi 0, %s135
      %s137 = sphi 0, %s135
      %s138 = sphi 0, %s137
      %s152 = sphi 0, %s138
      %s156 = sphi 0, %s156
      %s158 = sphi 0, %s156
      %s159 = sphi 0, %s158
      %s173 = sphi 0, %s159
      %s177 = sphi 0, %s177
      %s179 = sphi 0, %s177
      %s180 = sphi 0, %s179
      %s194 = sphi 0, %s180
      %s198 = sphi 0, %s198
      %s200 = sphi 0, %s198
      %s201 = sphi 0, %s200
      %s215 = sphi 0, %s201
      %s219 = sphi 0, %s219
      %s221 = sphi 0, %s219
      %s222 = sphi 0, %s221
      %s236 = sphi 0, %s222
      %s240 = sphi 0, %s240
      %s242 = sphi 0, %s240
      %s243 = sphi 0, %s242
      %s257 = sphi 0, %s243
      %s261 = sphi 0, %s261
      %s263 = sphi 0, %s261
      %s264 = sphi 0, %s263
      %s278 = sphi 0, %s264
      %s282 = sphi 0, %s282
      %s284 = sphi 0, %s282
      %s285 = sphi 0, %s284
      %s299 = sphi 0, %s285
      %s303 = sphi 0, %s303
      %s305 = sphi 0, %s303
      %s306 = sphi 0, %s305
      %s320 = sphi 0, %s306
      %s324 = sphi 0, %s324
      %s326 = sphi 0, %s324
      %s327 = sphi 0, %s326
      %s341 = sphi 0, %s327
      %s347 = sphi 0, %s349
      %s350 = sphi 0, %s347
      %s351 = sphi 0, %s350
      %s367 = sphi 0, %s351
    $region4: #{tpu_custom_call.1} parent=1 // loop_header_branch
      %26 = sbr.rel (%p24) target = $region8
    $region5: #{tpu_custom_call.1} parent=1 // loop_body
      %s28 = ssub.s32 %s23, 1
      %s29 = ssub.s32 %s23, 2
      %s30 = sadd.s32 %s23, 1
      %s31 = ssub.s32 %s23, %s30
      %p32 = scmp.eq.s32.totalorder %s31, 0
      %s34 = sadd.s32 %s33, 1
      %s35 = scalar_select %p32, %s33, %s34
      %p38 = pneg %p32
      %p39 = scmp.eq.s32.totalorder %s23, 1
      %p40 = por %p38, %p39
      %p41 = scmp.ne.s32.totalorder %s33, %s36
      %p42 = scmp.eq.s32.totalorder %s23, 0
      %p43 = por %p41, %p42
      %p44 = scmp.ne.s32.totalorder %s33, %s36
      %p45 = scmp.eq.s32.totalorder %s28, 1
      %p46 = por %p44, %p45
      %p47 = scmp.ne.s32.totalorder %s36, %s37
      %p48 = scmp.eq.s32.totalorder %s28, 0
      %p49 = por %p47, %p48
      %p50 = scmp.ne.s32.totalorder %s36, %s37
      %p51 = scmp.eq.s32.totalorder %s29, 1
      %p52 = por %p50, %p51
      %p54 = scmp.ne.s32.totalorder %s37, %s53
      %p55 = scmp.eq.s32.totalorder %s29, 0
      %p56 = por %p54, %p55
      %s57 = ssub.s32 %s23, %s30
      %p58 = scmp.eq.s32.totalorder %s57, 0
      %s60 = sadd.s32 %s59, 1
      %s61 = scalar_select %p58, %s59, %s60
      %p64 = pneg %p58
      %p65 = scmp.eq.s32.totalorder %s23, 1
      %p66 = por %p64, %p65
      %p67 = scmp.ne.s32.totalorder %s59, %s62
      %p68 = scmp.eq.s32.totalorder %s23, 0
      %p69 = por %p67, %p68
      %p70 = scmp.ne.s32.totalorder %s59, %s62
      %p71 = scmp.eq.s32.totalorder %s28, 1
      %p72 = por %p70, %p71
      %p73 = scmp.ne.s32.totalorder %s62, %s63
      %p74 = scmp.eq.s32.totalorder %s28, 0
      %p75 = por %p73, %p74
      %p76 = scmp.ne.s32.totalorder %s62, %s63
      %p77 = scmp.eq.s32.totalorder %s29, 1
      %p78 = por %p76, %p77
      %p80 = scmp.ne.s32.totalorder %s63, %s79
      %p81 = scmp.eq.s32.totalorder %s29, 0
      %p82 = por %p80, %p81
      %s83 = ssub.s32 %s23, %s30
      %p84 = scmp.eq.s32.totalorder %s83, 0
      %s86 = sadd.s32 %s85, 1
      %s87 = scalar_select %p84, %s85, %s86
      %p90 = pneg %p84
      %p91 = scmp.eq.s32.totalorder %s23, 1
      %p92 = por %p90, %p91
      %p93 = scmp.ne.s32.totalorder %s85, %s88
      %p94 = scmp.eq.s32.totalorder %s23, 0
      %p95 = por %p93, %p94
      %p96 = scmp.ne.s32.totalorder %s85, %s88
      %p97 = scmp.eq.s32.totalorder %s28, 1
      %p98 = por %p96, %p97
      %p99 = scmp.ne.s32.totalorder %s88, %s89
      %p100 = scmp.eq.s32.totalorder %s28, 0
      %p101 = por %p99, %p100
      %p102 = scmp.ne.s32.totalorder %s88, %s89
      %p103 = scmp.eq.s32.totalorder %s29, 1
      %p104 = por %p102, %p103
      %p106 = scmp.ne.s32.totalorder %s89, %s105
      %p107 = scmp.eq.s32.totalorder %s29, 0
      %p108 = por %p106, %p107
      %s109 = ssub.s32 %s23, %s30
      %p110 = scmp.eq.s32.totalorder %s109, 0
      %s112 = sadd.s32 %s111, 1
      %s113 = scalar_select %p110, %s111, %s112
      %p116 = pneg %p110
      %p117 = scmp.eq.s32.totalorder %s23, 1
      %p118 = por %p116, %p117
      %p119 = scmp.ne.s32.totalorder %s111, %s114
      %p120 = scmp.eq.s32.totalorder %s23, 0
      %p121 = por %p119, %p120
      %p122 = scmp.ne.s32.totalorder %s111, %s114
      %p123 = scmp.eq.s32.totalorder %s28, 1
      %p124 = por %p122, %p123
      %p125 = scmp.ne.s32.totalorder %s114, %s115
      %p126 = scmp.eq.s32.totalorder %s28, 0
      %p127 = por %p125, %p126
      %p128 = scmp.ne.s32.totalorder %s114, %s115
      %p129 = scmp.eq.s32.totalorder %s29, 1
      %p130 = por %p128, %p129
      %p132 = scmp.ne.s32.totalorder %s115, %s131
      %p133 = scmp.eq.s32.totalorder %s29, 0
      %p134 = por %p132, %p133
      %s136 = sadd.s32 %s135, 1
      %p139 = scmp.eq.s32.totalorder %s23, 1
      %p140 = scmp.ne.s32.totalorder %s135, %s137
      %p141 = scmp.eq.s32.totalorder %s23, 0
      %p142 = por %p140, %p141
      %p143 = scmp.ne.s32.totalorder %s135, %s137
      %p144 = scmp.eq.s32.totalorder %s28, 1
      %p145 = por %p143, %p144
      %p146 = scmp.ne.s32.totalorder %s137, %s138
      %p147 = scmp.eq.s32.totalorder %s28, 0
      %p148 = por %p146, %p147
      %p149 = scmp.ne.s32.totalorder %s137, %s138
      %p150 = scmp.eq.s32.totalorder %s29, 1
      %p151 = por %p149, %p150
      %p153 = scmp.ne.s32.totalorder %s138, %s152
      %p154 = scmp.eq.s32.totalorder %s29, 0
      %p155 = por %p153, %p154
      %s157 = sadd.s32 %s156, 1
      %p160 = scmp.eq.s32.totalorder %s23, 1
      %p161 = scmp.ne.s32.totalorder %s156, %s158
      %p162 = scmp.eq.s32.totalorder %s23, 0
      %p163 = por %p161, %p162
      %p164 = scmp.ne.s32.totalorder %s156, %s158
      %p165 = scmp.eq.s32.totalorder %s28, 1
      %p166 = por %p164, %p165
      %p167 = scmp.ne.s32.totalorder %s158, %s159
      %p168 = scmp.eq.s32.totalorder %s28, 0
      %p169 = por %p167, %p168
      %p170 = scmp.ne.s32.totalorder %s158, %s159
      %p171 = scmp.eq.s32.totalorder %s29, 1
      %p172 = por %p170, %p171
      %p174 = scmp.ne.s32.totalorder %s159, %s173
      %p175 = scmp.eq.s32.totalorder %s29, 0
      %p176 = por %p174, %p175
      %s178 = sadd.s32 %s177, 1
      %p181 = scmp.eq.s32.totalorder %s23, 1
      %p182 = scmp.ne.s32.totalorder %s177, %s179
      %p183 = scmp.eq.s32.totalorder %s23, 0
      %p184 = por %p182, %p183
      %p185 = scmp.ne.s32.totalorder %s177, %s179
      %p186 = scmp.eq.s32.totalorder %s28, 1
      %p187 = por %p185, %p186
      %p188 = scmp.ne.s32.totalorder %s179, %s180
      %p189 = scmp.eq.s32.totalorder %s28, 0
      %p190 = por %p188, %p189
      %p191 = scmp.ne.s32.totalorder %s179, %s180
      %p192 = scmp.eq.s32.totalorder %s29, 1
      %p193 = por %p191, %p192
      %p195 = scmp.ne.s32.totalorder %s180, %s194
      %p196 = scmp.eq.s32.totalorder %s29, 0
      %p197 = por %p195, %p196
      %s199 = sadd.s32 %s198, 1
      %p202 = scmp.eq.s32.totalorder %s23, 1
      %p203 = scmp.ne.s32.totalorder %s198, %s200
      %p204 = scmp.eq.s32.totalorder %s23, 0
      %p205 = por %p203, %p204
      %p206 = scmp.ne.s32.totalorder %s198, %s200
      %p207 = scmp.eq.s32.totalorder %s28, 1
      %p208 = por %p206, %p207
      %p209 = scmp.ne.s32.totalorder %s200, %s201
      %p210 = scmp.eq.s32.totalorder %s28, 0
      %p211 = por %p209, %p210
      %p212 = scmp.ne.s32.totalorder %s200, %s201
      %p213 = scmp.eq.s32.totalorder %s29, 1
      %p214 = por %p212, %p213
      %p216 = scmp.ne.s32.totalorder %s201, %s215
      %p217 = scmp.eq.s32.totalorder %s29, 0
      %p218 = por %p216, %p217
      %s220 = sadd.s32 %s219, 1
      %p223 = scmp.eq.s32.totalorder %s23, 1
      %p224 = scmp.ne.s32.totalorder %s219, %s221
      %p225 = scmp.eq.s32.totalorder %s23, 0
      %p226 = por %p224, %p225
      %p227 = scmp.ne.s32.totalorder %s219, %s221
      %p228 = scmp.eq.s32.totalorder %s28, 1
      %p229 = por %p227, %p228
      %p230 = scmp.ne.s32.totalorder %s221, %s222
      %p231 = scmp.eq.s32.totalorder %s28, 0
      %p232 = por %p230, %p231
      %p233 = scmp.ne.s32.totalorder %s221, %s222
      %p234 = scmp.eq.s32.totalorder %s29, 1
      %p235 = por %p233, %p234
      %p237 = scmp.ne.s32.totalorder %s222, %s236
      %p238 = scmp.eq.s32.totalorder %s29, 0
      %p239 = por %p237, %p238
      %s241 = sadd.s32 %s240, 1
      %p244 = scmp.eq.s32.totalorder %s23, 1
      %p245 = scmp.ne.s32.totalorder %s240, %s242
      %p246 = scmp.eq.s32.totalorder %s23, 0
      %p247 = por %p245, %p246
      %p248 = scmp.ne.s32.totalorder %s240, %s242
      %p249 = scmp.eq.s32.totalorder %s28, 1
      %p250 = por %p248, %p249
      %p251 = scmp.ne.s32.totalorder %s242, %s243
      %p252 = scmp.eq.s32.totalorder %s28, 0
      %p253 = por %p251, %p252
      %p254 = scmp.ne.s32.totalorder %s242, %s243
      %p255 = scmp.eq.s32.totalorder %s29, 1
      %p256 = por %p254, %p255
      %p258 = scmp.ne.s32.totalorder %s243, %s257
      %p259 = scmp.eq.s32.totalorder %s29, 0
      %p260 = por %p258, %p259
      %s262 = sadd.s32 %s261, 1
      %p265 = scmp.eq.s32.totalorder %s23, 1
      %p266 = scmp.ne.s32.totalorder %s261, %s263
      %p267 = scmp.eq.s32.totalorder %s23, 0
      %p268 = por %p266, %p267
      %p269 = scmp.ne.s32.totalorder %s261, %s263
      %p270 = scmp.eq.s32.totalorder %s28, 1
      %p271 = por %p269, %p270
      %p272 = scmp.ne.s32.totalorder %s263, %s264
      %p273 = scmp.eq.s32.totalorder %s28, 0
      %p274 = por %p272, %p273
      %p275 = scmp.ne.s32.totalorder %s263, %s264
      %p276 = scmp.eq.s32.totalorder %s29, 1
      %p277 = por %p275, %p276
      %p279 = scmp.ne.s32.totalorder %s264, %s278
      %p280 = scmp.eq.s32.totalorder %s29, 0
      %p281 = por %p279, %p280
      %s283 = sadd.s32 %s282, 1
      %p286 = scmp.eq.s32.totalorder %s23, 1
      %p287 = scmp.ne.s32.totalorder %s282, %s284
      %p288 = scmp.eq.s32.totalorder %s23, 0
      %p289 = por %p287, %p288
      %p290 = scmp.ne.s32.totalorder %s282, %s284
      %p291 = scmp.eq.s32.totalorder %s28, 1
      %p292 = por %p290, %p291
      %p293 = scmp.ne.s32.totalorder %s284, %s285
      %p294 = scmp.eq.s32.totalorder %s28, 0
      %p295 = por %p293, %p294
      %p296 = scmp.ne.s32.totalorder %s284, %s285
      %p297 = scmp.eq.s32.totalorder %s29, 1
      %p298 = por %p296, %p297
      %p300 = scmp.ne.s32.totalorder %s285, %s299
      %p301 = scmp.eq.s32.totalorder %s29, 0
      %p302 = por %p300, %p301
      %s304 = sadd.s32 %s303, 1
      %p307 = scmp.eq.s32.totalorder %s23, 1
      %p308 = scmp.ne.s32.totalorder %s303, %s305
      %p309 = scmp.eq.s32.totalorder %s23, 0
      %p310 = por %p308, %p309
      %p311 = scmp.ne.s32.totalorder %s303, %s305
      %p312 = scmp.eq.s32.totalorder %s28, 1
      %p313 = por %p311, %p312
      %p314 = scmp.ne.s32.totalorder %s305, %s306
      %p315 = scmp.eq.s32.totalorder %s28, 0
      %p316 = por %p314, %p315
      %p317 = scmp.ne.s32.totalorder %s305, %s306
      %p318 = scmp.eq.s32.totalorder %s29, 1
      %p319 = por %p317, %p318
      %p321 = scmp.ne.s32.totalorder %s306, %s320
      %p322 = scmp.eq.s32.totalorder %s29, 0
      %p323 = por %p321, %p322
      %s325 = sadd.s32 %s324, 1
      %p328 = scmp.eq.s32.totalorder %s23, 1
      %p329 = scmp.ne.s32.totalorder %s324, %s326
      %p330 = scmp.eq.s32.totalorder %s23, 0
      %p331 = por %p329, %p330
      %p332 = scmp.ne.s32.totalorder %s324, %s326
      %p333 = scmp.eq.s32.totalorder %s28, 1
      %p334 = por %p332, %p333
      %p335 = scmp.ne.s32.totalorder %s326, %s327
      %p336 = scmp.eq.s32.totalorder %s28, 0
      %p337 = por %p335, %p336
      %p338 = scmp.ne.s32.totalorder %s326, %s327
      %p339 = scmp.eq.s32.totalorder %s29, 1
      %p340 = por %p338, %p339
      %p342 = scmp.ne.s32.totalorder %s327, %s341
      %p343 = scmp.eq.s32.totalorder %s29, 0
      %p344 = por %p342, %p343
      %s345 = ssub.s32 %s23, %s30
      %p346 = scmp.eq.s32.totalorder %s345, 0
      %s348 = sadd.s32 %s347, 1
      %s349 = scalar_select %p346, %s347, %s348
      %p352 = pneg %p346
      %p353 = scmp.eq.s32.totalorder %s23, 1
      %p354 = por %p352, %p353
      %p355 = scmp.ne.s32.totalorder %s347, %s350
      %p356 = scmp.eq.s32.totalorder %s23, 0
      %p357 = por %p355, %p356
      %p358 = scmp.ne.s32.totalorder %s347, %s350
      %p359 = scmp.eq.s32.totalorder %s28, 1
      %p360 = por %p358, %p359
      %p361 = scmp.ne.s32.totalorder %s350, %s351
      %p362 = scmp.eq.s32.totalorder %s28, 0
      %p363 = por %p361, %p362
      %p364 = scmp.ne.s32.totalorder %s350, %s351
      %p365 = scmp.eq.s32.totalorder %s29, 1
      %p366 = por %p364, %p365
      %p368 = scmp.ne.s32.totalorder %s351, %s367
      %p369 = scmp.eq.s32.totalorder %s29, 0
      %p370 = por %p368, %p369
      %p371 = scmp.le.s32.totalorder 1, %s23
      %p372 = scmp.lt.s32.totalorder %s23, 3
      %p373 = pnand %p371, %p372
      %p374 = pneg %p373
      // Predicated region
      $region9: #{tpu_custom_call.1} parent=5 // pred_check
        _
      $region10: #{tpu_custom_call.1} parent=5 // pred_check_branch
        %376 = sbr.rel (%p373) target = $region12
      $region11: #{tpu_custom_call.1} parent=5 // pred_region
        %s377 = ssub.s32 %s23, 1
        // Predicated region
        $region13: #{tpu_custom_call.1} parent=11 // pred_check
          %p378 = pneg %p148
        $region14: #{tpu_custom_call.1} parent=11 // pred_check_branch
          %380 = sbr.rel (%p378) target = $region16
        $region15: #{tpu_custom_call.1} parent=11 // pred_region
          _
        $region16: #{tpu_custom_call.1} parent=11 // pred_fallthru
          _
        // Predicated region
        $region17: #{tpu_custom_call.1} parent=11 // pred_check
          %p381 = pneg %p169
        $region18: #{tpu_custom_call.1} parent=11 // pred_check_branch
          %383 = sbr.rel (%p381) target = $region20
        $region19: #{tpu_custom_call.1} parent=11 // pred_region
          _
        $region20: #{tpu_custom_call.1} parent=11 // pred_fallthru
          _
        // Predicated region
        $region21: #{tpu_custom_call.1} parent=11 // pred_check
          %p384 = pneg %p190
        $region22: #{tpu_custom_call.1} parent=11 // pred_check_branch
          %386 = sbr.rel (%p384) target = $region24
        $region23: #{tpu_custom_call.1} parent=11 // pred_region
          _
        $region24: #{tpu_custom_call.1} parent=11 // pred_fallthru
          _
        // Predicated region
        $region25: #{tpu_custom_call.1} parent=11 // pred_check
          %p387 = pneg %p211
        $region26: #{tpu_custom_call.1} parent=11 // pred_check_branch
          %389 = sbr.rel (%p387) target = $region28
        $region27: #{tpu_custom_call.1} parent=11 // pred_region
          _
        $region28: #{tpu_custom_call.1} parent=11 // pred_fallthru
          _
        // Predicated region
        $region29: #{tpu_custom_call.1} parent=11 // pred_check
          %p390 = pneg %p232
        $region30: #{tpu_custom_call.1} parent=11 // pred_check_branch
          %392 = sbr.rel (%p390) target = $region32
        $region31: #{tpu_custom_call.1} parent=11 // pred_region
          _
        $region32: #{tpu_custom_call.1} parent=11 // pred_fallthru
          _
        // Predicated region
        $region33: #{tpu_custom_call.1} parent=11 // pred_check
          %p393 = pneg %p253
        $region34: #{tpu_custom_call.1} parent=11 // pred_check_branch
          %395 = sbr.rel (%p393) target = $region36
        $region35: #{tpu_custom_call.1} parent=11 // pred_region
          _
        $region36: #{tpu_custom_call.1} parent=11 // pred_fallthru
          _
        // Predicated region
        $region37: #{tpu_custom_call.1} parent=11 // pred_check
          %p396 = pneg %p274
        $region38: #{tpu_custom_call.1} parent=11 // pred_check_branch
          %398 = sbr.rel (%p396) target = $region40
        $region39: #{tpu_custom_call.1} parent=11 // pred_region
          _
        $region40: #{tpu_custom_call.1} parent=11 // pred_fallthru
          _
        // Predicated region
        $region41: #{tpu_custom_call.1} parent=11 // pred_check
          %p399 = pneg %p295
        $region42: #{tpu_custom_call.1} parent=11 // pred_check_branch
          %401 = sbr.rel (%p399) target = $region44
        $region43: #{tpu_custom_call.1} parent=11 // pred_region
          _
        $region44: #{tpu_custom_call.1} parent=11 // pred_fallthru
          _
        // Predicated region
        $region45: #{tpu_custom_call.1} parent=11 // pred_check
          %p402 = pneg %p316
        $region46: #{tpu_custom_call.1} parent=11 // pred_check_branch
          %404 = sbr.rel (%p402) target = $region48
        $region47: #{tpu_custom_call.1} parent=11 // pred_region
          _
        $region48: #{tpu_custom_call.1} parent=11 // pred_fallthru
          _
        // Predicated region
        $region49: #{tpu_custom_call.1} parent=11 // pred_check
          %p405 = pneg %p337
        $region50: #{tpu_custom_call.1} parent=11 // pred_check_branch
          %407 = sbr.rel (%p405) target = $region52
        $region51: #{tpu_custom_call.1} parent=11 // pred_region
          _
        $region52: #{tpu_custom_call.1} parent=11 // pred_fallthru
          _
      $region12: #{tpu_custom_call.1} parent=5 // pred_fallthru
        _
      %p408 = scmp.lt.s32.totalorder %s23, 2
      // Predicated region
      $region53: #{tpu_custom_call.1} parent=5 // pred_check
        %p409 = pneg %p408
      $region54: #{tpu_custom_call.1} parent=5 // pred_check_branch
        %411 = sbr.rel (%p409) target = $region56
      $region55: #{tpu_custom_call.1} parent=5 // pred_region
        // Predicated region
        $region57: #{tpu_custom_call.1} parent=55 // pred_check
          %p412 = pneg %p43
        $region58: #{tpu_custom_call.1} parent=55 // pred_check_branch
          %414 = sbr.rel (%p412) target = $region60
        $region59: #{tpu_custom_call.1} parent=55 // pred_region
          %p415 = scmp.lt.s32.totalorder %s23, 1
          %s416 = scalar_select %p415, %s23, 1
          %s417 = smul.addr %s416, 16
          %s418 = smul.addr %s417, 8
          %s419 = scalar_lea.vmem %s0, %s418
        $region60: #{tpu_custom_call.1} parent=55 // pred_fallthru
          _
        // Predicated region
        $region61: #{tpu_custom_call.1} parent=55 // pred_check
          %p420 = pneg %p69
        $region62: #{tpu_custom_call.1} parent=55 // pred_check_branch
          %422 = sbr.rel (%p420) target = $region64
        $region63: #{tpu_custom_call.1} parent=55 // pred_region
          %p423 = scmp.lt.s32.totalorder %s23, 1
          %s424 = scalar_select %p423, %s23, 1
          %s425 = smul.addr %s424, 16
          %s426 = smul.addr %s425, 4
          %s427 = scalar_lea.vmem %s1, %s426
        $region64: #{tpu_custom_call.1} parent=55 // pred_fallthru
          _
        // Predicated region
        $region65: #{tpu_custom_call.1} parent=55 // pred_check
          %p428 = pneg %p95
        $region66: #{tpu_custom_call.1} parent=55 // pred_check_branch
          %430 = sbr.rel (%p428) target = $region68
        $region67: #{tpu_custom_call.1} parent=55 // pred_region
          %p431 = scmp.lt.s32.totalorder %s23, 1
          %s432 = scalar_select %p431, %s23, 1
          %s433 = smul.addr %s432, 16
          %s434 = smul.addr %s433, 4
          %s435 = scalar_lea.vmem %s2, %s434
        $region68: #{tpu_custom_call.1} parent=55 // pred_fallthru
          _
        // Predicated region
        $region69: #{tpu_custom_call.1} parent=55 // pred_check
          %p436 = pneg %p121
        $region70: #{tpu_custom_call.1} parent=55 // pred_check_branch
          %438 = sbr.rel (%p436) target = $region72
        $region71: #{tpu_custom_call.1} parent=55 // pred_region
          %s439 = sand.u32 %s111, 1
          %s440 = scalar_lea.sflag [#allocation4], %s439
          %s441 = sand.u32 %s111, 1
          %s442 = smul.addr %s441, 512
          %s443 = scalar_lea.vmem [#allocation3], %s442
          %s445 = ssub.s32 8192, 8192
          %446 = vsyncadd %s440, %s445
          %s447 = smul.addr %s23, 64
          %s448 = smul.addr %s447, 128
          %s449 = scalar_lea.hbm %s3, %s448
          %s450 = sshll.u32 %s443, 4
          %s451 = int_to_ptr.vmem [resolvable:$true] %s450
          %456 = dma.hbm_to_vmem [thread:$0]  %s449, 8192, %s451, %s440, 128, 128, 8
        $region72: #{tpu_custom_call.1} parent=55 // pred_fallthru
          _
      $region56: #{tpu_custom_call.1} parent=5 // pred_fallthru
        _
      %p457 = scmp.le.s32.totalorder 1, %s23
      %p458 = scmp.lt.s32.totalorder %s23, 3
      %p459 = pnand %p457, %p458
      %p460 = pneg %p459
      // Predicated region
      $region73: #{tpu_custom_call.1} parent=5 // pred_check
        _
      $region74: #{tpu_custom_call.1} parent=5 // pred_check_branch
        %462 = sbr.rel (%p459) target = $region76
      $region75: #{tpu_custom_call.1} parent=5 // pred_region
        %s463 = ssub.s32 %s23, 1
        %s464 = sand.u32 %s114, 1
        %s465 = scalar_lea.sflag [#allocation4], %s464
        %s466 = sand.u32 %s114, 1
        %s467 = smul.addr %s466, 512
        %s468 = scalar_lea.vmem [#allocation3], %s467
        // Predicated region
        $region77: #{tpu_custom_call.1} parent=75 // pred_check
          %p469 = pneg %p127
        $region78: #{tpu_custom_call.1} parent=75 // pred_check_branch
          %471 = sbr.rel (%p469) target = $region80
        $region79: #{tpu_custom_call.1} parent=75 // pred_region
          %472 = dma.done %s465, 8192
        $region80: #{tpu_custom_call.1} parent=75 // pred_fallthru
          _
        %p473 = scmp.lt.s32.totalorder %s28, 1
        %s474 = scalar_select %p473, %s28, 1
        %s475 = smul.addr %s474, 16
        %s476 = smul.addr %s475, 8
        %s477 = scalar_lea.vmem %s0, %s476
        %p478 = pneg %p49
        %p479 = pneg %p46
        %p480 = scmp.lt.s32.totalorder %s28, 1
        %s481 = scalar_select %p480, %s28, 1
        %s482 = smul.addr %s481, 16
        %s483 = smul.addr %s482, 4
        %s484 = scalar_lea.vmem %s1, %s483
        %p485 = pneg %p75
        %p486 = pneg %p72
        %p487 = scmp.lt.s32.totalorder %s28, 1
        %s488 = scalar_select %p487, %s28, 1
        %s489 = smul.addr %s488, 16
        %s490 = smul.addr %s489, 4
        %s491 = scalar_lea.vmem %s2, %s490
        %p492 = pneg %p101
        %p493 = pneg %p98
        %s494 = sand.u32 %s114, 1
        %s495 = scalar_lea.sflag [#allocation4], %s494
        %s496 = sand.u32 %s114, 1
        %s497 = smul.addr %s496, 512
        %s498 = scalar_lea.vmem [#allocation3], %s497
        %p499 = pneg %p127
        %p500 = pneg %p124
        %p501 = pneg %p148
        %p502 = pneg %p145
        %p503 = pneg %p169
        %p504 = pneg %p166
        %p505 = pneg %p190
        %p506 = pneg %p187
        %p507 = pneg %p211
        %p508 = pneg %p208
        %p509 = pneg %p232
        %p510 = pneg %p229
        %p511 = pneg %p253
        %p512 = pneg %p250
        %p513 = pneg %p274
        %p514 = pneg %p271
        %p515 = pneg %p295
        %p516 = pneg %p292
        %p517 = pneg %p316
        %p518 = pneg %p313
        %p519 = pneg %p337
        %p520 = pneg %p334
        %p521 = pneg %p363
        %p522 = pneg %p360
        %p523 = scmp.lt.s32.totalorder %s28, 1
        %s524 = scalar_select %p523, %s28, 1
        %s525 = smul.addr %s524, 16
        %s526 = smul.addr %s525, 8
        %s527 = scalar_lea.vmem %s14, %s526
        %p528 = scmp.lt.s32.totalorder %s28, 1
        %s529 = scalar_select %p528, %s28, 1
        %s530 = smul.addr %s529, 16
        %s531 = smul.addr %s530, 8
        %s532 = scalar_lea.vmem %s0, %s531
        %p533 = scmp.lt.s32.totalorder %s28, 1
        %s534 = scalar_select %p533, %s28, 1
        %s535 = smul.addr %s534, 16
        %s536 = smul.addr %s535, 4
        %s537 = scalar_lea.vmem %s1, %s536
        %p538 = scmp.lt.s32.totalorder %s28, 1
        %s539 = scalar_select %p538, %s28, 1
        %s540 = smul.addr %s539, 16
        %s541 = smul.addr %s540, 4
        %s542 = scalar_lea.vmem %s2, %s541
        %p543 = scmp.lt.s32.totalorder %s28, 1
        %s544 = scalar_select %p543, %s28, 1
        %s545 = smul.addr %s544, 16
        %s546 = smul.addr %s545, 8
        %s547 = scalar_lea.vmem %s14, %s546
        %v549 = vld [vmem:[%s532] sm:$0xff]
        %v550 = vld [vmem:[%s532 + $0x8] sm:$0xff]
        %v551 = vld [vmem:[%s532 + $0x10] sm:$0xff]
        %v552 = vld [vmem:[%s532 + $0x18] sm:$0xff]
        %v553 = vld [vmem:[%s532 + $0x20] sm:$0xff]
        %v554 = vld [vmem:[%s532 + $0x28] sm:$0xff]
        %v555 = vld [vmem:[%s532 + $0x30] sm:$0xff]
        %v556 = vld [vmem:[%s532 + $0x38] sm:$0xff]
        %v557 = vld [vmem:[%s532 + $0x40] sm:$0xff]
        %v558 = vld [vmem:[%s532 + $0x48] sm:$0xff]
        %v559 = vld [vmem:[%s532 + $0x50] sm:$0xff]
        %v560 = vld [vmem:[%s532 + $0x58] sm:$0xff]
        %v561 = vld [vmem:[%s532 + $0x60] sm:$0xff]
        %v562 = vld [vmem:[%s532 + $0x68] sm:$0xff]
        %v563 = vld [vmem:[%s532 + $0x70] sm:$0xff]
        %v564 = vld [vmem:[%s532 + $0x78] sm:$0xff]
        %v565 = vpack.c.bf16 %v550, %v549
        %v566 = vpack.c.bf16 %v552, %v551
        %v567 = vpack.c.bf16 %v554, %v553
        %v568 = vpack.c.bf16 %v556, %v555
        %v569 = vpack.c.bf16 %v558, %v557
        %v570 = vpack.c.bf16 %v560, %v559
        %v571 = vpack.c.bf16 %v562, %v561
        %v572 = vpack.c.bf16 %v564, %v563
        %v573 = vld [vmem:[%s537] sm:$0xf]
        %v574 = vld [vmem:[%s537 + $0x4] sm:$0xf]
        %v575 = vld [vmem:[%s537 + $0x8] sm:$0xf]
        %v576 = vld [vmem:[%s537 + $0xc] sm:$0xf]
        %v577 = vld [vmem:[%s537 + $0x10] sm:$0xf]
        %v578 = vld [vmem:[%s537 + $0x14] sm:$0xf]
        %v579 = vld [vmem:[%s537 + $0x18] sm:$0xf]
        %v580 = vld [vmem:[%s537 + $0x1c] sm:$0xf]
        %v581 = vld [vmem:[%s537 + $0x20] sm:$0xf]
        %v582 = vld [vmem:[%s537 + $0x24] sm:$0xf]
        %v583 = vld [vmem:[%s537 + $0x28] sm:$0xf]
        %v584 = vld [vmem:[%s537 + $0x2c] sm:$0xf]
        %v585 = vld [vmem:[%s537 + $0x30] sm:$0xf]
        %v586 = vld [vmem:[%s537 + $0x34] sm:$0xf]
        %v587 = vld [vmem:[%s537 + $0x38] sm:$0xf]
        %v588 = vld [vmem:[%s537 + $0x3c] sm:$0xf]
        %v589 = vld [vmem:[%s542] sm:$0xf]
        %v590 = vld [vmem:[%s542 + $0x4] sm:$0xf]
        %v591 = vld [vmem:[%s542 + $0x8] sm:$0xf]
        %v592 = vld [vmem:[%s542 + $0xc] sm:$0xf]
        %v593 = vld [vmem:[%s542 + $0x10] sm:$0xf]
        %v594 = vld [vmem:[%s542 + $0x14] sm:$0xf]
        %v595 = vld [vmem:[%s542 + $0x18] sm:$0xf]
        %v596 = vld [vmem:[%s542 + $0x1c] sm:$0xf]
        %v597 = vld [vmem:[%s542 + $0x20] sm:$0xf]
        %v598 = vld [vmem:[%s542 + $0x24] sm:$0xf]
        %v599 = vld [vmem:[%s542 + $0x28] sm:$0xf]
        %v600 = vld [vmem:[%s542 + $0x2c] sm:$0xf]
        %v601 = vld [vmem:[%s542 + $0x30] sm:$0xf]
        %v602 = vld [vmem:[%s542 + $0x34] sm:$0xf]
        %v603 = vld [vmem:[%s542 + $0x38] sm:$0xf]
        %v604 = vld [vmem:[%s542 + $0x3c] sm:$0xf]
        %v605 = vld [vmem:[%s4] sm:$0xf]
        %v606 = vld [vmem:[%s4 + $0x4] sm:$0xf]
        %v607 = vld [vmem:[%s4 + $0x8] sm:$0xf]
        %v608 = vld [vmem:[%s4 + $0xc] sm:$0xf]
        %v609 = vld [vmem:[%s5] sm:$0x1]
        %v611 = vlaneseq
        %v612 = vshrl.u32 %v611, 7
        %v613 = vsub.s32 0, %v612
        %v614 = vrot.slane %v609, %v613
        %v620 = vunpack.c.l.b16 %v605
        %v621 = vunpack.c.l.b16 %v606
        %v622 = vunpack.c.l.b16 %v607
        %v623 = vunpack.c.l.b16 %v608
        %v624 = vpack.c.b16 %v621, %v620
        %v625 = vpack.c.b16 %v623, %v622
        %vm628 = vcmask 261120
        %v630 = vsel %vm628, %v565, 0
        %v633 = vsel %vm628, %v566, 0
        %v636 = vsel %vm628, %v567, 0
        %v639 = vsel %vm628, %v568, 0
        %v642 = vsel %vm628, %v569, 0
        %v645 = vsel %vm628, %v570, 0
        %v648 = vsel %vm628, %v571, 0
        %v651 = vsel %vm628, %v572, 0
        %653 = vmatprep.subr.bf16.mxu0 0
        %654 = vmatpush1.bf16.msra.mxu0 0
        %655 = vmatprep.subr.bf16.mxu0 0
        %656 = vmatpush1.bf16.msra.mxu0 0
        %657 = vmatprep.subr.bf16.mxu0 0
        %658 = vmatpush1.bf16.msra.mxu0 0
        %659 = vmatprep.subr.bf16.mxu0 0
        %660 = vmatpush1.bf16.msra.mxu0 0
        %661 = vmatprep.subr.bf16.mxu0 0
        %662 = vmatpush1.bf16.msra.mxu0 0
        %663 = vmatprep.subr.bf16.mxu0 0
        %664 = vmatpush1.bf16.msra.mxu0 0
        %665 = vmatprep.subr.bf16.mxu0 0
        %666 = vmatpush1.bf16.msra.mxu0 %v625
        %667 = vmatprep.subr.bf16.mxu0 0
        %668 = vmatpush1.bf16.msra.mxu0 %v624
        %669 = vmatprep.subr.bf16.mxu0 0
        %670 = vmatpush2.bf16.msra.mxu0 0
        %671 = vmatprep.subr.bf16.mxu0 0
        %672 = vmatpush2.bf16.msra.mxu0 0
        %673 = vmatprep.subr.bf16.mxu0 0
        %674 = vmatpush2.bf16.msra.mxu0 0
        %675 = vmatprep.subr.bf16.mxu0 0
        %676 = vmatpush2.bf16.msra.mxu0 0
        %677 = vmatprep.subr.bf16.mxu0 0
        %678 = vmatpush2.bf16.msra.mxu0 0
        %679 = vmatprep.subr.bf16.mxu0 0
        %680 = vmatpush2.bf16.msra.mxu0 0
        %681 = vmatprep.subr.bf16.mxu0 0
        %682 = vmatpush2.bf16.msra.mxu0 0
        %683 = vmatprep.subr.bf16.mxu0 0
        %684 = vmatpush2.bf16.msra.mxu0 0
        %685 = vmatprep.mubr.bf16.mxu0 0
        %686 = vmatmul.mubr.bf16.gmra.mxu0 %v630
        %v687 = vpop.f32.mrf.mxu0
        %v688 = vadd.f32 %v614, %v687
        %v689 = vpop.f32.mrf.mxu0
        %v690 = vpop.f32.mrf.mxu0
        %v691 = vadd.f32 %v614, %v690
        %v692 = vpop.f32.mrf.mxu0
        %693 = vmatprep.mubr.bf16.mxu0 0
        %694 = vmatmul.mubr.bf16.gmra.mxu0 %v633
        %v695 = vpop.f32.mrf.mxu0
        %v696 = vadd.f32 %v614, %v695
        %v697 = vpop.f32.mrf.mxu0
        %v698 = vpop.f32.mrf.mxu0
        %v699 = vadd.f32 %v614, %v698
        %v700 = vpop.f32.mrf.mxu0
        %701 = vmatprep.mubr.bf16.mxu0 0
        %702 = vmatmul.mubr.bf16.gmra.mxu0 %v636
        %v703 = vpop.f32.mrf.mxu0
        %v704 = vadd.f32 %v614, %v703
        %v705 = vpop.f32.mrf.mxu0
        %v706 = vpop.f32.mrf.mxu0
        %v707 = vadd.f32 %v614, %v706
        %v708 = vpop.f32.mrf.mxu0
        %709 = vmatprep.mubr.bf16.mxu0 0
        %710 = vmatmul.mubr.bf16.gmra.mxu0 %v639
        %v711 = vpop.f32.mrf.mxu0
        %v712 = vadd.f32 %v614, %v711
        %v713 = vpop.f32.mrf.mxu0
        %v714 = vpop.f32.mrf.mxu0
        %v715 = vadd.f32 %v614, %v714
        %v716 = vpop.f32.mrf.mxu0
        %717 = vmatprep.mubr.bf16.mxu0 0
        %718 = vmatmul.mubr.bf16.gmra.mxu0 %v642
        %v719 = vpop.f32.mrf.mxu0
        %v720 = vadd.f32 %v614, %v719
        %v721 = vpop.f32.mrf.mxu0
        %v722 = vpop.f32.mrf.mxu0
        %v723 = vadd.f32 %v614, %v722
        %v724 = vpop.f32.mrf.mxu0
        %725 = vmatprep.mubr.bf16.mxu0 0
        %726 = vmatmul.mubr.bf16.gmra.mxu0 %v645
        %v727 = vpop.f32.mrf.mxu0
        %v728 = vadd.f32 %v614, %v727
        %v729 = vpop.f32.mrf.mxu0
        %v730 = vpop.f32.mrf.mxu0
        %v731 = vadd.f32 %v614, %v730
        %v732 = vpop.f32.mrf.mxu0
        %733 = vmatprep.mubr.bf16.mxu0 0
        %734 = vmatmul.mubr.bf16.gmra.mxu0 %v648
        %v735 = vpop.f32.mrf.mxu0
        %v736 = vadd.f32 %v614, %v735
        %v737 = vpop.f32.mrf.mxu0
        %v738 = vpop.f32.mrf.mxu0
        %v739 = vadd.f32 %v614, %v738
        %v740 = vpop.f32.mrf.mxu0
        %741 = vmatprep.mubr.bf16.mxu0 0
        %742 = vmatmul.mubr.bf16.gmra.mxu0 %v651
        %v743 = vpop.f32.mrf.mxu0
        %v744 = vadd.f32 %v614, %v743
        %v745 = vpop.f32.mrf.mxu0
        %v746 = vpop.f32.mrf.mxu0
        %v747 = vadd.f32 %v614, %v746
        %v748 = vpop.f32.mrf.mxu0
        %749 = vdwg.mxu0
        %v750 = vld [vmem:[%s6] sm:$0xf]
        %v751 = vld [vmem:[%s6 + $0x4] sm:$0xf]
        %v752 = vld [vmem:[%s6 + $0x8] sm:$0xf]
        %v753 = vld [vmem:[%s6 + $0xc] sm:$0xf]
        %v754 = vld [vmem:[%s7] sm:$0x1]
        %v756 = vlaneseq
        %v757 = vshrl.u32 %v756, 7
        %v758 = vsub.s32 0, %v757
        %v759 = vrot.slane %v754, %v758
        %v777 = vunpack.c.l.b16 %v573
        %v778 = vunpack.c.l.b16 %v574
        %v779 = vunpack.c.l.b16 %v575
        %v780 = vunpack.c.l.b16 %v576
        %v781 = vunpack.c.l.b16 %v577
        %v782 = vunpack.c.l.b16 %v578
        %v783 = vunpack.c.l.b16 %v579
        %v784 = vunpack.c.l.b16 %v580
        %v785 = vunpack.c.l.b16 %v581
        %v786 = vunpack.c.l.b16 %v582
        %v787 = vunpack.c.l.b16 %v583
        %v788 = vunpack.c.l.b16 %v584
        %v789 = vunpack.c.l.b16 %v585
        %v790 = vunpack.c.l.b16 %v586
        %v791 = vunpack.c.l.b16 %v587
        %v792 = vunpack.c.l.b16 %v588
        %v793 = vpack.c.b16 %v778, %v777
        %v794 = vpack.c.b16 %v780, %v779
        %v795 = vpack.c.b16 %v782, %v781
        %v796 = vpack.c.b16 %v784, %v783
        %v797 = vpack.c.b16 %v786, %v785
        %v798 = vpack.c.b16 %v788, %v787
        %v799 = vpack.c.b16 %v790, %v789
        %v800 = vpack.c.b16 %v792, %v791
        %v805 = vunpack.c.l.b16 %v750
        %v806 = vunpack.c.l.b16 %v751
        %v807 = vunpack.c.l.b16 %v752
        %v808 = vunpack.c.l.b16 %v753
        %v809 = vpack.c.b16 %v806, %v805
        %v810 = vpack.c.b16 %v808, %v807
        %v814 = vsel %vm628, %v793, 0
        %v817 = vsel %vm628, %v794, 0
        %v820 = vsel %vm628, %v795, 0
        %v823 = vsel %vm628, %v796, 0
        %v826 = vsel %vm628, %v797, 0
        %v829 = vsel %vm628, %v798, 0
        %v832 = vsel %vm628, %v799, 0
        %v835 = vsel %vm628, %v800, 0
        %837 = vmatprep.subr.bf16.mxu0 0
        %838 = vmatpush1.bf16.msra.mxu0 0
        %839 = vmatprep.subr.bf16.mxu0 0
        %840 = vmatpush1.bf16.msra.mxu0 0
        %841 = vmatprep.subr.bf16.mxu0 0
        %842 = vmatpush1.bf16.msra.mxu0 0
        %843 = vmatprep.subr.bf16.mxu0 0
        %844 = vmatpush1.bf16.msra.mxu0 0
        %845 = vmatprep.subr.bf16.mxu0 0
        %846 = vmatpush1.bf16.msra.mxu0 0
        %847 = vmatprep.subr.bf16.mxu0 0
        %848 = vmatpush1.bf16.msra.mxu0 0
        %849 = vmatprep.subr.bf16.mxu0 0
        %850 = vmatpush1.bf16.msra.mxu0 %v810
        %851 = vmatprep.subr.bf16.mxu0 0
        %852 = vmatpush1.bf16.msra.mxu0 %v809
        %853 = vmatprep.subr.bf16.mxu0 0
        %854 = vmatpush2.bf16.msra.mxu0 0
        %855 = vmatprep.subr.bf16.mxu0 0
        %856 = vmatpush2.bf16.msra.mxu0 0
        %857 = vmatprep.subr.bf16.mxu0 0
        %858 = vmatpush2.bf16.msra.mxu0 0
        %859 = vmatprep.subr.bf16.mxu0 0
        %860 = vmatpush2.bf16.msra.mxu0 0
        %861 = vmatprep.subr.bf16.mxu0 0
        %862 = vmatpush2.bf16.msra.mxu0 0
        %863 = vmatprep.subr.bf16.mxu0 0
        %864 = vmatpush2.bf16.msra.mxu0 0
        %865 = vmatprep.subr.bf16.mxu0 0
        %866 = vmatpush2.bf16.msra.mxu0 0
        %867 = vmatprep.subr.bf16.mxu0 0
        %868 = vmatpush2.bf16.msra.mxu0 0
        %869 = vmatprep.mubr.bf16.mxu0 0
        %870 = vmatmul.mubr.bf16.gmra.mxu0 %v814
        %v871 = vpop.f32.mrf.mxu0
        %v872 = vadd.f32 %v759, %v871
        %v873 = vpop.f32.mrf.mxu0
        %v874 = vpop.f32.mrf.mxu0
        %v875 = vadd.f32 %v759, %v874
        %v876 = vpop.f32.mrf.mxu0
        %877 = vmatprep.mubr.bf16.mxu0 0
        %878 = vmatmul.mubr.bf16.gmra.mxu0 %v817
        %v879 = vpop.f32.mrf.mxu0
        %v880 = vadd.f32 %v759, %v879
        %v881 = vpop.f32.mrf.mxu0
        %v882 = vpop.f32.mrf.mxu0
        %v883 = vadd.f32 %v759, %v882
        %v884 = vpop.f32.mrf.mxu0
        %885 = vmatprep.mubr.bf16.mxu0 0
        %886 = vmatmul.mubr.bf16.gmra.mxu0 %v820
        %v887 = vpop.f32.mrf.mxu0
        %v888 = vadd.f32 %v759, %v887
        %v889 = vpop.f32.mrf.mxu0
        %v890 = vpop.f32.mrf.mxu0
        %v891 = vadd.f32 %v759, %v890
        %v892 = vpop.f32.mrf.mxu0
        %893 = vmatprep.mubr.bf16.mxu0 0
        %894 = vmatmul.mubr.bf16.gmra.mxu0 %v823
        %v895 = vpop.f32.mrf.mxu0
        %v896 = vadd.f32 %v759, %v895
        %v897 = vpop.f32.mrf.mxu0
        %v898 = vpop.f32.mrf.mxu0
        %v899 = vadd.f32 %v759, %v898
        %v900 = vpop.f32.mrf.mxu0
        %901 = vmatprep.mubr.bf16.mxu0 0
        %902 = vmatmul.mubr.bf16.gmra.mxu0 %v826
        %v903 = vpop.f32.mrf.mxu0
        %v904 = vadd.f32 %v759, %v903
        %v905 = vpop.f32.mrf.mxu0
        %v906 = vpop.f32.mrf.mxu0
        %v907 = vadd.f32 %v759, %v906
        %v908 = vpop.f32.mrf.mxu0
        %909 = vmatprep.mubr.bf16.mxu0 0
        %910 = vmatmul.mubr.bf16.gmra.mxu0 %v829
        %v911 = vpop.f32.mrf.mxu0
        %v912 = vadd.f32 %v759, %v911
        %v913 = vpop.f32.mrf.mxu0
        %v914 = vpop.f32.mrf.mxu0
        %v915 = vadd.f32 %v759, %v914
        %v916 = vpop.f32.mrf.mxu0
        %917 = vmatprep.mubr.bf16.mxu0 0
        %918 = vmatmul.mubr.bf16.gmra.mxu0 %v832
        %v919 = vpop.f32.mrf.mxu0
        %v920 = vadd.f32 %v759, %v919
        %v921 = vpop.f32.mrf.mxu0
        %v922 = vpop.f32.mrf.mxu0
        %v923 = vadd.f32 %v759, %v922
        %v924 = vpop.f32.mrf.mxu0
        %925 = vmatprep.mubr.bf16.mxu0 0
        %926 = vmatmul.mubr.bf16.gmra.mxu0 %v835
        %v927 = vpop.f32.mrf.mxu0
        %v928 = vadd.f32 %v759, %v927
        %v929 = vpop.f32.mrf.mxu0
        %v930 = vpop.f32.mrf.mxu0
        %v931 = vadd.f32 %v759, %v930
        %v932 = vpop.f32.mrf.mxu0
        %933 = vdwg.mxu0
        %v934 = vld [vmem:[%s8] sm:$0xf]
        %v935 = vld [vmem:[%s8 + $0x4] sm:$0xf]
        %v936 = vld [vmem:[%s8 + $0x8] sm:$0xf]
        %v937 = vld [vmem:[%s8 + $0xc] sm:$0xf]
        %v938 = vld [vmem:[%s9] sm:$0x1]
        %v940 = vlaneseq
        %v941 = vshrl.u32 %v940, 7
        %v942 = vsub.s32 0, %v941
        %v943 = vrot.slane %v938, %v942
        %v961 = vunpack.c.l.b16 %v589
        %v962 = vunpack.c.l.b16 %v590
        %v963 = vunpack.c.l.b16 %v591
        %v964 = vunpack.c.l.b16 %v592
        %v965 = vunpack.c.l.b16 %v593
        %v966 = vunpack.c.l.b16 %v594
        %v967 = vunpack.c.l.b16 %v595
        %v968 = vunpack.c.l.b16 %v596
        %v969 = vunpack.c.l.b16 %v597
        %v970 = vunpack.c.l.b16 %v598
        %v971 = vunpack.c.l.b16 %v599
        %v972 = vunpack.c.l.b16 %v600
        %v973 = vunpack.c.l.b16 %v601
        %v974 = vunpack.c.l.b16 %v602
        %v975 = vunpack.c.l.b16 %v603
        %v976 = vunpack.c.l.b16 %v604
        %v977 = vpack.c.b16 %v962, %v961
        %v978 = vpack.c.b16 %v964, %v963
        %v979 = vpack.c.b16 %v966, %v965
        %v980 = vpack.c.b16 %v968, %v967
        %v981 = vpack.c.b16 %v970, %v969
        %v982 = vpack.c.b16 %v972, %v971
        %v983 = vpack.c.b16 %v974, %v973
        %v984 = vpack.c.b16 %v976, %v975
        %v989 = vunpack.c.l.b16 %v934
        %v990 = vunpack.c.l.b16 %v935
        %v991 = vunpack.c.l.b16 %v936
        %v992 = vunpack.c.l.b16 %v937
        %v993 = vpack.c.b16 %v990, %v989
        %v994 = vpack.c.b16 %v992, %v991
        %v998 = vsel %vm628, %v977, 0
        %v1001 = vsel %vm628, %v978, 0
        %v1004 = vsel %vm628, %v979, 0
        %v1007 = vsel %vm628, %v980, 0
        %v1010 = vsel %vm628, %v981, 0
        %v1013 = vsel %vm628, %v982, 0
        %v1016 = vsel %vm628, %v983, 0
        %v1019 = vsel %vm628, %v984, 0
        %1021 = vmatprep.subr.bf16.mxu0 0
        %1022 = vmatpush1.bf16.msra.mxu0 0
        %1023 = vmatprep.subr.bf16.mxu0 0
        %1024 = vmatpush1.bf16.msra.mxu0 0
        %1025 = vmatprep.subr.bf16.mxu0 0
        %1026 = vmatpush1.bf16.msra.mxu0 0
        %1027 = vmatprep.subr.bf16.mxu0 0
        %1028 = vmatpush1.bf16.msra.mxu0 0
        %1029 = vmatprep.subr.bf16.mxu0 0
        %1030 = vmatpush1.bf16.msra.mxu0 0
        %1031 = vmatprep.subr.bf16.mxu0 0
        %1032 = vmatpush1.bf16.msra.mxu0 0
        %1033 = vmatprep.subr.bf16.mxu0 0
        %1034 = vmatpush1.bf16.msra.mxu0 %v994
        %1035 = vmatprep.subr.bf16.mxu0 0
        %1036 = vmatpush1.bf16.msra.mxu0 %v993
        %1037 = vmatprep.subr.bf16.mxu0 0
        %1038 = vmatpush2.bf16.msra.mxu0 0
        %1039 = vmatprep.subr.bf16.mxu0 0
        %1040 = vmatpush2.bf16.msra.mxu0 0
        %1041 = vmatprep.subr.bf16.mxu0 0
        %1042 = vmatpush2.bf16.msra.mxu0 0
        %1043 = vmatprep.subr.bf16.mxu0 0
        %1044 = vmatpush2.bf16.msra.mxu0 0
        %1045 = vmatprep.subr.bf16.mxu0 0
        %1046 = vmatpush2.bf16.msra.mxu0 0
        %1047 = vmatprep.subr.bf16.mxu0 0
        %1048 = vmatpush2.bf16.msra.mxu0 0
        %1049 = vmatprep.subr.bf16.mxu0 0
        %1050 = vmatpush2.bf16.msra.mxu0 0
        %1051 = vmatprep.subr.bf16.mxu0 0
        %1052 = vmatpush2.bf16.msra.mxu0 0
        %1053 = vmatprep.mubr.bf16.mxu0 0
        %1054 = vmatmul.mubr.bf16.gmra.mxu0 %v998
        %v1055 = vpop.f32.mrf.mxu0
        %v1056 = vadd.f32 %v943, %v1055
        %v1057 = vpop.f32.mrf.mxu0
        %v1058 = vpop.f32.mrf.mxu0
        %v1059 = vadd.f32 %v943, %v1058
        %v1060 = vpop.f32.mrf.mxu0
        %1061 = vmatprep.mubr.bf16.mxu0 0
        %1062 = vmatmul.mubr.bf16.gmra.mxu0 %v1001
        %v1063 = vpop.f32.mrf.mxu0
        %v1064 = vadd.f32 %v943, %v1063
        %v1065 = vpop.f32.mrf.mxu0
        %v1066 = vpop.f32.mrf.mxu0
        %v1067 = vadd.f32 %v943, %v1066
        %v1068 = vpop.f32.mrf.mxu0
        %1069 = vmatprep.mubr.bf16.mxu0 0
        %1070 = vmatmul.mubr.bf16.gmra.mxu0 %v1004
        %v1071 = vpop.f32.mrf.mxu0
        %v1072 = vadd.f32 %v943, %v1071
        %v1073 = vpop.f32.mrf.mxu0
        %v1074 = vpop.f32.mrf.mxu0
        %v1075 = vadd.f32 %v943, %v1074
        %v1076 = vpop.f32.mrf.mxu0
        %1077 = vmatprep.mubr.bf16.mxu0 0
        %1078 = vmatmul.mubr.bf16.gmra.mxu0 %v1007
        %v1079 = vpop.f32.mrf.mxu0
        %v1080 = vadd.f32 %v943, %v1079
        %v1081 = vpop.f32.mrf.mxu0
        %v1082 = vpop.f32.mrf.mxu0
        %v1083 = vadd.f32 %v943, %v1082
        %v1084 = vpop.f32.mrf.mxu0
        %1085 = vmatprep.mubr.bf16.mxu0 0
        %1086 = vmatmul.mubr.bf16.gmra.mxu0 %v1010
        %v1087 = vpop.f32.mrf.mxu0
        %v1088 = vadd.f32 %v943, %v1087
        %v1089 = vpop.f32.mrf.mxu0
        %v1090 = vpop.f32.mrf.mxu0
        %v1091 = vadd.f32 %v943, %v1090
        %v1092 = vpop.f32.mrf.mxu0
        %1093 = vmatprep.mubr.bf16.mxu0 0
        %1094 = vmatmul.mubr.bf16.gmra.mxu0 %v1013
        %v1095 = vpop.f32.mrf.mxu0
        %v1096 = vadd.f32 %v943, %v1095
        %v1097 = vpop.f32.mrf.mxu0
        %v1098 = vpop.f32.mrf.mxu0
        %v1099 = vadd.f32 %v943, %v1098
        %v1100 = vpop.f32.mrf.mxu0
        %1101 = vmatprep.mubr.bf16.mxu0 0
        %1102 = vmatmul.mubr.bf16.gmra.mxu0 %v1016
        %v1103 = vpop.f32.mrf.mxu0
        %v1104 = vadd.f32 %v943, %v1103
        %v1105 = vpop.f32.mrf.mxu0
        %v1106 = vpop.f32.mrf.mxu0
        %v1107 = vadd.f32 %v943, %v1106
        %v1108 = vpop.f32.mrf.mxu0
        %1109 = vmatprep.mubr.bf16.mxu0 0
        %1110 = vmatmul.mubr.bf16.gmra.mxu0 %v1019
        %v1111 = vpop.f32.mrf.mxu0
        %v1112 = vadd.f32 %v943, %v1111
        %v1113 = vpop.f32.mrf.mxu0
        %v1114 = vpop.f32.mrf.mxu0
        %v1115 = vadd.f32 %v943, %v1114
        %v1116 = vpop.f32.mrf.mxu0
        %1117 = vdwg.mxu0
        %v1118 = vpack.c.bf16 %v691, %v688
        %v1119 = vpack.c.bf16 %v699, %v696
        %v1120 = vpack.c.bf16 %v707, %v704
        %v1121 = vpack.c.bf16 %v715, %v712
        %v1122 = vpack.c.bf16 %v723, %v720
        %v1123 = vpack.c.bf16 %v731, %v728
        %v1124 = vpack.c.bf16 %v739, %v736
        %v1125 = vpack.c.bf16 %v747, %v744
        %v1126 = vpack.c.bf16 %v875, %v872
        %v1127 = vpack.c.bf16 %v883, %v880
        %v1128 = vpack.c.bf16 %v891, %v888
        %v1129 = vpack.c.bf16 %v899, %v896
        %v1130 = vpack.c.bf16 %v907, %v904
        %v1131 = vpack.c.bf16 %v915, %v912
        %v1132 = vpack.c.bf16 %v923, %v920
        %v1133 = vpack.c.bf16 %v931, %v928
        %v1134 = vpack.c.bf16 %v1059, %v1056
        %v1135 = vpack.c.bf16 %v1067, %v1064
        %v1136 = vpack.c.bf16 %v1075, %v1072
        %v1137 = vpack.c.bf16 %v1083, %v1080
        %v1138 = vpack.c.bf16 %v1091, %v1088
        %v1139 = vpack.c.bf16 %v1099, %v1096
        %v1140 = vpack.c.bf16 %v1107, %v1104
        %v1141 = vpack.c.bf16 %v1115, %v1112
        %v1142 = vld [vmem:[%s468] sm:$0xff]
        %v1143 = vld [vmem:[%s468 + $0x8] sm:$0xff]
        %v1144 = vld [vmem:[%s468 + $0x10] sm:$0xff]
        %v1145 = vld [vmem:[%s468 + $0x18] sm:$0xff]
        %v1146 = vld [vmem:[%s468 + $0x20] sm:$0xff]
        %v1147 = vld [vmem:[%s468 + $0x28] sm:$0xff]
        %v1148 = vld [vmem:[%s468 + $0x30] sm:$0xff]
        %v1149 = vld [vmem:[%s468 + $0x38] sm:$0xff]
        %v1150 = vld [vmem:[%s468 + $0x40] sm:$0xff]
        %v1151 = vld [vmem:[%s468 + $0x48] sm:$0xff]
        %v1152 = vld [vmem:[%s468 + $0x50] sm:$0xff]
        %v1153 = vld [vmem:[%s468 + $0x58] sm:$0xff]
        %v1154 = vld [vmem:[%s468 + $0x60] sm:$0xff]
        %v1155 = vld [vmem:[%s468 + $0x68] sm:$0xff]
        %v1156 = vld [vmem:[%s468 + $0x70] sm:$0xff]
        %v1157 = vld [vmem:[%s468 + $0x78] sm:$0xff]
        %vm1158 = vcmask 64512
        %v1160 = vsel %vm1158, %v1118, 0
        %v1163 = vsel %vm1158, %v1119, 0
        %v1166 = vsel %vm1158, %v1120, 0
        %v1169 = vsel %vm1158, %v1121, 0
        %v1172 = vsel %vm1158, %v1122, 0
        %v1175 = vsel %vm1158, %v1123, 0
        %v1178 = vsel %vm1158, %v1124, 0
        %v1181 = vsel %vm1158, %v1125, 0
        %v1184 = vsel %vm1158, %v1126, 0
        %v1187 = vsel %vm1158, %v1127, 0
        %v1190 = vsel %vm1158, %v1128, 0
        %v1193 = vsel %vm1158, %v1129, 0
        %v1196 = vsel %vm1158, %v1130, 0
        %v1199 = vsel %vm1158, %v1131, 0
        %v1202 = vsel %vm1158, %v1132, 0
        %v1205 = vsel %vm1158, %v1133, 0
        %1207 = vmatprep.subr.bf16.mxu0 0
        %1208 = vmatpush1.bf16.xpose.msra.mxu0 %v1205
        %1209 = vmatprep.subr.bf16.mxu0 0
        %1210 = vmatpush1.bf16.xpose.msra.mxu0 %v1202
        %1211 = vmatprep.subr.bf16.mxu0 0
        %1212 = vmatpush1.bf16.xpose.msra.mxu0 %v1199
        %1213 = vmatprep.subr.bf16.mxu0 0
        %1214 = vmatpush1.bf16.xpose.msra.mxu0 %v1196
        %1215 = vmatprep.subr.bf16.mxu0 0
        %1216 = vmatpush1.bf16.xpose.msra.mxu0 %v1193
        %1217 = vmatprep.subr.bf16.mxu0 0
        %1218 = vmatpush1.bf16.xpose.msra.mxu0 %v1190
        %1219 = vmatprep.subr.bf16.mxu0 0
        %1220 = vmatpush1.bf16.xpose.msra.mxu0 %v1187
        %1221 = vmatprep.subr.bf16.mxu0 0
        %1222 = vmatpush1.bf16.xpose.msra.mxu0 %v1184
        %1223 = vmatprep.subr.bf16.mxu0 0
        %1224 = vmatpush2.bf16.xpose.msra.mxu0 0
        %1225 = vmatprep.subr.bf16.mxu0 0
        %1226 = vmatpush2.bf16.xpose.msra.mxu0 0
        %1227 = vmatprep.subr.bf16.mxu0 0
        %1228 = vmatpush2.bf16.xpose.msra.mxu0 0
        %1229 = vmatprep.subr.bf16.mxu0 0
        %1230 = vmatpush2.bf16.xpose.msra.mxu0 0
        %1231 = vmatprep.subr.bf16.mxu0 0
        %1232 = vmatpush2.bf16.xpose.msra.mxu0 0
        %1233 = vmatprep.subr.bf16.mxu0 0
        %1234 = vmatpush2.bf16.xpose.msra.mxu0 0
        %1235 = vmatprep.subr.bf16.mxu0 0
        %1236 = vmatpush2.bf16.xpose.msra.mxu0 0
        %1237 = vmatprep.subr.bf16.mxu0 0
        %1238 = vmatpush2.bf16.xpose.msra.mxu0 0
        %1239 = vmatprep.mubr.bf16.mxu0 0
        %1240 = vmatmul.mubr.bf16.gmra.mxu0 %v1160
        %v1241 = vpop.f32.mrf.mxu0
        %v1242 = vadd.f32 %v1142, %v1241
        %v1243 = vpop.f32.mrf.mxu0
        %v1244 = vpop.f32.mrf.mxu0
        %v1245 = vadd.f32 %v1143, %v1244
        %v1246 = vpop.f32.mrf.mxu0
        %1247 = vmatprep.mubr.bf16.mxu0 0
        %1248 = vmatmul.mubr.bf16.gmra.mxu0 %v1163
        %v1249 = vpop.f32.mrf.mxu0
        %v1250 = vadd.f32 %v1144, %v1249
        %v1251 = vpop.f32.mrf.mxu0
        %v1252 = vpop.f32.mrf.mxu0
        %v1253 = vadd.f32 %v1145, %v1252
        %v1254 = vpop.f32.mrf.mxu0
        %1255 = vmatprep.mubr.bf16.mxu0 0
        %1256 = vmatmul.mubr.bf16.gmra.mxu0 %v1166
        %v1257 = vpop.f32.mrf.mxu0
        %v1258 = vadd.f32 %v1146, %v1257
        %v1259 = vpop.f32.mrf.mxu0
        %v1260 = vpop.f32.mrf.mxu0
        %v1261 = vadd.f32 %v1147, %v1260
        %v1262 = vpop.f32.mrf.mxu0
        %1263 = vmatprep.mubr.bf16.mxu0 0
        %1264 = vmatmul.mubr.bf16.gmra.mxu0 %v1169
        %v1265 = vpop.f32.mrf.mxu0
        %v1266 = vadd.f32 %v1148, %v1265
        %v1267 = vpop.f32.mrf.mxu0
        %v1268 = vpop.f32.mrf.mxu0
        %v1269 = vadd.f32 %v1149, %v1268
        %v1270 = vpop.f32.mrf.mxu0
        %1271 = vmatprep.mubr.bf16.mxu0 0
        %1272 = vmatmul.mubr.bf16.gmra.mxu0 %v1172
        %v1273 = vpop.f32.mrf.mxu0
        %v1274 = vadd.f32 %v1150, %v1273
        %v1275 = vpop.f32.mrf.mxu0
        %v1276 = vpop.f32.mrf.mxu0
        %v1277 = vadd.f32 %v1151, %v1276
        %v1278 = vpop.f32.mrf.mxu0
        %1279 = vmatprep.mubr.bf16.mxu0 0
        %1280 = vmatmul.mubr.bf16.gmra.mxu0 %v1175
        %v1281 = vpop.f32.mrf.mxu0
        %v1282 = vadd.f32 %v1152, %v1281
        %v1283 = vpop.f32.mrf.mxu0
        %v1284 = vpop.f32.mrf.mxu0
        %v1285 = vadd.f32 %v1153, %v1284
        %v1286 = vpop.f32.mrf.mxu0
        %1287 = vmatprep.mubr.bf16.mxu0 0
        %1288 = vmatmul.mubr.bf16.gmra.mxu0 %v1178
        %v1289 = vpop.f32.mrf.mxu0
        %v1290 = vadd.f32 %v1154, %v1289
        %v1291 = vpop.f32.mrf.mxu0
        %v1292 = vpop.f32.mrf.mxu0
        %v1293 = vadd.f32 %v1155, %v1292
        %v1294 = vpop.f32.mrf.mxu0
        %1295 = vmatprep.mubr.bf16.mxu0 0
        %1296 = vmatmul.mubr.bf16.gmra.mxu0 %v1181
        %v1297 = vpop.f32.mrf.mxu0
        %v1298 = vadd.f32 %v1156, %v1297
        %v1299 = vpop.f32.mrf.mxu0
        %v1300 = vpop.f32.mrf.mxu0
        %v1301 = vadd.f32 %v1157, %v1300
        %v1302 = vpop.f32.mrf.mxu0
        %1303 = vdwg.mxu0
        %1304 = vmax.xlane.f32.xlu0 %v1242
        %v1305 = vpop.xlane.xlu0 %1304
        %1306 = vmax.xlane.f32.xlu0 %v1245
        %v1307 = vpop.xlane.xlu0 %1306
        %1308 = vmax.xlane.f32.xlu0 %v1250
        %v1309 = vpop.xlane.xlu0 %1308
        %1310 = vmax.xlane.f32.xlu0 %v1253
        %v1311 = vpop.xlane.xlu0 %1310
        %1312 = vmax.xlane.f32.xlu0 %v1258
        %v1313 = vpop.xlane.xlu0 %1312
        %1314 = vmax.xlane.f32.xlu0 %v1261
        %v1315 = vpop.xlane.xlu0 %1314
        %1316 = vmax.xlane.f32.xlu0 %v1266
        %v1317 = vpop.xlane.xlu0 %1316
        %1318 = vmax.xlane.f32.xlu0 %v1269
        %v1319 = vpop.xlane.xlu0 %1318
        %1320 = vmax.xlane.f32.xlu0 %v1274
        %v1321 = vpop.xlane.xlu0 %1320
        %1322 = vmax.xlane.f32.xlu0 %v1277
        %v1323 = vpop.xlane.xlu0 %1322
        %1324 = vmax.xlane.f32.xlu0 %v1282
        %v1325 = vpop.xlane.xlu0 %1324
        %1326 = vmax.xlane.f32.xlu0 %v1285
        %v1327 = vpop.xlane.xlu0 %1326
        %1328 = vmax.xlane.f32.xlu0 %v1290
        %v1329 = vpop.xlane.xlu0 %1328
        %1330 = vmax.xlane.f32.xlu0 %v1293
        %v1331 = vpop.xlane.xlu0 %1330
        %1332 = vmax.xlane.f32.xlu0 %v1298
        %v1333 = vpop.xlane.xlu0 %1332
        %1334 = vmax.xlane.f32.xlu0 %v1301
        %v1335 = vpop.xlane.xlu0 %1334
        %v1336 = vsub.f32 %v1242, %v1305
        %v1337 = vsub.f32 %v1245, %v1307
        %v1338 = vsub.f32 %v1250, %v1309
        %v1339 = vsub.f32 %v1253, %v1311
        %v1340 = vsub.f32 %v1258, %v1313
        %v1341 = vsub.f32 %v1261, %v1315
        %v1342 = vsub.f32 %v1266, %v1317
        %v1343 = vsub.f32 %v1269, %v1319
        %v1344 = vsub.f32 %v1274, %v1321
        %v1345 = vsub.f32 %v1277, %v1323
        %v1346 = vsub.f32 %v1282, %v1325
        %v1347 = vsub.f32 %v1285, %v1327
        %v1348 = vsub.f32 %v1290, %v1329
        %v1349 = vsub.f32 %v1293, %v1331
        %v1350 = vsub.f32 %v1298, %v1333
        %v1351 = vsub.f32 %v1301, %v1335
        %v1352 = vmul.f32 %v1336, 1.442695
        %v1353 = vpow.pop %v1352
        %v1354 = vmul.f32 %v1337, 1.442695
        %v1355 = vpow.pop %v1354
        %v1356 = vmul.f32 %v1338, 1.442695
        %v1357 = vpow.pop %v1356
        %v1358 = vmul.f32 %v1339, 1.442695
        %v1359 = vpow.pop %v1358
        %v1360 = vmul.f32 %v1340, 1.442695
        %v1361 = vpow.pop %v1360
        %v1362 = vmul.f32 %v1341, 1.442695
        %v1363 = vpow.pop %v1362
        %v1364 = vmul.f32 %v1342, 1.442695
        %v1365 = vpow.pop %v1364
        %v1366 = vmul.f32 %v1343, 1.442695
        %v1367 = vpow.pop %v1366
        %v1368 = vmul.f32 %v1344, 1.442695
        %v1369 = vpow.pop %v1368
        %v1370 = vmul.f32 %v1345, 1.442695
        %v1371 = vpow.pop %v1370
        %v1372 = vmul.f32 %v1346, 1.442695
        %v1373 = vpow.pop %v1372
        %v1374 = vmul.f32 %v1347, 1.442695
        %v1375 = vpow.pop %v1374
        %v1376 = vmul.f32 %v1348, 1.442695
        %v1377 = vpow.pop %v1376
        %v1378 = vmul.f32 %v1349, 1.442695
        %v1379 = vpow.pop %v1378
        %v1380 = vmul.f32 %v1350, 1.442695
        %v1381 = vpow.pop %v1380
        %v1382 = vmul.f32 %v1351, 1.442695
        %v1383 = vpow.pop %v1382
        %1384 = vadd.xlane.f32.xlu0 %v1353
        %v1385 = vpop.xlane.xlu0 %1384
        %1386 = vadd.xlane.f32.xlu0 %v1355
        %v1387 = vpop.xlane.xlu0 %1386
        %1388 = vadd.xlane.f32.xlu0 %v1357
        %v1389 = vpop.xlane.xlu0 %1388
        %1390 = vadd.xlane.f32.xlu0 %v1359
        %v1391 = vpop.xlane.xlu0 %1390
        %1392 = vadd.xlane.f32.xlu0 %v1361
        %v1393 = vpop.xlane.xlu0 %1392
        %1394 = vadd.xlane.f32.xlu0 %v1363
        %v1395 = vpop.xlane.xlu0 %1394
        %1396 = vadd.xlane.f32.xlu0 %v1365
        %v1397 = vpop.xlane.xlu0 %1396
        %1398 = vadd.xlane.f32.xlu0 %v1367
        %v1399 = vpop.xlane.xlu0 %1398
        %1400 = vadd.xlane.f32.xlu0 %v1369
        %v1401 = vpop.xlane.xlu0 %1400
        %1402 = vadd.xlane.f32.xlu0 %v1371
        %v1403 = vpop.xlane.xlu0 %1402
        %1404 = vadd.xlane.f32.xlu0 %v1373
        %v1405 = vpop.xlane.xlu0 %1404
        %1406 = vadd.xlane.f32.xlu0 %v1375
        %v1407 = vpop.xlane.xlu0 %1406
        %1408 = vadd.xlane.f32.xlu0 %v1377
        %v1409 = vpop.xlane.xlu0 %1408
        %1410 = vadd.xlane.f32.xlu0 %v1379
        %v1411 = vpop.xlane.xlu0 %1410
        %1412 = vadd.xlane.f32.xlu0 %v1381
        %v1413 = vpop.xlane.xlu0 %1412
        %1414 = vadd.xlane.f32.xlu0 %v1383
        %v1415 = vpop.xlane.xlu0 %1414
        %v1416 = vrcp.pop %v1385
        %v1417 = vrcp.pop %v1387
        %v1418 = vrcp.pop %v1389
        %v1419 = vrcp.pop %v1391
        %v1420 = vrcp.pop %v1393
        %v1421 = vrcp.pop %v1395
        %v1422 = vrcp.pop %v1397
        %v1423 = vrcp.pop %v1399
        %v1424 = vrcp.pop %v1401
        %v1425 = vrcp.pop %v1403
        %v1426 = vrcp.pop %v1405
        %v1427 = vrcp.pop %v1407
        %v1428 = vrcp.pop %v1409
        %v1429 = vrcp.pop %v1411
        %v1430 = vrcp.pop %v1413
        %v1431 = vrcp.pop %v1415
        %v1432 = vmul.f32 %v1353, %v1416
        %v1433 = vmul.f32 %v1355, %v1417
        %v1434 = vmul.f32 %v1357, %v1418
        %v1435 = vmul.f32 %v1359, %v1419
        %v1436 = vmul.f32 %v1361, %v1420
        %v1437 = vmul.f32 %v1363, %v1421
        %v1438 = vmul.f32 %v1365, %v1422
        %v1439 = vmul.f32 %v1367, %v1423
        %v1440 = vmul.f32 %v1369, %v1424
        %v1441 = vmul.f32 %v1371, %v1425
        %v1442 = vmul.f32 %v1373, %v1426
        %v1443 = vmul.f32 %v1375, %v1427
        %v1444 = vmul.f32 %v1377, %v1428
        %v1445 = vmul.f32 %v1379, %v1429
        %v1446 = vmul.f32 %v1381, %v1430
        %v1447 = vmul.f32 %v1383, %v1431
        %v1448 = vpack.c.bf16 %v1433, %v1432
        %v1449 = vpack.c.bf16 %v1435, %v1434
        %v1450 = vpack.c.bf16 %v1437, %v1436
        %v1451 = vpack.c.bf16 %v1439, %v1438
        %v1452 = vpack.c.bf16 %v1441, %v1440
        %v1453 = vpack.c.bf16 %v1443, %v1442
        %v1454 = vpack.c.bf16 %v1445, %v1444
        %v1455 = vpack.c.bf16 %v1447, %v1446
        %1456 = vmatprep.subr.bf16.mxu0 0
        %1457 = vmatpush1.bf16.msra.mxu0 %v1141
        %1458 = vmatprep.subr.bf16.mxu0 0
        %1459 = vmatpush1.bf16.msra.mxu0 %v1140
        %1460 = vmatprep.subr.bf16.mxu0 0
        %1461 = vmatpush1.bf16.msra.mxu0 %v1139
        %1462 = vmatprep.subr.bf16.mxu0 0
        %1463 = vmatpush1.bf16.msra.mxu0 %v1138
        %1464 = vmatprep.subr.bf16.mxu0 0
        %1465 = vmatpush1.bf16.msra.mxu0 %v1137
        %1466 = vmatprep.subr.bf16.mxu0 0
        %1467 = vmatpush1.bf16.msra.mxu0 %v1136
        %1468 = vmatprep.subr.bf16.mxu0 0
        %1469 = vmatpush1.bf16.msra.mxu0 %v1135
        %1470 = vmatprep.subr.bf16.mxu0 0
        %1471 = vmatpush1.bf16.msra.mxu0 %v1134
        %1472 = vmatprep.subr.bf16.mxu0 0
        %1473 = vmatpush2.bf16.msra.mxu0 0
        %1474 = vmatprep.subr.bf16.mxu0 0
        %1475 = vmatpush2.bf16.msra.mxu0 0
        %1476 = vmatprep.subr.bf16.mxu0 0
        %1477 = vmatpush2.bf16.msra.mxu0 0
        %1478 = vmatprep.subr.bf16.mxu0 0
        %1479 = vmatpush2.bf16.msra.mxu0 0
        %1480 = vmatprep.subr.bf16.mxu0 0
        %1481 = vmatpush2.bf16.msra.mxu0 0
        %1482 = vmatprep.subr.bf16.mxu0 0
        %1483 = vmatpush2.bf16.msra.mxu0 0
        %1484 = vmatprep.subr.bf16.mxu0 0
        %1485 = vmatpush2.bf16.msra.mxu0 0
        %1486 = vmatprep.subr.bf16.mxu0 0
        %1487 = vmatpush2.bf16.msra.mxu0 0
        %1488 = vmatprep.mubr.bf16.mxu0 0
        %1489 = vmatmul.mubr.bf16.gmra.mxu0 %v1448
        %v1490 = vpop.f32.mrf.mxu0
        %v1491 = vadd.f32 0.0, %v1490
        %v1492 = vpop.f32.mrf.mxu0
        %v1493 = vpop.f32.mrf.mxu0
        %v1494 = vadd.f32 0.0, %v1493
        %v1495 = vpop.f32.mrf.mxu0
        %1496 = vmatprep.mubr.bf16.mxu0 0
        %1497 = vmatmul.mubr.bf16.gmra.mxu0 %v1449
        %v1498 = vpop.f32.mrf.mxu0
        %v1499 = vadd.f32 0.0, %v1498
        %v1500 = vpop.f32.mrf.mxu0
        %v1501 = vpop.f32.mrf.mxu0
        %v1502 = vadd.f32 0.0, %v1501
        %v1503 = vpop.f32.mrf.mxu0
        %1504 = vmatprep.mubr.bf16.mxu0 0
        %1505 = vmatmul.mubr.bf16.gmra.mxu0 %v1450
        %v1506 = vpop.f32.mrf.mxu0
        %v1507 = vadd.f32 0.0, %v1506
        %v1508 = vpop.f32.mrf.mxu0
        %v1509 = vpop.f32.mrf.mxu0
        %v1510 = vadd.f32 0.0, %v1509
        %v1511 = vpop.f32.mrf.mxu0
        %1512 = vmatprep.mubr.bf16.mxu0 0
        %1513 = vmatmul.mubr.bf16.gmra.mxu0 %v1451
        %v1514 = vpop.f32.mrf.mxu0
        %v1515 = vadd.f32 0.0, %v1514
        %v1516 = vpop.f32.mrf.mxu0
        %v1517 = vpop.f32.mrf.mxu0
        %v1518 = vadd.f32 0.0, %v1517
        %v1519 = vpop.f32.mrf.mxu0
        %1520 = vmatprep.mubr.bf16.mxu0 0
        %1521 = vmatmul.mubr.bf16.gmra.mxu0 %v1452
        %v1522 = vpop.f32.mrf.mxu0
        %v1523 = vadd.f32 0.0, %v1522
        %v1524 = vpop.f32.mrf.mxu0
        %v1525 = vpop.f32.mrf.mxu0
        %v1526 = vadd.f32 0.0, %v1525
        %v1527 = vpop.f32.mrf.mxu0
        %1528 = vmatprep.mubr.bf16.mxu0 0
        %1529 = vmatmul.mubr.bf16.gmra.mxu0 %v1453
        %v1530 = vpop.f32.mrf.mxu0
        %v1531 = vadd.f32 0.0, %v1530
        %v1532 = vpop.f32.mrf.mxu0
        %v1533 = vpop.f32.mrf.mxu0
        %v1534 = vadd.f32 0.0, %v1533
        %v1535 = vpop.f32.mrf.mxu0
        %1536 = vmatprep.mubr.bf16.mxu0 0
        %1537 = vmatmul.mubr.bf16.gmra.mxu0 %v1454
        %v1538 = vpop.f32.mrf.mxu0
        %v1539 = vadd.f32 0.0, %v1538
        %v1540 = vpop.f32.mrf.mxu0
        %v1541 = vpop.f32.mrf.mxu0
        %v1542 = vadd.f32 0.0, %v1541
        %v1543 = vpop.f32.mrf.mxu0
        %1544 = vmatprep.mubr.bf16.mxu0 0
        %1545 = vmatmul.mubr.bf16.gmra.mxu0 %v1455
        %v1546 = vpop.f32.mrf.mxu0
        %v1547 = vadd.f32 0.0, %v1546
        %v1548 = vpop.f32.mrf.mxu0
        %v1549 = vpop.f32.mrf.mxu0
        %v1550 = vadd.f32 0.0, %v1549
        %v1551 = vpop.f32.mrf.mxu0
        %1552 = vdwg.mxu0
        %1553 = vst.msk [vmem:[#allocation2] sm:$0xff] %vm1158, %v1491
        %1554 = vst.msk [vmem:[#allocation2 + $0x8] sm:$0xff] %vm1158, %v1494
        %1555 = vst.msk [vmem:[#allocation2 + $0x10] sm:$0xff] %vm1158, %v1499
        %1556 = vst.msk [vmem:[#allocation2 + $0x18] sm:$0xff] %vm1158, %v1502
        %1557 = vst.msk [vmem:[#allocation2 + $0x20] sm:$0xff] %vm1158, %v1507
        %1558 = vst.msk [vmem:[#allocation2 + $0x28] sm:$0xff] %vm1158, %v1510
        %1559 = vst.msk [vmem:[#allocation2 + $0x30] sm:$0xff] %vm1158, %v1515
        %1560 = vst.msk [vmem:[#allocation2 + $0x38] sm:$0xff] %vm1158, %v1518
        %1561 = vst.msk [vmem:[#allocation2 + $0x40] sm:$0xff] %vm1158, %v1523
        %1562 = vst.msk [vmem:[#allocation2 + $0x48] sm:$0xff] %vm1158, %v1526
        %1563 = vst.msk [vmem:[#allocation2 + $0x50] sm:$0xff] %vm1158, %v1531
        %1564 = vst.msk [vmem:[#allocation2 + $0x58] sm:$0xff] %vm1158, %v1534
        %1565 = vst.msk [vmem:[#allocation2 + $0x60] sm:$0xff] %vm1158, %v1539
        %1566 = vst.msk [vmem:[#allocation2 + $0x68] sm:$0xff] %vm1158, %v1542
        %1567 = vst.msk [vmem:[#allocation2 + $0x70] sm:$0xff] %vm1158, %v1547
        %1568 = vst.msk [vmem:[#allocation2 + $0x78] sm:$0xff] %vm1158, %v1550
        %s1569 = scalar_lea.vmem %s468, 128 [#allocation3]
        %v1570 = vld [vmem:[%s1569] sm:$0xff]
        %v1571 = vld [vmem:[%s1569 + $0x8] sm:$0xff]
        %v1572 = vld [vmem:[%s1569 + $0x10] sm:$0xff]
        %v1573 = vld [vmem:[%s1569 + $0x18] sm:$0xff]
        %v1574 = vld [vmem:[%s1569 + $0x20] sm:$0xff]
        %v1575 = vld [vmem:[%s1569 + $0x28] sm:$0xff]
        %v1576 = vld [vmem:[%s1569 + $0x30] sm:$0xff]
        %v1577 = vld [vmem:[%s1569 + $0x38] sm:$0xff]
        %v1578 = vld [vmem:[%s1569 + $0x40] sm:$0xff]
        %v1579 = vld [vmem:[%s1569 + $0x48] sm:$0xff]
        %v1580 = vld [vmem:[%s1569 + $0x50] sm:$0xff]
        %v1581 = vld [vmem:[%s1569 + $0x58] sm:$0xff]
        %v1582 = vld [vmem:[%s1569 + $0x60] sm:$0xff]
        %v1583 = vld [vmem:[%s1569 + $0x68] sm:$0xff]
        %v1584 = vld [vmem:[%s1569 + $0x70] sm:$0xff]
        %v1585 = vld [vmem:[%s1569 + $0x78] sm:$0xff]
        %1594 = vrot.lane.b32.xlu0 %v1118, 120
        %v1595 = vpop.permute.xlu0 %1594
        %1596 = vrot.lane.b32.xlu0 %v1119, 120
        %v1597 = vpop.permute.xlu0 %1596
        %1598 = vrot.lane.b32.xlu0 %v1120, 120
        %v1599 = vpop.permute.xlu0 %1598
        %1600 = vrot.lane.b32.xlu0 %v1121, 120
        %v1601 = vpop.permute.xlu0 %1600
        %1602 = vrot.lane.b32.xlu0 %v1122, 120
        %v1603 = vpop.permute.xlu0 %1602
        %1604 = vrot.lane.b32.xlu0 %v1123, 120
        %v1605 = vpop.permute.xlu0 %1604
        %1606 = vrot.lane.b32.xlu0 %v1124, 120
        %v1607 = vpop.permute.xlu0 %1606
        %1608 = vrot.lane.b32.xlu0 %v1125, 120
        %v1609 = vpop.permute.xlu0 %1608
        %1618 = vrot.lane.b32.xlu0 %v1126, 120
        %v1619 = vpop.permute.xlu0 %1618
        %1620 = vrot.lane.b32.xlu0 %v1127, 120
        %v1621 = vpop.permute.xlu0 %1620
        %1622 = vrot.lane.b32.xlu0 %v1128, 120
        %v1623 = vpop.permute.xlu0 %1622
        %1624 = vrot.lane.b32.xlu0 %v1129, 120
        %v1625 = vpop.permute.xlu0 %1624
        %1626 = vrot.lane.b32.xlu0 %v1130, 120
        %v1627 = vpop.permute.xlu0 %1626
        %1628 = vrot.lane.b32.xlu0 %v1131, 120
        %v1629 = vpop.permute.xlu0 %1628
        %1630 = vrot.lane.b32.xlu0 %v1132, 120
        %v1631 = vpop.permute.xlu0 %1630
        %1632 = vrot.lane.b32.xlu0 %v1133, 120
        %v1633 = vpop.permute.xlu0 %1632
        %v1635 = vsel %vm1158, %v1595, 0
        %v1638 = vsel %vm1158, %v1597, 0
        %v1641 = vsel %vm1158, %v1599, 0
        %v1644 = vsel %vm1158, %v1601, 0
        %v1647 = vsel %vm1158, %v1603, 0
        %v1650 = vsel %vm1158, %v1605, 0
        %v1653 = vsel %vm1158, %v1607, 0
        %v1656 = vsel %vm1158, %v1609, 0
        %v1659 = vsel %vm1158, %v1619, 0
        %v1662 = vsel %vm1158, %v1621, 0
        %v1665 = vsel %vm1158, %v1623, 0
        %v1668 = vsel %vm1158, %v1625, 0
        %v1671 = vsel %vm1158, %v1627, 0
        %v1674 = vsel %vm1158, %v1629, 0
        %v1677 = vsel %vm1158, %v1631, 0
        %v1680 = vsel %vm1158, %v1633, 0
        %1682 = vmatprep.subr.bf16.mxu0 0
        %1683 = vmatpush1.bf16.xpose.msra.mxu0 %v1680
        %1684 = vmatprep.subr.bf16.mxu0 0
        %1685 = vmatpush1.bf16.xpose.msra.mxu0 %v1677
        %1686 = vmatprep.subr.bf16.mxu0 0
        %1687 = vmatpush1.bf16.xpose.msra.mxu0 %v1674
        %1688 = vmatprep.subr.bf16.mxu0 0
        %1689 = vmatpush1.bf16.xpose.msra.mxu0 %v1671
        %1690 = vmatprep.subr.bf16.mxu0 0
        %1691 = vmatpush1.bf16.xpose.msra.mxu0 %v1668
        %1692 = vmatprep.subr.bf16.mxu0 0
        %1693 = vmatpush1.bf16.xpose.msra.mxu0 %v1665
        %1694 = vmatprep.subr.bf16.mxu0 0
        %1695 = vmatpush1.bf16.xpose.msra.mxu0 %v1662
        %1696 = vmatprep.subr.bf16.mxu0 0
        %1697 = vmatpush1.bf16.xpose.msra.mxu0 %v1659
        %1698 = vmatprep.subr.bf16.mxu0 0
        %1699 = vmatpush2.bf16.xpose.msra.mxu0 0
        %1700 = vmatprep.subr.bf16.mxu0 0
        %1701 = vmatpush2.bf16.xpose.msra.mxu0 0
        %1702 = vmatprep.subr.bf16.mxu0 0
        %1703 = vmatpush2.bf16.xpose.msra.mxu0 0
        %1704 = vmatprep.subr.bf16.mxu0 0
        %1705 = vmatpush2.bf16.xpose.msra.mxu0 0
        %1706 = vmatprep.subr.bf16.mxu0 0
        %1707 = vmatpush2.bf16.xpose.msra.mxu0 0
        %1708 = vmatprep.subr.bf16.mxu0 0
        %1709 = vmatpush2.bf16.xpose.msra.mxu0 0
        %1710 = vmatprep.subr.bf16.mxu0 0
        %1711 = vmatpush2.bf16.xpose.msra.mxu0 0
        %1712 = vmatprep.subr.bf16.mxu0 0
        %1713 = vmatpush2.bf16.xpose.msra.mxu0 0
        %1714 = vmatprep.mubr.bf16.mxu0 0
        %1715 = vmatmul.mubr.bf16.gmra.mxu0 %v1635
        %v1716 = vpop.f32.mrf.mxu0
        %v1717 = vadd.f32 %v1570, %v1716
        %v1718 = vpop.f32.mrf.mxu0
        %v1719 = vpop.f32.mrf.mxu0
        %v1720 = vadd.f32 %v1571, %v1719
        %v1721 = vpop.f32.mrf.mxu0
        %1722 = vmatprep.mubr.bf16.mxu0 0
        %1723 = vmatmul.mubr.bf16.gmra.mxu0 %v1638
        %v1724 = vpop.f32.mrf.mxu0
        %v1725 = vadd.f32 %v1572, %v1724
        %v1726 = vpop.f32.mrf.mxu0
        %v1727 = vpop.f32.mrf.mxu0
        %v1728 = vadd.f32 %v1573, %v1727
        %v1729 = vpop.f32.mrf.mxu0
        %1730 = vmatprep.mubr.bf16.mxu0 0
        %1731 = vmatmul.mubr.bf16.gmra.mxu0 %v1641
        %v1732 = vpop.f32.mrf.mxu0
        %v1733 = vadd.f32 %v1574, %v1732
        %v1734 = vpop.f32.mrf.mxu0
        %v1735 = vpop.f32.mrf.mxu0
        %v1736 = vadd.f32 %v1575, %v1735
        %v1737 = vpop.f32.mrf.mxu0
        %1738 = vmatprep.mubr.bf16.mxu0 0
        %1739 = vmatmul.mubr.bf16.gmra.mxu0 %v1644
        %v1740 = vpop.f32.mrf.mxu0
        %v1741 = vadd.f32 %v1576, %v1740
        %v1742 = vpop.f32.mrf.mxu0
        %v1743 = vpop.f32.mrf.mxu0
        %v1744 = vadd.f32 %v1577, %v1743
        %v1745 = vpop.f32.mrf.mxu0
        %1746 = vmatprep.mubr.bf16.mxu0 0
        %1747 = vmatmul.mubr.bf16.gmra.mxu0 %v1647
        %v1748 = vpop.f32.mrf.mxu0
        %v1749 = vadd.f32 %v1578, %v1748
        %v1750 = vpop.f32.mrf.mxu0
        %v1751 = vpop.f32.mrf.mxu0
        %v1752 = vadd.f32 %v1579, %v1751
        %v1753 = vpop.f32.mrf.mxu0
        %1754 = vmatprep.mubr.bf16.mxu0 0
        %1755 = vmatmul.mubr.bf16.gmra.mxu0 %v1650
        %v1756 = vpop.f32.mrf.mxu0
        %v1757 = vadd.f32 %v1580, %v1756
        %v1758 = vpop.f32.mrf.mxu0
        %v1759 = vpop.f32.mrf.mxu0
        %v1760 = vadd.f32 %v1581, %v1759
        %v1761 = vpop.f32.mrf.mxu0
        %1762 = vmatprep.mubr.bf16.mxu0 0
        %1763 = vmatmul.mubr.bf16.gmra.mxu0 %v1653
        %v1764 = vpop.f32.mrf.mxu0
        %v1765 = vadd.f32 %v1582, %v1764
        %v1766 = vpop.f32.mrf.mxu0
        %v1767 = vpop.f32.mrf.mxu0
        %v1768 = vadd.f32 %v1583, %v1767
        %v1769 = vpop.f32.mrf.mxu0
        %1770 = vmatprep.mubr.bf16.mxu0 0
        %1771 = vmatmul.mubr.bf16.gmra.mxu0 %v1656
        %v1772 = vpop.f32.mrf.mxu0
        %v1773 = vadd.f32 %v1584, %v1772
        %v1774 = vpop.f32.mrf.mxu0
        %v1775 = vpop.f32.mrf.mxu0
        %v1776 = vadd.f32 %v1585, %v1775
        %v1777 = vpop.f32.mrf.mxu0
        %1778 = vdwg.mxu0
        %1779 = vmax.xlane.f32.xlu0 %v1717
        %v1780 = vpop.xlane.xlu0 %1779
        %1781 = vmax.xlane.f32.xlu0 %v1720
        %v1782 = vpop.xlane.xlu0 %1781
        %1783 = vmax.xlane.f32.xlu0 %v1725
        %v1784 = vpop.xlane.xlu0 %1783
        %1785 = vmax.xlane.f32.xlu0 %v1728
        %v1786 = vpop.xlane.xlu0 %1785
        %1787 = vmax.xlane.f32.xlu0 %v1733
        %v1788 = vpop.xlane.xlu0 %1787
        %1789 = vmax.xlane.f32.xlu0 %v1736
        %v1790 = vpop.xlane.xlu0 %1789
        %1791 = vmax.xlane.f32.xlu0 %v1741
        %v1792 = vpop.xlane.xlu0 %1791
        %1793 = vmax.xlane.f32.xlu0 %v1744
        %v1794 = vpop.xlane.xlu0 %1793
        %1795 = vmax.xlane.f32.xlu0 %v1749
        %v1796 = vpop.xlane.xlu0 %1795
        %1797 = vmax.xlane.f32.xlu0 %v1752
        %v1798 = vpop.xlane.xlu0 %1797
        %1799 = vmax.xlane.f32.xlu0 %v1757
        %v1800 = vpop.xlane.xlu0 %1799
        %1801 = vmax.xlane.f32.xlu0 %v1760
        %v1802 = vpop.xlane.xlu0 %1801
        %1803 = vmax.xlane.f32.xlu0 %v1765
        %v1804 = vpop.xlane.xlu0 %1803
        %1805 = vmax.xlane.f32.xlu0 %v1768
        %v1806 = vpop.xlane.xlu0 %1805
        %1807 = vmax.xlane.f32.xlu0 %v1773
        %v1808 = vpop.xlane.xlu0 %1807
        %1809 = vmax.xlane.f32.xlu0 %v1776
        %v1810 = vpop.xlane.xlu0 %1809
        %v1811 = vsub.f32 %v1717, %v1780
        %v1812 = vsub.f32 %v1720, %v1782
        %v1813 = vsub.f32 %v1725, %v1784
        %v1814 = vsub.f32 %v1728, %v1786
        %v1815 = vsub.f32 %v1733, %v1788
        %v1816 = vsub.f32 %v1736, %v1790
        %v1817 = vsub.f32 %v1741, %v1792
        %v1818 = vsub.f32 %v1744, %v1794
        %v1819 = vsub.f32 %v1749, %v1796
        %v1820 = vsub.f32 %v1752, %v1798
        %v1821 = vsub.f32 %v1757, %v1800
        %v1822 = vsub.f32 %v1760, %v1802
        %v1823 = vsub.f32 %v1765, %v1804
        %v1824 = vsub.f32 %v1768, %v1806
        %v1825 = vsub.f32 %v1773, %v1808
        %v1826 = vsub.f32 %v1776, %v1810
        %v1827 = vmul.f32 %v1811, 1.442695
        %v1828 = vpow.pop %v1827
        %v1829 = vmul.f32 %v1812, 1.442695
        %v1830 = vpow.pop %v1829
        %v1831 = vmul.f32 %v1813, 1.442695
        %v1832 = vpow.pop %v1831
        %v1833 = vmul.f32 %v1814, 1.442695
        %v1834 = vpow.pop %v1833
        %v1835 = vmul.f32 %v1815, 1.442695
        %v1836 = vpow.pop %v1835
        %v1837 = vmul.f32 %v1816, 1.442695
        %v1838 = vpow.pop %v1837
        %v1839 = vmul.f32 %v1817, 1.442695
        %v1840 = vpow.pop %v1839
        %v1841 = vmul.f32 %v1818, 1.442695
        %v1842 = vpow.pop %v1841
        %v1843 = vmul.f32 %v1819, 1.442695
        %v1844 = vpow.pop %v1843
        %v1845 = vmul.f32 %v1820, 1.442695
        %v1846 = vpow.pop %v1845
        %v1847 = vmul.f32 %v1821, 1.442695
        %v1848 = vpow.pop %v1847
        %v1849 = vmul.f32 %v1822, 1.442695
        %v1850 = vpow.pop %v1849
        %v1851 = vmul.f32 %v1823, 1.442695
        %v1852 = vpow.pop %v1851
        %v1853 = vmul.f32 %v1824, 1.442695
        %v1854 = vpow.pop %v1853
        %v1855 = vmul.f32 %v1825, 1.442695
        %v1856 = vpow.pop %v1855
        %v1857 = vmul.f32 %v1826, 1.442695
        %v1858 = vpow.pop %v1857
        %1859 = vadd.xlane.f32.xlu0 %v1828
        %v1860 = vpop.xlane.xlu0 %1859
        %1861 = vadd.xlane.f32.xlu0 %v1830
        %v1862 = vpop.xlane.xlu0 %1861
        %1863 = vadd.xlane.f32.xlu0 %v1832
        %v1864 = vpop.xlane.xlu0 %1863
        %1865 = vadd.xlane.f32.xlu0 %v1834
        %v1866 = vpop.xlane.xlu0 %1865
        %1867 = vadd.xlane.f32.xlu0 %v1836
        %v1868 = vpop.xlane.xlu0 %1867
        %1869 = vadd.xlane.f32.xlu0 %v1838
        %v1870 = vpop.xlane.xlu0 %1869
        %1871 = vadd.xlane.f32.xlu0 %v1840
        %v1872 = vpop.xlane.xlu0 %1871
        %1873 = vadd.xlane.f32.xlu0 %v1842
        %v1874 = vpop.xlane.xlu0 %1873
        %1875 = vadd.xlane.f32.xlu0 %v1844
        %v1876 = vpop.xlane.xlu0 %1875
        %1877 = vadd.xlane.f32.xlu0 %v1846
        %v1878 = vpop.xlane.xlu0 %1877
        %1879 = vadd.xlane.f32.xlu0 %v1848
        %v1880 = vpop.xlane.xlu0 %1879
        %1881 = vadd.xlane.f32.xlu0 %v1850
        %v1882 = vpop.xlane.xlu0 %1881
        %1883 = vadd.xlane.f32.xlu0 %v1852
        %v1884 = vpop.xlane.xlu0 %1883
        %1885 = vadd.xlane.f32.xlu0 %v1854
        %v1886 = vpop.xlane.xlu0 %1885
        %1887 = vadd.xlane.f32.xlu0 %v1856
        %v1888 = vpop.xlane.xlu0 %1887
        %1889 = vadd.xlane.f32.xlu0 %v1858
        %v1890 = vpop.xlane.xlu0 %1889
        %v1891 = vrcp.pop %v1860
        %v1892 = vrcp.pop %v1862
        %v1893 = vrcp.pop %v1864
        %v1894 = vrcp.pop %v1866
        %v1895 = vrcp.pop %v1868
        %v1896 = vrcp.pop %v1870
        %v1897 = vrcp.pop %v1872
        %v1898 = vrcp.pop %v1874
        %v1899 = vrcp.pop %v1876
        %v1900 = vrcp.pop %v1878
        %v1901 = vrcp.pop %v1880
        %v1902 = vrcp.pop %v1882
        %v1903 = vrcp.pop %v1884
        %v1904 = vrcp.pop %v1886
        %v1905 = vrcp.pop %v1888
        %v1906 = vrcp.pop %v1890
        %v1907 = vmul.f32 %v1828, %v1891
        %v1908 = vmul.f32 %v1830, %v1892
        %v1909 = vmul.f32 %v1832, %v1893
        %v1910 = vmul.f32 %v1834, %v1894
        %v1911 = vmul.f32 %v1836, %v1895
        %v1912 = vmul.f32 %v1838, %v1896
        %v1913 = vmul.f32 %v1840, %v1897
        %v1914 = vmul.f32 %v1842, %v1898
        %v1915 = vmul.f32 %v1844, %v1899
        %v1916 = vmul.f32 %v1846, %v1900
        %v1917 = vmul.f32 %v1848, %v1901
        %v1918 = vmul.f32 %v1850, %v1902
        %v1919 = vmul.f32 %v1852, %v1903
        %v1920 = vmul.f32 %v1854, %v1904
        %v1921 = vmul.f32 %v1856, %v1905
        %v1922 = vmul.f32 %v1858, %v1906
        %v1923 = vpack.c.bf16 %v1908, %v1907
        %v1924 = vpack.c.bf16 %v1910, %v1909
        %v1925 = vpack.c.bf16 %v1912, %v1911
        %v1926 = vpack.c.bf16 %v1914, %v1913
        %v1927 = vpack.c.bf16 %v1916, %v1915
        %v1928 = vpack.c.bf16 %v1918, %v1917
        %v1929 = vpack.c.bf16 %v1920, %v1919
        %v1930 = vpack.c.bf16 %v1922, %v1921
        %1939 = vrot.lane.b32.xlu0 %v1134, 120
        %v1940 = vpop.permute.xlu0 %1939
        %1941 = vrot.lane.b32.xlu0 %v1135, 120
        %v1942 = vpop.permute.xlu0 %1941
        %1943 = vrot.lane.b32.xlu0 %v1136, 120
        %v1944 = vpop.permute.xlu0 %1943
        %1945 = vrot.lane.b32.xlu0 %v1137, 120
        %v1946 = vpop.permute.xlu0 %1945
        %1947 = vrot.lane.b32.xlu0 %v1138, 120
        %v1948 = vpop.permute.xlu0 %1947
        %1949 = vrot.lane.b32.xlu0 %v1139, 120
        %v1950 = vpop.permute.xlu0 %1949
        %1951 = vrot.lane.b32.xlu0 %v1140, 120
        %v1952 = vpop.permute.xlu0 %1951
        %1953 = vrot.lane.b32.xlu0 %v1141, 120
        %v1954 = vpop.permute.xlu0 %1953
        %1963 = vmatprep.subr.bf16.mxu0 0
        %1964 = vmatpush1.bf16.msra.mxu0 %v1954
        %1965 = vmatprep.subr.bf16.mxu0 0
        %1966 = vmatpush1.bf16.msra.mxu0 %v1952
        %1967 = vmatprep.subr.bf16.mxu0 0
        %1968 = vmatpush1.bf16.msra.mxu0 %v1950
        %1969 = vmatprep.subr.bf16.mxu0 0
        %1970 = vmatpush1.bf16.msra.mxu0 %v1948
        %1971 = vmatprep.subr.bf16.mxu0 0
        %1972 = vmatpush1.bf16.msra.mxu0 %v1946
        %1973 = vmatprep.subr.bf16.mxu0 0
        %1974 = vmatpush1.bf16.msra.mxu0 %v1944
        %1975 = vmatprep.subr.bf16.mxu0 0
        %1976 = vmatpush1.bf16.msra.mxu0 %v1942
        %1977 = vmatprep.subr.bf16.mxu0 0
        %1978 = vmatpush1.bf16.msra.mxu0 %v1940
        %1979 = vmatprep.subr.bf16.mxu0 0
        %1980 = vmatpush2.bf16.msra.mxu0 0
        %1981 = vmatprep.subr.bf16.mxu0 0
        %1982 = vmatpush2.bf16.msra.mxu0 0
        %1983 = vmatprep.subr.bf16.mxu0 0
        %1984 = vmatpush2.bf16.msra.mxu0 0
        %1985 = vmatprep.subr.bf16.mxu0 0
        %1986 = vmatpush2.bf16.msra.mxu0 0
        %1987 = vmatprep.subr.bf16.mxu0 0
        %1988 = vmatpush2.bf16.msra.mxu0 0
        %1989 = vmatprep.subr.bf16.mxu0 0
        %1990 = vmatpush2.bf16.msra.mxu0 0
        %1991 = vmatprep.subr.bf16.mxu0 0
        %1992 = vmatpush2.bf16.msra.mxu0 0
        %1993 = vmatprep.subr.bf16.mxu0 0
        %1994 = vmatpush2.bf16.msra.mxu0 0
        %1995 = vmatprep.mubr.bf16.mxu0 0
        %1996 = vmatmul.mubr.bf16.gmra.mxu0 %v1923
        %v1997 = vpop.f32.mrf.mxu0
        %v1998 = vadd.f32 0.0, %v1997
        %v1999 = vpop.f32.mrf.mxu0
        %v2000 = vpop.f32.mrf.mxu0
        %v2001 = vadd.f32 0.0, %v2000
        %v2002 = vpop.f32.mrf.mxu0
        %2003 = vmatprep.mubr.bf16.mxu0 0
        %2004 = vmatmul.mubr.bf16.gmra.mxu0 %v1924
        %v2005 = vpop.f32.mrf.mxu0
        %v2006 = vadd.f32 0.0, %v2005
        %v2007 = vpop.f32.mrf.mxu0
        %v2008 = vpop.f32.mrf.mxu0
        %v2009 = vadd.f32 0.0, %v2008
        %v2010 = vpop.f32.mrf.mxu0
        %2011 = vmatprep.mubr.bf16.mxu0 0
        %2012 = vmatmul.mubr.bf16.gmra.mxu0 %v1925
        %v2013 = vpop.f32.mrf.mxu0
        %v2014 = vadd.f32 0.0, %v2013
        %v2015 = vpop.f32.mrf.mxu0
        %v2016 = vpop.f32.mrf.mxu0
        %v2017 = vadd.f32 0.0, %v2016
        %v2018 = vpop.f32.mrf.mxu0
        %2019 = vmatprep.mubr.bf16.mxu0 0
        %2020 = vmatmul.mubr.bf16.gmra.mxu0 %v1926
        %v2021 = vpop.f32.mrf.mxu0
        %v2022 = vadd.f32 0.0, %v2021
        %v2023 = vpop.f32.mrf.mxu0
        %v2024 = vpop.f32.mrf.mxu0
        %v2025 = vadd.f32 0.0, %v2024
        %v2026 = vpop.f32.mrf.mxu0
        %2027 = vmatprep.mubr.bf16.mxu0 0
        %2028 = vmatmul.mubr.bf16.gmra.mxu0 %v1927
        %v2029 = vpop.f32.mrf.mxu0
        %v2030 = vadd.f32 0.0, %v2029
        %v2031 = vpop.f32.mrf.mxu0
        %v2032 = vpop.f32.mrf.mxu0
        %v2033 = vadd.f32 0.0, %v2032
        %v2034 = vpop.f32.mrf.mxu0
        %2035 = vmatprep.mubr.bf16.mxu0 0
        %2036 = vmatmul.mubr.bf16.gmra.mxu0 %v1928
        %v2037 = vpop.f32.mrf.mxu0
        %v2038 = vadd.f32 0.0, %v2037
        %v2039 = vpop.f32.mrf.mxu0
        %v2040 = vpop.f32.mrf.mxu0
        %v2041 = vadd.f32 0.0, %v2040
        %v2042 = vpop.f32.mrf.mxu0
        %2043 = vmatprep.mubr.bf16.mxu0 0
        %2044 = vmatmul.mubr.bf16.gmra.mxu0 %v1929
        %v2045 = vpop.f32.mrf.mxu0
        %v2046 = vadd.f32 0.0, %v2045
        %v2047 = vpop.f32.mrf.mxu0
        %v2048 = vpop.f32.mrf.mxu0
        %v2049 = vadd.f32 0.0, %v2048
        %v2050 = vpop.f32.mrf.mxu0
        %2051 = vmatprep.mubr.bf16.mxu0 0
        %2052 = vmatmul.mubr.bf16.gmra.mxu0 %v1930
        %v2053 = vpop.f32.mrf.mxu0
        %v2054 = vadd.f32 0.0, %v2053
        %v2055 = vpop.f32.mrf.mxu0
        %v2056 = vpop.f32.mrf.mxu0
        %v2057 = vadd.f32 0.0, %v2056
        %v2058 = vpop.f32.mrf.mxu0
        %2059 = vdwg.mxu0
        %2076 = vrot.lane.b32.xlu0 %v1998, 8
        %v2077 = vpop.permute.xlu0 %2076
        %2078 = vrot.lane.b32.xlu0 %v2001, 8
        %v2079 = vpop.permute.xlu0 %2078
        %2080 = vrot.lane.b32.xlu0 %v2006, 8
        %v2081 = vpop.permute.xlu0 %2080
        %2082 = vrot.lane.b32.xlu0 %v2009, 8
        %v2083 = vpop.permute.xlu0 %2082
        %2084 = vrot.lane.b32.xlu0 %v2014, 8
        %v2085 = vpop.permute.xlu0 %2084
        %2086 = vrot.lane.b32.xlu0 %v2017, 8
        %v2087 = vpop.permute.xlu0 %2086
        %2088 = vrot.lane.b32.xlu0 %v2022, 8
        %v2089 = vpop.permute.xlu0 %2088
        %2090 = vrot.lane.b32.xlu0 %v2025, 8
        %v2091 = vpop.permute.xlu0 %2090
        %2092 = vrot.lane.b32.xlu0 %v2030, 8
        %v2093 = vpop.permute.xlu0 %2092
        %2094 = vrot.lane.b32.xlu0 %v2033, 8
        %v2095 = vpop.permute.xlu0 %2094
        %2096 = vrot.lane.b32.xlu0 %v2038, 8
        %v2097 = vpop.permute.xlu0 %2096
        %2098 = vrot.lane.b32.xlu0 %v2041, 8
        %v2099 = vpop.permute.xlu0 %2098
        %2100 = vrot.lane.b32.xlu0 %v2046, 8
        %v2101 = vpop.permute.xlu0 %2100
        %2102 = vrot.lane.b32.xlu0 %v2049, 8
        %v2103 = vpop.permute.xlu0 %2102
        %2104 = vrot.lane.b32.xlu0 %v2054, 8
        %v2105 = vpop.permute.xlu0 %2104
        %2106 = vrot.lane.b32.xlu0 %v2057, 8
        %v2107 = vpop.permute.xlu0 %2106
        %vm2124 = vcmask 130112
        %2125 = vst.msk [vmem:[#allocation2] sm:$0xff] %vm2124, %v2077
        %2126 = vst.msk [vmem:[#allocation2 + $0x8] sm:$0xff] %vm2124, %v2079
        %2127 = vst.msk [vmem:[#allocation2 + $0x10] sm:$0xff] %vm2124, %v2081
        %2128 = vst.msk [vmem:[#allocation2 + $0x18] sm:$0xff] %vm2124, %v2083
        %2129 = vst.msk [vmem:[#allocation2 + $0x20] sm:$0xff] %vm2124, %v2085
        %2130 = vst.msk [vmem:[#allocation2 + $0x28] sm:$0xff] %vm2124, %v2087
        %2131 = vst.msk [vmem:[#allocation2 + $0x30] sm:$0xff] %vm2124, %v2089
        %2132 = vst.msk [vmem:[#allocation2 + $0x38] sm:$0xff] %vm2124, %v2091
        %2133 = vst.msk [vmem:[#allocation2 + $0x40] sm:$0xff] %vm2124, %v2093
        %2134 = vst.msk [vmem:[#allocation2 + $0x48] sm:$0xff] %vm2124, %v2095
        %2135 = vst.msk [vmem:[#allocation2 + $0x50] sm:$0xff] %vm2124, %v2097
        %2136 = vst.msk [vmem:[#allocation2 + $0x58] sm:$0xff] %vm2124, %v2099
        %2137 = vst.msk [vmem:[#allocation2 + $0x60] sm:$0xff] %vm2124, %v2101
        %2138 = vst.msk [vmem:[#allocation2 + $0x68] sm:$0xff] %vm2124, %v2103
        %2139 = vst.msk [vmem:[#allocation2 + $0x70] sm:$0xff] %vm2124, %v2105
        %2140 = vst.msk [vmem:[#allocation2 + $0x78] sm:$0xff] %vm2124, %v2107
        %s2141 = scalar_lea.vmem %s468, 256 [#allocation3]
        %v2142 = vld [vmem:[%s2141] sm:$0xff]
        %v2143 = vld [vmem:[%s2141 + $0x8] sm:$0xff]
        %v2144 = vld [vmem:[%s2141 + $0x10] sm:$0xff]
        %v2145 = vld [vmem:[%s2141 + $0x18] sm:$0xff]
        %v2146 = vld [vmem:[%s2141 + $0x20] sm:$0xff]
        %v2147 = vld [vmem:[%s2141 + $0x28] sm:$0xff]
        %v2148 = vld [vmem:[%s2141 + $0x30] sm:$0xff]
        %v2149 = vld [vmem:[%s2141 + $0x38] sm:$0xff]
        %v2150 = vld [vmem:[%s2141 + $0x40] sm:$0xff]
        %v2151 = vld [vmem:[%s2141 + $0x48] sm:$0xff]
        %v2152 = vld [vmem:[%s2141 + $0x50] sm:$0xff]
        %v2153 = vld [vmem:[%s2141 + $0x58] sm:$0xff]
        %v2154 = vld [vmem:[%s2141 + $0x60] sm:$0xff]
        %v2155 = vld [vmem:[%s2141 + $0x68] sm:$0xff]
        %v2156 = vld [vmem:[%s2141 + $0x70] sm:$0xff]
        %v2157 = vld [vmem:[%s2141 + $0x78] sm:$0xff]
        %2158 = vrot.lane.b32.xlu0 %v1118, 112
        %v2159 = vpop.permute.xlu0 %2158
        %2160 = vrot.lane.b32.xlu0 %v1119, 112
        %v2161 = vpop.permute.xlu0 %2160
        %2162 = vrot.lane.b32.xlu0 %v1120, 112
        %v2163 = vpop.permute.xlu0 %2162
        %2164 = vrot.lane.b32.xlu0 %v1121, 112
        %v2165 = vpop.permute.xlu0 %2164
        %2166 = vrot.lane.b32.xlu0 %v1122, 112
        %v2167 = vpop.permute.xlu0 %2166
        %2168 = vrot.lane.b32.xlu0 %v1123, 112
        %v2169 = vpop.permute.xlu0 %2168
        %2170 = vrot.lane.b32.xlu0 %v1124, 112
        %v2171 = vpop.permute.xlu0 %2170
        %2172 = vrot.lane.b32.xlu0 %v1125, 112
        %v2173 = vpop.permute.xlu0 %2172
        %2174 = vrot.lane.b32.xlu0 %v1126, 112
        %v2175 = vpop.permute.xlu0 %2174
        %2176 = vrot.lane.b32.xlu0 %v1127, 112
        %v2177 = vpop.permute.xlu0 %2176
        %2178 = vrot.lane.b32.xlu0 %v1128, 112
        %v2179 = vpop.permute.xlu0 %2178
        %2180 = vrot.lane.b32.xlu0 %v1129, 112
        %v2181 = vpop.permute.xlu0 %2180
        %2182 = vrot.lane.b32.xlu0 %v1130, 112
        %v2183 = vpop.permute.xlu0 %2182
        %2184 = vrot.lane.b32.xlu0 %v1131, 112
        %v2185 = vpop.permute.xlu0 %2184
        %2186 = vrot.lane.b32.xlu0 %v1132, 112
        %v2187 = vpop.permute.xlu0 %2186
        %2188 = vrot.lane.b32.xlu0 %v1133, 112
        %v2189 = vpop.permute.xlu0 %2188
        %v2191 = vsel %vm1158, %v2159, 0
        %v2194 = vsel %vm1158, %v2161, 0
        %v2197 = vsel %vm1158, %v2163, 0
        %v2200 = vsel %vm1158, %v2165, 0
        %v2203 = vsel %vm1158, %v2167, 0
        %v2206 = vsel %vm1158, %v2169, 0
        %v2209 = vsel %vm1158, %v2171, 0
        %v2212 = vsel %vm1158, %v2173, 0
        %v2215 = vsel %vm1158, %v2175, 0
        %v2218 = vsel %vm1158, %v2177, 0
        %v2221 = vsel %vm1158, %v2179, 0
        %v2224 = vsel %vm1158, %v2181, 0
        %v2227 = vsel %vm1158, %v2183, 0
        %v2230 = vsel %vm1158, %v2185, 0
        %v2233 = vsel %vm1158, %v2187, 0
        %v2236 = vsel %vm1158, %v2189, 0
        %2238 = vmatprep.subr.bf16.mxu0 0
        %2239 = vmatpush1.bf16.xpose.msra.mxu0 %v2236
        %2240 = vmatprep.subr.bf16.mxu0 0
        %2241 = vmatpush1.bf16.xpose.msra.mxu0 %v2233
        %2242 = vmatprep.subr.bf16.mxu0 0
        %2243 = vmatpush1.bf16.xpose.msra.mxu0 %v2230
        %2244 = vmatprep.subr.bf16.mxu0 0
        %2245 = vmatpush1.bf16.xpose.msra.mxu0 %v2227
        %2246 = vmatprep.subr.bf16.mxu0 0
        %2247 = vmatpush1.bf16.xpose.msra.mxu0 %v2224
        %2248 = vmatprep.subr.bf16.mxu0 0
        %2249 = vmatpush1.bf16.xpose.msra.mxu0 %v2221
        %2250 = vmatprep.subr.bf16.mxu0 0
        %2251 = vmatpush1.bf16.xpose.msra.mxu0 %v2218
        %2252 = vmatprep.subr.bf16.mxu0 0
        %2253 = vmatpush1.bf16.xpose.msra.mxu0 %v2215
        %2254 = vmatprep.subr.bf16.mxu0 0
        %2255 = vmatpush2.bf16.xpose.msra.mxu0 0
        %2256 = vmatprep.subr.bf16.mxu0 0
        %2257 = vmatpush2.bf16.xpose.msra.mxu0 0
        %2258 = vmatprep.subr.bf16.mxu0 0
        %2259 = vmatpush2.bf16.xpose.msra.mxu0 0
        %2260 = vmatprep.subr.bf16.mxu0 0
        %2261 = vmatpush2.bf16.xpose.msra.mxu0 0
        %2262 = vmatprep.subr.bf16.mxu0 0
        %2263 = vmatpush2.bf16.xpose.msra.mxu0 0
        %2264 = vmatprep.subr.bf16.mxu0 0
        %2265 = vmatpush2.bf16.xpose.msra.mxu0 0
        %2266 = vmatprep.subr.bf16.mxu0 0
        %2267 = vmatpush2.bf16.xpose.msra.mxu0 0
        %2268 = vmatprep.subr.bf16.mxu0 0
        %2269 = vmatpush2.bf16.xpose.msra.mxu0 0
        %2270 = vmatprep.mubr.bf16.mxu0 0
        %2271 = vmatmul.mubr.bf16.gmra.mxu0 %v2191
        %v2272 = vpop.f32.mrf.mxu0
        %v2273 = vadd.f32 %v2142, %v2272
        %v2274 = vpop.f32.mrf.mxu0
        %v2275 = vpop.f32.mrf.mxu0
        %v2276 = vadd.f32 %v2143, %v2275
        %v2277 = vpop.f32.mrf.mxu0
        %2278 = vmatprep.mubr.bf16.mxu0 0
        %2279 = vmatmul.mubr.bf16.gmra.mxu0 %v2194
        %v2280 = vpop.f32.mrf.mxu0
        %v2281 = vadd.f32 %v2144, %v2280
        %v2282 = vpop.f32.mrf.mxu0
        %v2283 = vpop.f32.mrf.mxu0
        %v2284 = vadd.f32 %v2145, %v2283
        %v2285 = vpop.f32.mrf.mxu0
        %2286 = vmatprep.mubr.bf16.mxu0 0
        %2287 = vmatmul.mubr.bf16.gmra.mxu0 %v2197
        %v2288 = vpop.f32.mrf.mxu0
        %v2289 = vadd.f32 %v2146, %v2288
        %v2290 = vpop.f32.mrf.mxu0
        %v2291 = vpop.f32.mrf.mxu0
        %v2292 = vadd.f32 %v2147, %v2291
        %v2293 = vpop.f32.mrf.mxu0
        %2294 = vmatprep.mubr.bf16.mxu0 0
        %2295 = vmatmul.mubr.bf16.gmra.mxu0 %v2200
        %v2296 = vpop.f32.mrf.mxu0
        %v2297 = vadd.f32 %v2148, %v2296
        %v2298 = vpop.f32.mrf.mxu0
        %v2299 = vpop.f32.mrf.mxu0
        %v2300 = vadd.f32 %v2149, %v2299
        %v2301 = vpop.f32.mrf.mxu0
        %2302 = vmatprep.mubr.bf16.mxu0 0
        %2303 = vmatmul.mubr.bf16.gmra.mxu0 %v2203
        %v2304 = vpop.f32.mrf.mxu0
        %v2305 = vadd.f32 %v2150, %v2304
        %v2306 = vpop.f32.mrf.mxu0
        %v2307 = vpop.f32.mrf.mxu0
        %v2308 = vadd.f32 %v2151, %v2307
        %v2309 = vpop.f32.mrf.mxu0
        %2310 = vmatprep.mubr.bf16.mxu0 0
        %2311 = vmatmul.mubr.bf16.gmra.mxu0 %v2206
        %v2312 = vpop.f32.mrf.mxu0
        %v2313 = vadd.f32 %v2152, %v2312
        %v2314 = vpop.f32.mrf.mxu0
        %v2315 = vpop.f32.mrf.mxu0
        %v2316 = vadd.f32 %v2153, %v2315
        %v2317 = vpop.f32.mrf.mxu0
        %2318 = vmatprep.mubr.bf16.mxu0 0
        %2319 = vmatmul.mubr.bf16.gmra.mxu0 %v2209
        %v2320 = vpop.f32.mrf.mxu0
        %v2321 = vadd.f32 %v2154, %v2320
        %v2322 = vpop.f32.mrf.mxu0
        %v2323 = vpop.f32.mrf.mxu0
        %v2324 = vadd.f32 %v2155, %v2323
        %v2325 = vpop.f32.mrf.mxu0
        %2326 = vmatprep.mubr.bf16.mxu0 0
        %2327 = vmatmul.mubr.bf16.gmra.mxu0 %v2212
        %v2328 = vpop.f32.mrf.mxu0
        %v2329 = vadd.f32 %v2156, %v2328
        %v2330 = vpop.f32.mrf.mxu0
        %v2331 = vpop.f32.mrf.mxu0
        %v2332 = vadd.f32 %v2157, %v2331
        %v2333 = vpop.f32.mrf.mxu0
        %2334 = vdwg.mxu0
        %2335 = vmax.xlane.f32.xlu0 %v2273
        %v2336 = vpop.xlane.xlu0 %2335
        %2337 = vmax.xlane.f32.xlu0 %v2276
        %v2338 = vpop.xlane.xlu0 %2337
        %2339 = vmax.xlane.f32.xlu0 %v2281
        %v2340 = vpop.xlane.xlu0 %2339
        %2341 = vmax.xlane.f32.xlu0 %v2284
        %v2342 = vpop.xlane.xlu0 %2341
        %2343 = vmax.xlane.f32.xlu0 %v2289
        %v2344 = vpop.xlane.xlu0 %2343
        %2345 = vmax.xlane.f32.xlu0 %v2292
        %v2346 = vpop.xlane.xlu0 %2345
        %2347 = vmax.xlane.f32.xlu0 %v2297
        %v2348 = vpop.xlane.xlu0 %2347
        %2349 = vmax.xlane.f32.xlu0 %v2300
        %v2350 = vpop.xlane.xlu0 %2349
        %2351 = vmax.xlane.f32.xlu0 %v2305
        %v2352 = vpop.xlane.xlu0 %2351
        %2353 = vmax.xlane.f32.xlu0 %v2308
        %v2354 = vpop.xlane.xlu0 %2353
        %2355 = vmax.xlane.f32.xlu0 %v2313
        %v2356 = vpop.xlane.xlu0 %2355
        %2357 = vmax.xlane.f32.xlu0 %v2316
        %v2358 = vpop.xlane.xlu0 %2357
        %2359 = vmax.xlane.f32.xlu0 %v2321
        %v2360 = vpop.xlane.xlu0 %2359
        %2361 = vmax.xlane.f32.xlu0 %v2324
        %v2362 = vpop.xlane.xlu0 %2361
        %2363 = vmax.xlane.f32.xlu0 %v2329
        %v2364 = vpop.xlane.xlu0 %2363
        %2365 = vmax.xlane.f32.xlu0 %v2332
        %v2366 = vpop.xlane.xlu0 %2365
        %v2367 = vsub.f32 %v2273, %v2336
        %v2368 = vsub.f32 %v2276, %v2338
        %v2369 = vsub.f32 %v2281, %v2340
        %v2370 = vsub.f32 %v2284, %v2342
        %v2371 = vsub.f32 %v2289, %v2344
        %v2372 = vsub.f32 %v2292, %v2346
        %v2373 = vsub.f32 %v2297, %v2348
        %v2374 = vsub.f32 %v2300, %v2350
        %v2375 = vsub.f32 %v2305, %v2352
        %v2376 = vsub.f32 %v2308, %v2354
        %v2377 = vsub.f32 %v2313, %v2356
        %v2378 = vsub.f32 %v2316, %v2358
        %v2379 = vsub.f32 %v2321, %v2360
        %v2380 = vsub.f32 %v2324, %v2362
        %v2381 = vsub.f32 %v2329, %v2364
        %v2382 = vsub.f32 %v2332, %v2366
        %v2383 = vmul.f32 %v2367, 1.442695
        %v2384 = vpow.pop %v2383
        %v2385 = vmul.f32 %v2368, 1.442695
        %v2386 = vpow.pop %v2385
        %v2387 = vmul.f32 %v2369, 1.442695
        %v2388 = vpow.pop %v2387
        %v2389 = vmul.f32 %v2370, 1.442695
        %v2390 = vpow.pop %v2389
        %v2391 = vmul.f32 %v2371, 1.442695
        %v2392 = vpow.pop %v2391
        %v2393 = vmul.f32 %v2372, 1.442695
        %v2394 = vpow.pop %v2393
        %v2395 = vmul.f32 %v2373, 1.442695
        %v2396 = vpow.pop %v2395
        %v2397 = vmul.f32 %v2374, 1.442695
        %v2398 = vpow.pop %v2397
        %v2399 = vmul.f32 %v2375, 1.442695
        %v2400 = vpow.pop %v2399
        %v2401 = vmul.f32 %v2376, 1.442695
        %v2402 = vpow.pop %v2401
        %v2403 = vmul.f32 %v2377, 1.442695
        %v2404 = vpow.pop %v2403
        %v2405 = vmul.f32 %v2378, 1.442695
        %v2406 = vpow.pop %v2405
        %v2407 = vmul.f32 %v2379, 1.442695
        %v2408 = vpow.pop %v2407
        %v2409 = vmul.f32 %v2380, 1.442695
        %v2410 = vpow.pop %v2409
        %v2411 = vmul.f32 %v2381, 1.442695
        %v2412 = vpow.pop %v2411
        %v2413 = vmul.f32 %v2382, 1.442695
        %v2414 = vpow.pop %v2413
        %2415 = vadd.xlane.f32.xlu0 %v2384
        %v2416 = vpop.xlane.xlu0 %2415
        %2417 = vadd.xlane.f32.xlu0 %v2386
        %v2418 = vpop.xlane.xlu0 %2417
        %2419 = vadd.xlane.f32.xlu0 %v2388
        %v2420 = vpop.xlane.xlu0 %2419
        %2421 = vadd.xlane.f32.xlu0 %v2390
        %v2422 = vpop.xlane.xlu0 %2421
        %2423 = vadd.xlane.f32.xlu0 %v2392
        %v2424 = vpop.xlane.xlu0 %2423
        %2425 = vadd.xlane.f32.xlu0 %v2394
        %v2426 = vpop.xlane.xlu0 %2425
        %2427 = vadd.xlane.f32.xlu0 %v2396
        %v2428 = vpop.xlane.xlu0 %2427
        %2429 = vadd.xlane.f32.xlu0 %v2398
        %v2430 = vpop.xlane.xlu0 %2429
        %2431 = vadd.xlane.f32.xlu0 %v2400
        %v2432 = vpop.xlane.xlu0 %2431
        %2433 = vadd.xlane.f32.xlu0 %v2402
        %v2434 = vpop.xlane.xlu0 %2433
        %2435 = vadd.xlane.f32.xlu0 %v2404
        %v2436 = vpop.xlane.xlu0 %2435
        %2437 = vadd.xlane.f32.xlu0 %v2406
        %v2438 = vpop.xlane.xlu0 %2437
        %2439 = vadd.xlane.f32.xlu0 %v2408
        %v2440 = vpop.xlane.xlu0 %2439
        %2441 = vadd.xlane.f32.xlu0 %v2410
        %v2442 = vpop.xlane.xlu0 %2441
        %2443 = vadd.xlane.f32.xlu0 %v2412
        %v2444 = vpop.xlane.xlu0 %2443
        %2445 = vadd.xlane.f32.xlu0 %v2414
        %v2446 = vpop.xlane.xlu0 %2445
        %v2447 = vrcp.pop %v2416
        %v2448 = vrcp.pop %v2418
        %v2449 = vrcp.pop %v2420
        %v2450 = vrcp.pop %v2422
        %v2451 = vrcp.pop %v2424
        %v2452 = vrcp.pop %v2426
        %v2453 = vrcp.pop %v2428
        %v2454 = vrcp.pop %v2430
        %v2455 = vrcp.pop %v2432
        %v2456 = vrcp.pop %v2434
        %v2457 = vrcp.pop %v2436
        %v2458 = vrcp.pop %v2438
        %v2459 = vrcp.pop %v2440
        %v2460 = vrcp.pop %v2442
        %v2461 = vrcp.pop %v2444
        %v2462 = vrcp.pop %v2446
        %v2463 = vmul.f32 %v2384, %v2447
        %v2464 = vmul.f32 %v2386, %v2448
        %v2465 = vmul.f32 %v2388, %v2449
        %v2466 = vmul.f32 %v2390, %v2450
        %v2467 = vmul.f32 %v2392, %v2451
        %v2468 = vmul.f32 %v2394, %v2452
        %v2469 = vmul.f32 %v2396, %v2453
        %v2470 = vmul.f32 %v2398, %v2454
        %v2471 = vmul.f32 %v2400, %v2455
        %v2472 = vmul.f32 %v2402, %v2456
        %v2473 = vmul.f32 %v2404, %v2457
        %v2474 = vmul.f32 %v2406, %v2458
        %v2475 = vmul.f32 %v2408, %v2459
        %v2476 = vmul.f32 %v2410, %v2460
        %v2477 = vmul.f32 %v2412, %v2461
        %v2478 = vmul.f32 %v2414, %v2462
        %v2479 = vpack.c.bf16 %v2464, %v2463
        %v2480 = vpack.c.bf16 %v2466, %v2465
        %v2481 = vpack.c.bf16 %v2468, %v2467
        %v2482 = vpack.c.bf16 %v2470, %v2469
        %v2483 = vpack.c.bf16 %v2472, %v2471
        %v2484 = vpack.c.bf16 %v2474, %v2473
        %v2485 = vpack.c.bf16 %v2476, %v2475
        %v2486 = vpack.c.bf16 %v2478, %v2477
        %2487 = vrot.lane.b32.xlu0 %v1134, 112
        %v2488 = vpop.permute.xlu0 %2487
        %2489 = vrot.lane.b32.xlu0 %v1135, 112
        %v2490 = vpop.permute.xlu0 %2489
        %2491 = vrot.lane.b32.xlu0 %v1136, 112
        %v2492 = vpop.permute.xlu0 %2491
        %2493 = vrot.lane.b32.xlu0 %v1137, 112
        %v2494 = vpop.permute.xlu0 %2493
        %2495 = vrot.lane.b32.xlu0 %v1138, 112
        %v2496 = vpop.permute.xlu0 %2495
        %2497 = vrot.lane.b32.xlu0 %v1139, 112
        %v2498 = vpop.permute.xlu0 %2497
        %2499 = vrot.lane.b32.xlu0 %v1140, 112
        %v2500 = vpop.permute.xlu0 %2499
        %2501 = vrot.lane.b32.xlu0 %v1141, 112
        %v2502 = vpop.permute.xlu0 %2501
        %2511 = vmatprep.subr.bf16.mxu0 0
        %2512 = vmatpush1.bf16.msra.mxu0 %v2502
        %2513 = vmatprep.subr.bf16.mxu0 0
        %2514 = vmatpush1.bf16.msra.mxu0 %v2500
        %2515 = vmatprep.subr.bf16.mxu0 0
        %2516 = vmatpush1.bf16.msra.mxu0 %v2498
        %2517 = vmatprep.subr.bf16.mxu0 0
        %2518 = vmatpush1.bf16.msra.mxu0 %v2496
        %2519 = vmatprep.subr.bf16.mxu0 0
        %2520 = vmatpush1.bf16.msra.mxu0 %v2494
        %2521 = vmatprep.subr.bf16.mxu0 0
        %2522 = vmatpush1.bf16.msra.mxu0 %v2492
        %2523 = vmatprep.subr.bf16.mxu0 0
        %2524 = vmatpush1.bf16.msra.mxu0 %v2490
        %2525 = vmatprep.subr.bf16.mxu0 0
        %2526 = vmatpush1.bf16.msra.mxu0 %v2488
        %2527 = vmatprep.subr.bf16.mxu0 0
        %2528 = vmatpush2.bf16.msra.mxu0 0
        %2529 = vmatprep.subr.bf16.mxu0 0
        %2530 = vmatpush2.bf16.msra.mxu0 0
        %2531 = vmatprep.subr.bf16.mxu0 0
        %2532 = vmatpush2.bf16.msra.mxu0 0
        %2533 = vmatprep.subr.bf16.mxu0 0
        %2534 = vmatpush2.bf16.msra.mxu0 0
        %2535 = vmatprep.subr.bf16.mxu0 0
        %2536 = vmatpush2.bf16.msra.mxu0 0
        %2537 = vmatprep.subr.bf16.mxu0 0
        %2538 = vmatpush2.bf16.msra.mxu0 0
        %2539 = vmatprep.subr.bf16.mxu0 0
        %2540 = vmatpush2.bf16.msra.mxu0 0
        %2541 = vmatprep.subr.bf16.mxu0 0
        %2542 = vmatpush2.bf16.msra.mxu0 0
        %2543 = vmatprep.mubr.bf16.mxu0 0
        %2544 = vmatmul.mubr.bf16.gmra.mxu0 %v2479
        %v2545 = vpop.f32.mrf.mxu0
        %v2546 = vadd.f32 0.0, %v2545
        %v2547 = vpop.f32.mrf.mxu0
        %v2548 = vpop.f32.mrf.mxu0
        %v2549 = vadd.f32 0.0, %v2548
        %v2550 = vpop.f32.mrf.mxu0
        %2551 = vmatprep.mubr.bf16.mxu0 0
        %2552 = vmatmul.mubr.bf16.gmra.mxu0 %v2480
        %v2553 = vpop.f32.mrf.mxu0
        %v2554 = vadd.f32 0.0, %v2553
        %v2555 = vpop.f32.mrf.mxu0
        %v2556 = vpop.f32.mrf.mxu0
        %v2557 = vadd.f32 0.0, %v2556
        %v2558 = vpop.f32.mrf.mxu0
        %2559 = vmatprep.mubr.bf16.mxu0 0
        %2560 = vmatmul.mubr.bf16.gmra.mxu0 %v2481
        %v2561 = vpop.f32.mrf.mxu0
        %v2562 = vadd.f32 0.0, %v2561
        %v2563 = vpop.f32.mrf.mxu0
        %v2564 = vpop.f32.mrf.mxu0
        %v2565 = vadd.f32 0.0, %v2564
        %v2566 = vpop.f32.mrf.mxu0
        %2567 = vmatprep.mubr.bf16.mxu0 0
        %2568 = vmatmul.mubr.bf16.gmra.mxu0 %v2482
        %v2569 = vpop.f32.mrf.mxu0
        %v2570 = vadd.f32 0.0, %v2569
        %v2571 = vpop.f32.mrf.mxu0
        %v2572 = vpop.f32.mrf.mxu0
        %v2573 = vadd.f32 0.0, %v2572
        %v2574 = vpop.f32.mrf.mxu0
        %2575 = vmatprep.mubr.bf16.mxu0 0
        %2576 = vmatmul.mubr.bf16.gmra.mxu0 %v2483
        %v2577 = vpop.f32.mrf.mxu0
        %v2578 = vadd.f32 0.0, %v2577
        %v2579 = vpop.f32.mrf.mxu0
        %v2580 = vpop.f32.mrf.mxu0
        %v2581 = vadd.f32 0.0, %v2580
        %v2582 = vpop.f32.mrf.mxu0
        %2583 = vmatprep.mubr.bf16.mxu0 0
        %2584 = vmatmul.mubr.bf16.gmra.mxu0 %v2484
        %v2585 = vpop.f32.mrf.mxu0
        %v2586 = vadd.f32 0.0, %v2585
        %v2587 = vpop.f32.mrf.mxu0
        %v2588 = vpop.f32.mrf.mxu0
        %v2589 = vadd.f32 0.0, %v2588
        %v2590 = vpop.f32.mrf.mxu0
        %2591 = vmatprep.mubr.bf16.mxu0 0
        %2592 = vmatmul.mubr.bf16.gmra.mxu0 %v2485
        %v2593 = vpop.f32.mrf.mxu0
        %v2594 = vadd.f32 0.0, %v2593
        %v2595 = vpop.f32.mrf.mxu0
        %v2596 = vpop.f32.mrf.mxu0
        %v2597 = vadd.f32 0.0, %v2596
        %v2598 = vpop.f32.mrf.mxu0
        %2599 = vmatprep.mubr.bf16.mxu0 0
        %2600 = vmatmul.mubr.bf16.gmra.mxu0 %v2486
        %v2601 = vpop.f32.mrf.mxu0
        %v2602 = vadd.f32 0.0, %v2601
        %v2603 = vpop.f32.mrf.mxu0
        %v2604 = vpop.f32.mrf.mxu0
        %v2605 = vadd.f32 0.0, %v2604
        %v2606 = vpop.f32.mrf.mxu0
        %2607 = vdwg.mxu0
        %2624 = vrot.lane.b32.xlu0 %v2546, 16
        %v2625 = vpop.permute.xlu0 %2624
        %2626 = vrot.lane.b32.xlu0 %v2549, 16
        %v2627 = vpop.permute.xlu0 %2626
        %2628 = vrot.lane.b32.xlu0 %v2554, 16
        %v2629 = vpop.permute.xlu0 %2628
        %2630 = vrot.lane.b32.xlu0 %v2557, 16
        %v2631 = vpop.permute.xlu0 %2630
        %2632 = vrot.lane.b32.xlu0 %v2562, 16
        %v2633 = vpop.permute.xlu0 %2632
        %2634 = vrot.lane.b32.xlu0 %v2565, 16
        %v2635 = vpop.permute.xlu0 %2634
        %2636 = vrot.lane.b32.xlu0 %v2570, 16
        %v2637 = vpop.permute.xlu0 %2636
        %2638 = vrot.lane.b32.xlu0 %v2573, 16
        %v2639 = vpop.permute.xlu0 %2638
        %2640 = vrot.lane.b32.xlu0 %v2578, 16
        %v2641 = vpop.permute.xlu0 %2640
        %2642 = vrot.lane.b32.xlu0 %v2581, 16
        %v2643 = vpop.permute.xlu0 %2642
        %2644 = vrot.lane.b32.xlu0 %v2586, 16
        %v2645 = vpop.permute.xlu0 %2644
        %2646 = vrot.lane.b32.xlu0 %v2589, 16
        %v2647 = vpop.permute.xlu0 %2646
        %2648 = vrot.lane.b32.xlu0 %v2594, 16
        %v2649 = vpop.permute.xlu0 %2648
        %2650 = vrot.lane.b32.xlu0 %v2597, 16
        %v2651 = vpop.permute.xlu0 %2650
        %2652 = vrot.lane.b32.xlu0 %v2602, 16
        %v2653 = vpop.permute.xlu0 %2652
        %2654 = vrot.lane.b32.xlu0 %v2605, 16
        %v2655 = vpop.permute.xlu0 %2654
        %vm2672 = vcmask 195712
        %2673 = vst.msk [vmem:[#allocation2] sm:$0xff] %vm2672, %v2625
        %2674 = vst.msk [vmem:[#allocation2 + $0x8] sm:$0xff] %vm2672, %v2627
        %2675 = vst.msk [vmem:[#allocation2 + $0x10] sm:$0xff] %vm2672, %v2629
        %2676 = vst.msk [vmem:[#allocation2 + $0x18] sm:$0xff] %vm2672, %v2631
        %2677 = vst.msk [vmem:[#allocation2 + $0x20] sm:$0xff] %vm2672, %v2633
        %2678 = vst.msk [vmem:[#allocation2 + $0x28] sm:$0xff] %vm2672, %v2635
        %2679 = vst.msk [vmem:[#allocation2 + $0x30] sm:$0xff] %vm2672, %v2637
        %2680 = vst.msk [vmem:[#allocation2 + $0x38] sm:$0xff] %vm2672, %v2639
        %2681 = vst.msk [vmem:[#allocation2 + $0x40] sm:$0xff] %vm2672, %v2641
        %2682 = vst.msk [vmem:[#allocation2 + $0x48] sm:$0xff] %vm2672, %v2643
        %2683 = vst.msk [vmem:[#allocation2 + $0x50] sm:$0xff] %vm2672, %v2645
        %2684 = vst.msk [vmem:[#allocation2 + $0x58] sm:$0xff] %vm2672, %v2647
        %2685 = vst.msk [vmem:[#allocation2 + $0x60] sm:$0xff] %vm2672, %v2649
        %2686 = vst.msk [vmem:[#allocation2 + $0x68] sm:$0xff] %vm2672, %v2651
        %2687 = vst.msk [vmem:[#allocation2 + $0x70] sm:$0xff] %vm2672, %v2653
        %2688 = vst.msk [vmem:[#allocation2 + $0x78] sm:$0xff] %vm2672, %v2655
        %s2689 = scalar_lea.vmem %s468, 384 [#allocation3]
        %v2690 = vld [vmem:[%s2689] sm:$0xff]
        %v2691 = vld [vmem:[%s2689 + $0x8] sm:$0xff]
        %v2692 = vld [vmem:[%s2689 + $0x10] sm:$0xff]
        %v2693 = vld [vmem:[%s2689 + $0x18] sm:$0xff]
        %v2694 = vld [vmem:[%s2689 + $0x20] sm:$0xff]
        %v2695 = vld [vmem:[%s2689 + $0x28] sm:$0xff]
        %v2696 = vld [vmem:[%s2689 + $0x30] sm:$0xff]
        %v2697 = vld [vmem:[%s2689 + $0x38] sm:$0xff]
        %v2698 = vld [vmem:[%s2689 + $0x40] sm:$0xff]
        %v2699 = vld [vmem:[%s2689 + $0x48] sm:$0xff]
        %v2700 = vld [vmem:[%s2689 + $0x50] sm:$0xff]
        %v2701 = vld [vmem:[%s2689 + $0x58] sm:$0xff]
        %v2702 = vld [vmem:[%s2689 + $0x60] sm:$0xff]
        %v2703 = vld [vmem:[%s2689 + $0x68] sm:$0xff]
        %v2704 = vld [vmem:[%s2689 + $0x70] sm:$0xff]
        %v2705 = vld [vmem:[%s2689 + $0x78] sm:$0xff]
        %2706 = vrot.lane.b32.xlu0 %v1118, 104
        %v2707 = vpop.permute.xlu0 %2706
        %2708 = vrot.lane.b32.xlu0 %v1119, 104
        %v2709 = vpop.permute.xlu0 %2708
        %2710 = vrot.lane.b32.xlu0 %v1120, 104
        %v2711 = vpop.permute.xlu0 %2710
        %2712 = vrot.lane.b32.xlu0 %v1121, 104
        %v2713 = vpop.permute.xlu0 %2712
        %2714 = vrot.lane.b32.xlu0 %v1122, 104
        %v2715 = vpop.permute.xlu0 %2714
        %2716 = vrot.lane.b32.xlu0 %v1123, 104
        %v2717 = vpop.permute.xlu0 %2716
        %2718 = vrot.lane.b32.xlu0 %v1124, 104
        %v2719 = vpop.permute.xlu0 %2718
        %2720 = vrot.lane.b32.xlu0 %v1125, 104
        %v2721 = vpop.permute.xlu0 %2720
        %2722 = vrot.lane.b32.xlu0 %v1126, 104
        %v2723 = vpop.permute.xlu0 %2722
        %2724 = vrot.lane.b32.xlu0 %v1127, 104
        %v2725 = vpop.permute.xlu0 %2724
        %2726 = vrot.lane.b32.xlu0 %v1128, 104
        %v2727 = vpop.permute.xlu0 %2726
        %2728 = vrot.lane.b32.xlu0 %v1129, 104
        %v2729 = vpop.permute.xlu0 %2728
        %2730 = vrot.lane.b32.xlu0 %v1130, 104
        %v2731 = vpop.permute.xlu0 %2730
        %2732 = vrot.lane.b32.xlu0 %v1131, 104
        %v2733 = vpop.permute.xlu0 %2732
        %2734 = vrot.lane.b32.xlu0 %v1132, 104
        %v2735 = vpop.permute.xlu0 %2734
        %2736 = vrot.lane.b32.xlu0 %v1133, 104
        %v2737 = vpop.permute.xlu0 %2736
        %v2739 = vsel %vm1158, %v2707, 0
        %v2742 = vsel %vm1158, %v2709, 0
        %v2745 = vsel %vm1158, %v2711, 0
        %v2748 = vsel %vm1158, %v2713, 0
        %v2751 = vsel %vm1158, %v2715, 0
        %v2754 = vsel %vm1158, %v2717, 0
        %v2757 = vsel %vm1158, %v2719, 0
        %v2760 = vsel %vm1158, %v2721, 0
        %v2763 = vsel %vm1158, %v2723, 0
        %v2766 = vsel %vm1158, %v2725, 0
        %v2769 = vsel %vm1158, %v2727, 0
        %v2772 = vsel %vm1158, %v2729, 0
        %v2775 = vsel %vm1158, %v2731, 0
        %v2778 = vsel %vm1158, %v2733, 0
        %v2781 = vsel %vm1158, %v2735, 0
        %v2784 = vsel %vm1158, %v2737, 0
        %2786 = vmatprep.subr.bf16.mxu0 0
        %2787 = vmatpush1.bf16.xpose.msra.mxu0 %v2784
        %2788 = vmatprep.subr.bf16.mxu0 0
        %2789 = vmatpush1.bf16.xpose.msra.mxu0 %v2781
        %2790 = vmatprep.subr.bf16.mxu0 0
        %2791 = vmatpush1.bf16.xpose.msra.mxu0 %v2778
        %2792 = vmatprep.subr.bf16.mxu0 0
        %2793 = vmatpush1.bf16.xpose.msra.mxu0 %v2775
        %2794 = vmatprep.subr.bf16.mxu0 0
        %2795 = vmatpush1.bf16.xpose.msra.mxu0 %v2772
        %2796 = vmatprep.subr.bf16.mxu0 0
        %2797 = vmatpush1.bf16.xpose.msra.mxu0 %v2769
        %2798 = vmatprep.subr.bf16.mxu0 0
        %2799 = vmatpush1.bf16.xpose.msra.mxu0 %v2766
        %2800 = vmatprep.subr.bf16.mxu0 0
        %2801 = vmatpush1.bf16.xpose.msra.mxu0 %v2763
        %2802 = vmatprep.subr.bf16.mxu0 0
        %2803 = vmatpush2.bf16.xpose.msra.mxu0 0
        %2804 = vmatprep.subr.bf16.mxu0 0
        %2805 = vmatpush2.bf16.xpose.msra.mxu0 0
        %2806 = vmatprep.subr.bf16.mxu0 0
        %2807 = vmatpush2.bf16.xpose.msra.mxu0 0
        %2808 = vmatprep.subr.bf16.mxu0 0
        %2809 = vmatpush2.bf16.xpose.msra.mxu0 0
        %2810 = vmatprep.subr.bf16.mxu0 0
        %2811 = vmatpush2.bf16.xpose.msra.mxu0 0
        %2812 = vmatprep.subr.bf16.mxu0 0
        %2813 = vmatpush2.bf16.xpose.msra.mxu0 0
        %2814 = vmatprep.subr.bf16.mxu0 0
        %2815 = vmatpush2.bf16.xpose.msra.mxu0 0
        %2816 = vmatprep.subr.bf16.mxu0 0
        %2817 = vmatpush2.bf16.xpose.msra.mxu0 0
        %2818 = vmatprep.mubr.bf16.mxu0 0
        %2819 = vmatmul.mubr.bf16.gmra.mxu0 %v2739
        %v2820 = vpop.f32.mrf.mxu0
        %v2821 = vadd.f32 %v2690, %v2820
        %v2822 = vpop.f32.mrf.mxu0
        %v2823 = vpop.f32.mrf.mxu0
        %v2824 = vadd.f32 %v2691, %v2823
        %v2825 = vpop.f32.mrf.mxu0
        %2826 = vmatprep.mubr.bf16.mxu0 0
        %2827 = vmatmul.mubr.bf16.gmra.mxu0 %v2742
        %v2828 = vpop.f32.mrf.mxu0
        %v2829 = vadd.f32 %v2692, %v2828
        %v2830 = vpop.f32.mrf.mxu0
        %v2831 = vpop.f32.mrf.mxu0
        %v2832 = vadd.f32 %v2693, %v2831
        %v2833 = vpop.f32.mrf.mxu0
        %2834 = vmatprep.mubr.bf16.mxu0 0
        %2835 = vmatmul.mubr.bf16.gmra.mxu0 %v2745
        %v2836 = vpop.f32.mrf.mxu0
        %v2837 = vadd.f32 %v2694, %v2836
        %v2838 = vpop.f32.mrf.mxu0
        %v2839 = vpop.f32.mrf.mxu0
        %v2840 = vadd.f32 %v2695, %v2839
        %v2841 = vpop.f32.mrf.mxu0
        %2842 = vmatprep.mubr.bf16.mxu0 0
        %2843 = vmatmul.mubr.bf16.gmra.mxu0 %v2748
        %v2844 = vpop.f32.mrf.mxu0
        %v2845 = vadd.f32 %v2696, %v2844
        %v2846 = vpop.f32.mrf.mxu0
        %v2847 = vpop.f32.mrf.mxu0
        %v2848 = vadd.f32 %v2697, %v2847
        %v2849 = vpop.f32.mrf.mxu0
        %2850 = vmatprep.mubr.bf16.mxu0 0
        %2851 = vmatmul.mubr.bf16.gmra.mxu0 %v2751
        %v2852 = vpop.f32.mrf.mxu0
        %v2853 = vadd.f32 %v2698, %v2852
        %v2854 = vpop.f32.mrf.mxu0
        %v2855 = vpop.f32.mrf.mxu0
        %v2856 = vadd.f32 %v2699, %v2855
        %v2857 = vpop.f32.mrf.mxu0
        %2858 = vmatprep.mubr.bf16.mxu0 0
        %2859 = vmatmul.mubr.bf16.gmra.mxu0 %v2754
        %v2860 = vpop.f32.mrf.mxu0
        %v2861 = vadd.f32 %v2700, %v2860
        %v2862 = vpop.f32.mrf.mxu0
        %v2863 = vpop.f32.mrf.mxu0
        %v2864 = vadd.f32 %v2701, %v2863
        %v2865 = vpop.f32.mrf.mxu0
        %2866 = vmatprep.mubr.bf16.mxu0 0
        %2867 = vmatmul.mubr.bf16.gmra.mxu0 %v2757
        %v2868 = vpop.f32.mrf.mxu0
        %v2869 = vadd.f32 %v2702, %v2868
        %v2870 = vpop.f32.mrf.mxu0
        %v2871 = vpop.f32.mrf.mxu0
        %v2872 = vadd.f32 %v2703, %v2871
        %v2873 = vpop.f32.mrf.mxu0
        %2874 = vmatprep.mubr.bf16.mxu0 0
        %2875 = vmatmul.mubr.bf16.gmra.mxu0 %v2760
        %v2876 = vpop.f32.mrf.mxu0
        %v2877 = vadd.f32 %v2704, %v2876
        %v2878 = vpop.f32.mrf.mxu0
        %v2879 = vpop.f32.mrf.mxu0
        %v2880 = vadd.f32 %v2705, %v2879
        %v2881 = vpop.f32.mrf.mxu0
        %2882 = vdwg.mxu0
        %2883 = vmax.xlane.f32.xlu0 %v2821
        %v2884 = vpop.xlane.xlu0 %2883
        %2885 = vmax.xlane.f32.xlu0 %v2824
        %v2886 = vpop.xlane.xlu0 %2885
        %2887 = vmax.xlane.f32.xlu0 %v2829
        %v2888 = vpop.xlane.xlu0 %2887
        %2889 = vmax.xlane.f32.xlu0 %v2832
        %v2890 = vpop.xlane.xlu0 %2889
        %2891 = vmax.xlane.f32.xlu0 %v2837
        %v2892 = vpop.xlane.xlu0 %2891
        %2893 = vmax.xlane.f32.xlu0 %v2840
        %v2894 = vpop.xlane.xlu0 %2893
        %2895 = vmax.xlane.f32.xlu0 %v2845
        %v2896 = vpop.xlane.xlu0 %2895
        %2897 = vmax.xlane.f32.xlu0 %v2848
        %v2898 = vpop.xlane.xlu0 %2897
        %2899 = vmax.xlane.f32.xlu0 %v2853
        %v2900 = vpop.xlane.xlu0 %2899
        %2901 = vmax.xlane.f32.xlu0 %v2856
        %v2902 = vpop.xlane.xlu0 %2901
        %2903 = vmax.xlane.f32.xlu0 %v2861
        %v2904 = vpop.xlane.xlu0 %2903
        %2905 = vmax.xlane.f32.xlu0 %v2864
        %v2906 = vpop.xlane.xlu0 %2905
        %2907 = vmax.xlane.f32.xlu0 %v2869
        %v2908 = vpop.xlane.xlu0 %2907
        %2909 = vmax.xlane.f32.xlu0 %v2872
        %v2910 = vpop.xlane.xlu0 %2909
        %2911 = vmax.xlane.f32.xlu0 %v2877
        %v2912 = vpop.xlane.xlu0 %2911
        %2913 = vmax.xlane.f32.xlu0 %v2880
        %v2914 = vpop.xlane.xlu0 %2913
        %v2915 = vsub.f32 %v2821, %v2884
        %v2916 = vsub.f32 %v2824, %v2886
        %v2917 = vsub.f32 %v2829, %v2888
        %v2918 = vsub.f32 %v2832, %v2890
        %v2919 = vsub.f32 %v2837, %v2892
        %v2920 = vsub.f32 %v2840, %v2894
        %v2921 = vsub.f32 %v2845, %v2896
        %v2922 = vsub.f32 %v2848, %v2898
        %v2923 = vsub.f32 %v2853, %v2900
        %v2924 = vsub.f32 %v2856, %v2902
        %v2925 = vsub.f32 %v2861, %v2904
        %v2926 = vsub.f32 %v2864, %v2906
        %v2927 = vsub.f32 %v2869, %v2908
        %v2928 = vsub.f32 %v2872, %v2910
        %v2929 = vsub.f32 %v2877, %v2912
        %v2930 = vsub.f32 %v2880, %v2914
        %v2931 = vmul.f32 %v2915, 1.442695
        %v2932 = vpow.pop %v2931
        %v2933 = vmul.f32 %v2916, 1.442695
        %v2934 = vpow.pop %v2933
        %v2935 = vmul.f32 %v2917, 1.442695
        %v2936 = vpow.pop %v2935
        %v2937 = vmul.f32 %v2918, 1.442695
        %v2938 = vpow.pop %v2937
        %v2939 = vmul.f32 %v2919, 1.442695
        %v2940 = vpow.pop %v2939
        %v2941 = vmul.f32 %v2920, 1.442695
        %v2942 = vpow.pop %v2941
        %v2943 = vmul.f32 %v2921, 1.442695
        %v2944 = vpow.pop %v2943
        %v2945 = vmul.f32 %v2922, 1.442695
        %v2946 = vpow.pop %v2945
        %v2947 = vmul.f32 %v2923, 1.442695
        %v2948 = vpow.pop %v2947
        %v2949 = vmul.f32 %v2924, 1.442695
        %v2950 = vpow.pop %v2949
        %v2951 = vmul.f32 %v2925, 1.442695
        %v2952 = vpow.pop %v2951
        %v2953 = vmul.f32 %v2926, 1.442695
        %v2954 = vpow.pop %v2953
        %v2955 = vmul.f32 %v2927, 1.442695
        %v2956 = vpow.pop %v2955
        %v2957 = vmul.f32 %v2928, 1.442695
        %v2958 = vpow.pop %v2957
        %v2959 = vmul.f32 %v2929, 1.442695
        %v2960 = vpow.pop %v2959
        %v2961 = vmul.f32 %v2930, 1.442695
        %v2962 = vpow.pop %v2961
        %2963 = vadd.xlane.f32.xlu0 %v2932
        %v2964 = vpop.xlane.xlu0 %2963
        %2965 = vadd.xlane.f32.xlu0 %v2934
        %v2966 = vpop.xlane.xlu0 %2965
        %2967 = vadd.xlane.f32.xlu0 %v2936
        %v2968 = vpop.xlane.xlu0 %2967
        %2969 = vadd.xlane.f32.xlu0 %v2938
        %v2970 = vpop.xlane.xlu0 %2969
        %2971 = vadd.xlane.f32.xlu0 %v2940
        %v2972 = vpop.xlane.xlu0 %2971
        %2973 = vadd.xlane.f32.xlu0 %v2942
        %v2974 = vpop.xlane.xlu0 %2973
        %2975 = vadd.xlane.f32.xlu0 %v2944
        %v2976 = vpop.xlane.xlu0 %2975
        %2977 = vadd.xlane.f32.xlu0 %v2946
        %v2978 = vpop.xlane.xlu0 %2977
        %2979 = vadd.xlane.f32.xlu0 %v2948
        %v2980 = vpop.xlane.xlu0 %2979
        %2981 = vadd.xlane.f32.xlu0 %v2950
        %v2982 = vpop.xlane.xlu0 %2981
        %2983 = vadd.xlane.f32.xlu0 %v2952
        %v2984 = vpop.xlane.xlu0 %2983
        %2985 = vadd.xlane.f32.xlu0 %v2954
        %v2986 = vpop.xlane.xlu0 %2985
        %2987 = vadd.xlane.f32.xlu0 %v2956
        %v2988 = vpop.xlane.xlu0 %2987
        %2989 = vadd.xlane.f32.xlu0 %v2958
        %v2990 = vpop.xlane.xlu0 %2989
        %2991 = vadd.xlane.f32.xlu0 %v2960
        %v2992 = vpop.xlane.xlu0 %2991
        %2993 = vadd.xlane.f32.xlu0 %v2962
        %v2994 = vpop.xlane.xlu0 %2993
        %v2995 = vrcp.pop %v2964
        %v2996 = vrcp.pop %v2966
        %v2997 = vrcp.pop %v2968
        %v2998 = vrcp.pop %v2970
        %v2999 = vrcp.pop %v2972
        %v3000 = vrcp.pop %v2974
        %v3001 = vrcp.pop %v2976
        %v3002 = vrcp.pop %v2978
        %v3003 = vrcp.pop %v2980
        %v3004 = vrcp.pop %v2982
        %v3005 = vrcp.pop %v2984
        %v3006 = vrcp.pop %v2986
        %v3007 = vrcp.pop %v2988
        %v3008 = vrcp.pop %v2990
        %v3009 = vrcp.pop %v2992
        %v3010 = vrcp.pop %v2994
        %v3011 = vmul.f32 %v2932, %v2995
        %v3012 = vmul.f32 %v2934, %v2996
        %v3013 = vmul.f32 %v2936, %v2997
        %v3014 = vmul.f32 %v2938, %v2998
        %v3015 = vmul.f32 %v2940, %v2999
        %v3016 = vmul.f32 %v2942, %v3000
        %v3017 = vmul.f32 %v2944, %v3001
        %v3018 = vmul.f32 %v2946, %v3002
        %v3019 = vmul.f32 %v2948, %v3003
        %v3020 = vmul.f32 %v2950, %v3004
        %v3021 = vmul.f32 %v2952, %v3005
        %v3022 = vmul.f32 %v2954, %v3006
        %v3023 = vmul.f32 %v2956, %v3007
        %v3024 = vmul.f32 %v2958, %v3008
        %v3025 = vmul.f32 %v2960, %v3009
        %v3026 = vmul.f32 %v2962, %v3010
        %v3027 = vpack.c.bf16 %v3012, %v3011
        %v3028 = vpack.c.bf16 %v3014, %v3013
        %v3029 = vpack.c.bf16 %v3016, %v3015
        %v3030 = vpack.c.bf16 %v3018, %v3017
        %v3031 = vpack.c.bf16 %v3020, %v3019
        %v3032 = vpack.c.bf16 %v3022, %v3021
        %v3033 = vpack.c.bf16 %v3024, %v3023
        %v3034 = vpack.c.bf16 %v3026, %v3025
        %3035 = vrot.lane.b32.xlu0 %v1134, 104
        %v3036 = vpop.permute.xlu0 %3035
        %3037 = vrot.lane.b32.xlu0 %v1135, 104
        %v3038 = vpop.permute.xlu0 %3037
        %3039 = vrot.lane.b32.xlu0 %v1136, 104
        %v3040 = vpop.permute.xlu0 %3039
        %3041 = vrot.lane.b32.xlu0 %v1137, 104
        %v3042 = vpop.permute.xlu0 %3041
        %3043 = vrot.lane.b32.xlu0 %v1138, 104
        %v3044 = vpop.permute.xlu0 %3043
        %3045 = vrot.lane.b32.xlu0 %v1139, 104
        %v3046 = vpop.permute.xlu0 %3045
        %3047 = vrot.lane.b32.xlu0 %v1140, 104
        %v3048 = vpop.permute.xlu0 %3047
        %3049 = vrot.lane.b32.xlu0 %v1141, 104
        %v3050 = vpop.permute.xlu0 %3049
        %3059 = vmatprep.subr.bf16.mxu0 0
        %3060 = vmatpush1.bf16.msra.mxu0 %v3050
        %3061 = vmatprep.subr.bf16.mxu0 0
        %3062 = vmatpush1.bf16.msra.mxu0 %v3048
        %3063 = vmatprep.subr.bf16.mxu0 0
        %3064 = vmatpush1.bf16.msra.mxu0 %v3046
        %3065 = vmatprep.subr.bf16.mxu0 0
        %3066 = vmatpush1.bf16.msra.mxu0 %v3044
        %3067 = vmatprep.subr.bf16.mxu0 0
        %3068 = vmatpush1.bf16.msra.mxu0 %v3042
        %3069 = vmatprep.subr.bf16.mxu0 0
        %3070 = vmatpush1.bf16.msra.mxu0 %v3040
        %3071 = vmatprep.subr.bf16.mxu0 0
        %3072 = vmatpush1.bf16.msra.mxu0 %v3038
        %3073 = vmatprep.subr.bf16.mxu0 0
        %3074 = vmatpush1.bf16.msra.mxu0 %v3036
        %3075 = vmatprep.subr.bf16.mxu0 0
        %3076 = vmatpush2.bf16.msra.mxu0 0
        %3077 = vmatprep.subr.bf16.mxu0 0
        %3078 = vmatpush2.bf16.msra.mxu0 0
        %3079 = vmatprep.subr.bf16.mxu0 0
        %3080 = vmatpush2.bf16.msra.mxu0 0
        %3081 = vmatprep.subr.bf16.mxu0 0
        %3082 = vmatpush2.bf16.msra.mxu0 0
        %3083 = vmatprep.subr.bf16.mxu0 0
        %3084 = vmatpush2.bf16.msra.mxu0 0
        %3085 = vmatprep.subr.bf16.mxu0 0
        %3086 = vmatpush2.bf16.msra.mxu0 0
        %3087 = vmatprep.subr.bf16.mxu0 0
        %3088 = vmatpush2.bf16.msra.mxu0 0
        %3089 = vmatprep.subr.bf16.mxu0 0
        %3090 = vmatpush2.bf16.msra.mxu0 0
        %3091 = vmatprep.mubr.bf16.mxu0 0
        %3092 = vmatmul.mubr.bf16.gmra.mxu0 %v3027
        %v3093 = vpop.f32.mrf.mxu0
        %v3094 = vadd.f32 0.0, %v3093
        %v3095 = vpop.f32.mrf.mxu0
        %v3096 = vpop.f32.mrf.mxu0
        %v3097 = vadd.f32 0.0, %v3096
        %v3098 = vpop.f32.mrf.mxu0
        %3099 = vmatprep.mubr.bf16.mxu0 0
        %3100 = vmatmul.mubr.bf16.gmra.mxu0 %v3028
        %v3101 = vpop.f32.mrf.mxu0
        %v3102 = vadd.f32 0.0, %v3101
        %v3103 = vpop.f32.mrf.mxu0
        %v3104 = vpop.f32.mrf.mxu0
        %v3105 = vadd.f32 0.0, %v3104
        %v3106 = vpop.f32.mrf.mxu0
        %3107 = vmatprep.mubr.bf16.mxu0 0
        %3108 = vmatmul.mubr.bf16.gmra.mxu0 %v3029
        %v3109 = vpop.f32.mrf.mxu0
        %v3110 = vadd.f32 0.0, %v3109
        %v3111 = vpop.f32.mrf.mxu0
        %v3112 = vpop.f32.mrf.mxu0
        %v3113 = vadd.f32 0.0, %v3112
        %v3114 = vpop.f32.mrf.mxu0
        %3115 = vmatprep.mubr.bf16.mxu0 0
        %3116 = vmatmul.mubr.bf16.gmra.mxu0 %v3030
        %v3117 = vpop.f32.mrf.mxu0
        %v3118 = vadd.f32 0.0, %v3117
        %v3119 = vpop.f32.mrf.mxu0
        %v3120 = vpop.f32.mrf.mxu0
        %v3121 = vadd.f32 0.0, %v3120
        %v3122 = vpop.f32.mrf.mxu0
        %3123 = vmatprep.mubr.bf16.mxu0 0
        %3124 = vmatmul.mubr.bf16.gmra.mxu0 %v3031
        %v3125 = vpop.f32.mrf.mxu0
        %v3126 = vadd.f32 0.0, %v3125
        %v3127 = vpop.f32.mrf.mxu0
        %v3128 = vpop.f32.mrf.mxu0
        %v3129 = vadd.f32 0.0, %v3128
        %v3130 = vpop.f32.mrf.mxu0
        %3131 = vmatprep.mubr.bf16.mxu0 0
        %3132 = vmatmul.mubr.bf16.gmra.mxu0 %v3032
        %v3133 = vpop.f32.mrf.mxu0
        %v3134 = vadd.f32 0.0, %v3133
        %v3135 = vpop.f32.mrf.mxu0
        %v3136 = vpop.f32.mrf.mxu0
        %v3137 = vadd.f32 0.0, %v3136
        %v3138 = vpop.f32.mrf.mxu0
        %3139 = vmatprep.mubr.bf16.mxu0 0
        %3140 = vmatmul.mubr.bf16.gmra.mxu0 %v3033
        %v3141 = vpop.f32.mrf.mxu0
        %v3142 = vadd.f32 0.0, %v3141
        %v3143 = vpop.f32.mrf.mxu0
        %v3144 = vpop.f32.mrf.mxu0
        %v3145 = vadd.f32 0.0, %v3144
        %v3146 = vpop.f32.mrf.mxu0
        %3147 = vmatprep.mubr.bf16.mxu0 0
        %3148 = vmatmul.mubr.bf16.gmra.mxu0 %v3034
        %v3149 = vpop.f32.mrf.mxu0
        %v3150 = vadd.f32 0.0, %v3149
        %v3151 = vpop.f32.mrf.mxu0
        %v3152 = vpop.f32.mrf.mxu0
        %v3153 = vadd.f32 0.0, %v3152
        %v3154 = vpop.f32.mrf.mxu0
        %3155 = vdwg.mxu0
        %3172 = vrot.lane.b32.xlu0 %v3094, 24
        %v3173 = vpop.permute.xlu0 %3172
        %3174 = vrot.lane.b32.xlu0 %v3097, 24
        %v3175 = vpop.permute.xlu0 %3174
        %3176 = vrot.lane.b32.xlu0 %v3102, 24
        %v3177 = vpop.permute.xlu0 %3176
        %3178 = vrot.lane.b32.xlu0 %v3105, 24
        %v3179 = vpop.permute.xlu0 %3178
        %3180 = vrot.lane.b32.xlu0 %v3110, 24
        %v3181 = vpop.permute.xlu0 %3180
        %3182 = vrot.lane.b32.xlu0 %v3113, 24
        %v3183 = vpop.permute.xlu0 %3182
        %3184 = vrot.lane.b32.xlu0 %v3118, 24
        %v3185 = vpop.permute.xlu0 %3184
        %3186 = vrot.lane.b32.xlu0 %v3121, 24
        %v3187 = vpop.permute.xlu0 %3186
        %3188 = vrot.lane.b32.xlu0 %v3126, 24
        %v3189 = vpop.permute.xlu0 %3188
        %3190 = vrot.lane.b32.xlu0 %v3129, 24
        %v3191 = vpop.permute.xlu0 %3190
        %3192 = vrot.lane.b32.xlu0 %v3134, 24
        %v3193 = vpop.permute.xlu0 %3192
        %3194 = vrot.lane.b32.xlu0 %v3137, 24
        %v3195 = vpop.permute.xlu0 %3194
        %3196 = vrot.lane.b32.xlu0 %v3142, 24
        %v3197 = vpop.permute.xlu0 %3196
        %3198 = vrot.lane.b32.xlu0 %v3145, 24
        %v3199 = vpop.permute.xlu0 %3198
        %3200 = vrot.lane.b32.xlu0 %v3150, 24
        %v3201 = vpop.permute.xlu0 %3200
        %3202 = vrot.lane.b32.xlu0 %v3153, 24
        %v3203 = vpop.permute.xlu0 %3202
        %vm3220 = vcmask 261312
        %3221 = vst.msk [vmem:[#allocation2] sm:$0xff] %vm3220, %v3173
        %3222 = vst.msk [vmem:[#allocation2 + $0x8] sm:$0xff] %vm3220, %v3175
        %3223 = vst.msk [vmem:[#allocation2 + $0x10] sm:$0xff] %vm3220, %v3177
        %3224 = vst.msk [vmem:[#allocation2 + $0x18] sm:$0xff] %vm3220, %v3179
        %3225 = vst.msk [vmem:[#allocation2 + $0x20] sm:$0xff] %vm3220, %v3181
        %3226 = vst.msk [vmem:[#allocation2 + $0x28] sm:$0xff] %vm3220, %v3183
        %3227 = vst.msk [vmem:[#allocation2 + $0x30] sm:$0xff] %vm3220, %v3185
        %3228 = vst.msk [vmem:[#allocation2 + $0x38] sm:$0xff] %vm3220, %v3187
        %3229 = vst.msk [vmem:[#allocation2 + $0x40] sm:$0xff] %vm3220, %v3189
        %3230 = vst.msk [vmem:[#allocation2 + $0x48] sm:$0xff] %vm3220, %v3191
        %3231 = vst.msk [vmem:[#allocation2 + $0x50] sm:$0xff] %vm3220, %v3193
        %3232 = vst.msk [vmem:[#allocation2 + $0x58] sm:$0xff] %vm3220, %v3195
        %3233 = vst.msk [vmem:[#allocation2 + $0x60] sm:$0xff] %vm3220, %v3197
        %3234 = vst.msk [vmem:[#allocation2 + $0x68] sm:$0xff] %vm3220, %v3199
        %3235 = vst.msk [vmem:[#allocation2 + $0x70] sm:$0xff] %vm3220, %v3201
        %3236 = vst.msk [vmem:[#allocation2 + $0x78] sm:$0xff] %vm3220, %v3203
        %v3237 = vld [vmem:[#allocation2] sm:$0xff]
        %v3238 = vld [vmem:[#allocation2 + $0x8] sm:$0xff]
        %v3239 = vld [vmem:[#allocation2 + $0x10] sm:$0xff]
        %v3240 = vld [vmem:[#allocation2 + $0x18] sm:$0xff]
        %v3241 = vld [vmem:[#allocation2 + $0x20] sm:$0xff]
        %v3242 = vld [vmem:[#allocation2 + $0x28] sm:$0xff]
        %v3243 = vld [vmem:[#allocation2 + $0x30] sm:$0xff]
        %v3244 = vld [vmem:[#allocation2 + $0x38] sm:$0xff]
        %v3245 = vld [vmem:[#allocation2 + $0x40] sm:$0xff]
        %v3246 = vld [vmem:[#allocation2 + $0x48] sm:$0xff]
        %v3247 = vld [vmem:[#allocation2 + $0x50] sm:$0xff]
        %v3248 = vld [vmem:[#allocation2 + $0x58] sm:$0xff]
        %v3249 = vld [vmem:[#allocation2 + $0x60] sm:$0xff]
        %v3250 = vld [vmem:[#allocation2 + $0x68] sm:$0xff]
        %v3251 = vld [vmem:[#allocation2 + $0x70] sm:$0xff]
        %v3252 = vld [vmem:[#allocation2 + $0x78] sm:$0xff]
        %v3253 = vpack.c.bf16 %v3238, %v3237
        %v3254 = vpack.c.bf16 %v3240, %v3239
        %v3255 = vpack.c.bf16 %v3242, %v3241
        %v3256 = vpack.c.bf16 %v3244, %v3243
        %v3257 = vpack.c.bf16 %v3246, %v3245
        %v3258 = vpack.c.bf16 %v3248, %v3247
        %v3259 = vpack.c.bf16 %v3250, %v3249
        %v3260 = vpack.c.bf16 %v3252, %v3251
        %v3261 = vld [vmem:[%s10] sm:$0xf]
        %v3262 = vld [vmem:[%s10 + $0x4] sm:$0xf]
        %v3263 = vld [vmem:[%s10 + $0x8] sm:$0xf]
        %v3264 = vld [vmem:[%s10 + $0xc] sm:$0xf]
        %v3265 = vld [vmem:[%s11] sm:$0x1]
        %v3267 = vlaneseq
        %v3268 = vshrl.u32 %v3267, 7
        %v3269 = vsub.s32 0, %v3268
        %v3270 = vrot.slane %v3265, %v3269
        %v3276 = vunpack.c.l.b16 %v3261
        %v3277 = vunpack.c.l.b16 %v3262
        %v3278 = vunpack.c.l.b16 %v3263
        %v3279 = vunpack.c.l.b16 %v3264
        %v3280 = vpack.c.b16 %v3277, %v3276
        %v3281 = vpack.c.b16 %v3279, %v3278
        %v3285 = vsel %vm628, %v3253, 0
        %v3288 = vsel %vm628, %v3254, 0
        %v3291 = vsel %vm628, %v3255, 0
        %v3294 = vsel %vm628, %v3256, 0
        %v3297 = vsel %vm628, %v3257, 0
        %v3300 = vsel %vm628, %v3258, 0
        %v3303 = vsel %vm628, %v3259, 0
        %v3306 = vsel %vm628, %v3260, 0
        %3308 = vmatprep.subr.bf16.mxu0 0
        %3309 = vmatpush1.bf16.msra.mxu0 0
        %3310 = vmatprep.subr.bf16.mxu0 0
        %3311 = vmatpush1.bf16.msra.mxu0 0
        %3312 = vmatprep.subr.bf16.mxu0 0
        %3313 = vmatpush1.bf16.msra.mxu0 0
        %3314 = vmatprep.subr.bf16.mxu0 0
        %3315 = vmatpush1.bf16.msra.mxu0 0
        %3316 = vmatprep.subr.bf16.mxu0 0
        %3317 = vmatpush1.bf16.msra.mxu0 0
        %3318 = vmatprep.subr.bf16.mxu0 0
        %3319 = vmatpush1.bf16.msra.mxu0 0
        %3320 = vmatprep.subr.bf16.mxu0 0
        %3321 = vmatpush1.bf16.msra.mxu0 %v3281
        %3322 = vmatprep.subr.bf16.mxu0 0
        %3323 = vmatpush1.bf16.msra.mxu0 %v3280
        %3324 = vmatprep.subr.bf16.mxu0 0
        %3325 = vmatpush2.bf16.msra.mxu0 0
        %3326 = vmatprep.subr.bf16.mxu0 0
        %3327 = vmatpush2.bf16.msra.mxu0 0
        %3328 = vmatprep.subr.bf16.mxu0 0
        %3329 = vmatpush2.bf16.msra.mxu0 0
        %3330 = vmatprep.subr.bf16.mxu0 0
        %3331 = vmatpush2.bf16.msra.mxu0 0
        %3332 = vmatprep.subr.bf16.mxu0 0
        %3333 = vmatpush2.bf16.msra.mxu0 0
        %3334 = vmatprep.subr.bf16.mxu0 0
        %3335 = vmatpush2.bf16.msra.mxu0 0
        %3336 = vmatprep.subr.bf16.mxu0 0
        %3337 = vmatpush2.bf16.msra.mxu0 0
        %3338 = vmatprep.subr.bf16.mxu0 0
        %3339 = vmatpush2.bf16.msra.mxu0 0
        %3340 = vmatprep.mubr.bf16.mxu0 0
        %3341 = vmatmul.mubr.bf16.gmra.mxu0 %v3285
        %v3342 = vpop.f32.mrf.mxu0
        %v3343 = vadd.f32 %v3270, %v3342
        %v3344 = vpop.f32.mrf.mxu0
        %v3345 = vpop.f32.mrf.mxu0
        %v3346 = vadd.f32 %v3270, %v3345
        %v3347 = vpop.f32.mrf.mxu0
        %3348 = vmatprep.mubr.bf16.mxu0 0
        %3349 = vmatmul.mubr.bf16.gmra.mxu0 %v3288
        %v3350 = vpop.f32.mrf.mxu0
        %v3351 = vadd.f32 %v3270, %v3350
        %v3352 = vpop.f32.mrf.mxu0
        %v3353 = vpop.f32.mrf.mxu0
        %v3354 = vadd.f32 %v3270, %v3353
        %v3355 = vpop.f32.mrf.mxu0
        %3356 = vmatprep.mubr.bf16.mxu0 0
        %3357 = vmatmul.mubr.bf16.gmra.mxu0 %v3291
        %v3358 = vpop.f32.mrf.mxu0
        %v3359 = vadd.f32 %v3270, %v3358
        %v3360 = vpop.f32.mrf.mxu0
        %v3361 = vpop.f32.mrf.mxu0
        %v3362 = vadd.f32 %v3270, %v3361
        %v3363 = vpop.f32.mrf.mxu0
        %3364 = vmatprep.mubr.bf16.mxu0 0
        %3365 = vmatmul.mubr.bf16.gmra.mxu0 %v3294
        %v3366 = vpop.f32.mrf.mxu0
        %v3367 = vadd.f32 %v3270, %v3366
        %v3368 = vpop.f32.mrf.mxu0
        %v3369 = vpop.f32.mrf.mxu0
        %v3370 = vadd.f32 %v3270, %v3369
        %v3371 = vpop.f32.mrf.mxu0
        %3372 = vmatprep.mubr.bf16.mxu0 0
        %3373 = vmatmul.mubr.bf16.gmra.mxu0 %v3297
        %v3374 = vpop.f32.mrf.mxu0
        %v3375 = vadd.f32 %v3270, %v3374
        %v3376 = vpop.f32.mrf.mxu0
        %v3377 = vpop.f32.mrf.mxu0
        %v3378 = vadd.f32 %v3270, %v3377
        %v3379 = vpop.f32.mrf.mxu0
        %3380 = vmatprep.mubr.bf16.mxu0 0
        %3381 = vmatmul.mubr.bf16.gmra.mxu0 %v3300
        %v3382 = vpop.f32.mrf.mxu0
        %v3383 = vadd.f32 %v3270, %v3382
        %v3384 = vpop.f32.mrf.mxu0
        %v3385 = vpop.f32.mrf.mxu0
        %v3386 = vadd.f32 %v3270, %v3385
        %v3387 = vpop.f32.mrf.mxu0
        %3388 = vmatprep.mubr.bf16.mxu0 0
        %3389 = vmatmul.mubr.bf16.gmra.mxu0 %v3303
        %v3390 = vpop.f32.mrf.mxu0
        %v3391 = vadd.f32 %v3270, %v3390
        %v3392 = vpop.f32.mrf.mxu0
        %v3393 = vpop.f32.mrf.mxu0
        %v3394 = vadd.f32 %v3270, %v3393
        %v3395 = vpop.f32.mrf.mxu0
        %3396 = vmatprep.mubr.bf16.mxu0 0
        %3397 = vmatmul.mubr.bf16.gmra.mxu0 %v3306
        %v3398 = vpop.f32.mrf.mxu0
        %v3399 = vadd.f32 %v3270, %v3398
        %v3400 = vpop.f32.mrf.mxu0
        %v3401 = vpop.f32.mrf.mxu0
        %v3402 = vadd.f32 %v3270, %v3401
        %v3403 = vpop.f32.mrf.mxu0
        %3404 = vdwg.mxu0
        %v3405 = vadd.f32 %v3343, %v549
        %v3406 = vadd.f32 %v3346, %v550
        %v3407 = vadd.f32 %v3351, %v551
        %v3408 = vadd.f32 %v3354, %v552
        %v3409 = vadd.f32 %v3359, %v553
        %v3410 = vadd.f32 %v3362, %v554
        %v3411 = vadd.f32 %v3367, %v555
        %v3412 = vadd.f32 %v3370, %v556
        %v3413 = vadd.f32 %v3375, %v557
        %v3414 = vadd.f32 %v3378, %v558
        %v3415 = vadd.f32 %v3383, %v559
        %v3416 = vadd.f32 %v3386, %v560
        %v3417 = vadd.f32 %v3391, %v561
        %v3418 = vadd.f32 %v3394, %v562
        %v3419 = vadd.f32 %v3399, %v563
        %v3420 = vadd.f32 %v3402, %v564
        %v3421 = vsel %vm628, %v3405, 0.0
        %3422 = vadd.xlane.f32.xlu0 %v3421
        %v3423 = vpop.xlane.xlu0 %3422
        %v3424 = vsel %vm628, %v3406, 0.0
        %3425 = vadd.xlane.f32.xlu0 %v3424
        %v3426 = vpop.xlane.xlu0 %3425
        %v3427 = vsel %vm628, %v3407, 0.0
        %3428 = vadd.xlane.f32.xlu0 %v3427
        %v3429 = vpop.xlane.xlu0 %3428
        %v3430 = vsel %vm628, %v3408, 0.0
        %3431 = vadd.xlane.f32.xlu0 %v3430
        %v3432 = vpop.xlane.xlu0 %3431
        %v3433 = vsel %vm628, %v3409, 0.0
        %3434 = vadd.xlane.f32.xlu0 %v3433
        %v3435 = vpop.xlane.xlu0 %3434
        %v3436 = vsel %vm628, %v3410, 0.0
        %3437 = vadd.xlane.f32.xlu0 %v3436
        %v3438 = vpop.xlane.xlu0 %3437
        %v3439 = vsel %vm628, %v3411, 0.0
        %3440 = vadd.xlane.f32.xlu0 %v3439
        %v3441 = vpop.xlane.xlu0 %3440
        %v3442 = vsel %vm628, %v3412, 0.0
        %3443 = vadd.xlane.f32.xlu0 %v3442
        %v3444 = vpop.xlane.xlu0 %3443
        %v3445 = vsel %vm628, %v3413, 0.0
        %3446 = vadd.xlane.f32.xlu0 %v3445
        %v3447 = vpop.xlane.xlu0 %3446
        %v3448 = vsel %vm628, %v3414, 0.0
        %3449 = vadd.xlane.f32.xlu0 %v3448
        %v3450 = vpop.xlane.xlu0 %3449
        %v3451 = vsel %vm628, %v3415, 0.0
        %3452 = vadd.xlane.f32.xlu0 %v3451
        %v3453 = vpop.xlane.xlu0 %3452
        %v3454 = vsel %vm628, %v3416, 0.0
        %3455 = vadd.xlane.f32.xlu0 %v3454
        %v3456 = vpop.xlane.xlu0 %3455
        %v3457 = vsel %vm628, %v3417, 0.0
        %3458 = vadd.xlane.f32.xlu0 %v3457
        %v3459 = vpop.xlane.xlu0 %3458
        %v3460 = vsel %vm628, %v3418, 0.0
        %3461 = vadd.xlane.f32.xlu0 %v3460
        %v3462 = vpop.xlane.xlu0 %3461
        %v3463 = vsel %vm628, %v3419, 0.0
        %3464 = vadd.xlane.f32.xlu0 %v3463
        %v3465 = vpop.xlane.xlu0 %3464
        %v3466 = vsel %vm628, %v3420, 0.0
        %3467 = vadd.xlane.f32.xlu0 %v3466
        %v3468 = vpop.xlane.xlu0 %3467
        %v3469 = vrcp.pop 32.0
        %v3470 = vmul.f32 %v3423, %v3469
        %v3471 = vmul.f32 %v3426, %v3469
        %v3472 = vmul.f32 %v3429, %v3469
        %v3473 = vmul.f32 %v3432, %v3469
        %v3474 = vmul.f32 %v3435, %v3469
        %v3475 = vmul.f32 %v3438, %v3469
        %v3476 = vmul.f32 %v3441, %v3469
        %v3477 = vmul.f32 %v3444, %v3469
        %v3478 = vmul.f32 %v3447, %v3469
        %v3479 = vmul.f32 %v3450, %v3469
        %v3480 = vmul.f32 %v3453, %v3469
        %v3481 = vmul.f32 %v3456, %v3469
        %v3482 = vmul.f32 %v3459, %v3469
        %v3483 = vmul.f32 %v3462, %v3469
        %v3484 = vmul.f32 %v3465, %v3469
        %v3485 = vmul.f32 %v3468, %v3469
        %v3486 = vsub.f32 %v3405, %v3470
        %v3487 = vsub.f32 %v3406, %v3471
        %v3488 = vsub.f32 %v3407, %v3472
        %v3489 = vsub.f32 %v3408, %v3473
        %v3490 = vsub.f32 %v3409, %v3474
        %v3491 = vsub.f32 %v3410, %v3475
        %v3492 = vsub.f32 %v3411, %v3476
        %v3493 = vsub.f32 %v3412, %v3477
        %v3494 = vsub.f32 %v3413, %v3478
        %v3495 = vsub.f32 %v3414, %v3479
        %v3496 = vsub.f32 %v3415, %v3480
        %v3497 = vsub.f32 %v3416, %v3481
        %v3498 = vsub.f32 %v3417, %v3482
        %v3499 = vsub.f32 %v3418, %v3483
        %v3500 = vsub.f32 %v3419, %v3484
        %v3501 = vsub.f32 %v3420, %v3485
        %v3502 = vmul.f32 %v3486, %v3486
        %v3503 = vmul.f32 %v3487, %v3487
        %v3504 = vmul.f32 %v3488, %v3488
        %v3505 = vmul.f32 %v3489, %v3489
        %v3506 = vmul.f32 %v3490, %v3490
        %v3507 = vmul.f32 %v3491, %v3491
        %v3508 = vmul.f32 %v3492, %v3492
        %v3509 = vmul.f32 %v3493, %v3493
        %v3510 = vmul.f32 %v3494, %v3494
        %v3511 = vmul.f32 %v3495, %v3495
        %v3512 = vmul.f32 %v3496, %v3496
        %v3513 = vmul.f32 %v3497, %v3497
        %v3514 = vmul.f32 %v3498, %v3498
        %v3515 = vmul.f32 %v3499, %v3499
        %v3516 = vmul.f32 %v3500, %v3500
        %v3517 = vmul.f32 %v3501, %v3501
        %v3518 = vsel %vm628, %v3502, 0.0
        %3519 = vadd.xlane.f32.xlu0 %v3518
        %v3520 = vpop.xlane.xlu0 %3519
        %v3521 = vsel %vm628, %v3503, 0.0
        %3522 = vadd.xlane.f32.xlu0 %v3521
        %v3523 = vpop.xlane.xlu0 %3522
        %v3524 = vsel %vm628, %v3504, 0.0
        %3525 = vadd.xlane.f32.xlu0 %v3524
        %v3526 = vpop.xlane.xlu0 %3525
        %v3527 = vsel %vm628, %v3505, 0.0
        %3528 = vadd.xlane.f32.xlu0 %v3527
        %v3529 = vpop.xlane.xlu0 %3528
        %v3530 = vsel %vm628, %v3506, 0.0
        %3531 = vadd.xlane.f32.xlu0 %v3530
        %v3532 = vpop.xlane.xlu0 %3531
        %v3533 = vsel %vm628, %v3507, 0.0
        %3534 = vadd.xlane.f32.xlu0 %v3533
        %v3535 = vpop.xlane.xlu0 %3534
        %v3536 = vsel %vm628, %v3508, 0.0
        %3537 = vadd.xlane.f32.xlu0 %v3536
        %v3538 = vpop.xlane.xlu0 %3537
        %v3539 = vsel %vm628, %v3509, 0.0
        %3540 = vadd.xlane.f32.xlu0 %v3539
        %v3541 = vpop.xlane.xlu0 %3540
        %v3542 = vsel %vm628, %v3510, 0.0
        %3543 = vadd.xlane.f32.xlu0 %v3542
        %v3544 = vpop.xlane.xlu0 %3543
        %v3545 = vsel %vm628, %v3511, 0.0
        %3546 = vadd.xlane.f32.xlu0 %v3545
        %v3547 = vpop.xlane.xlu0 %3546
        %v3548 = vsel %vm628, %v3512, 0.0
        %3549 = vadd.xlane.f32.xlu0 %v3548
        %v3550 = vpop.xlane.xlu0 %3549
        %v3551 = vsel %vm628, %v3513, 0.0
        %3552 = vadd.xlane.f32.xlu0 %v3551
        %v3553 = vpop.xlane.xlu0 %3552
        %v3554 = vsel %vm628, %v3514, 0.0
        %3555 = vadd.xlane.f32.xlu0 %v3554
        %v3556 = vpop.xlane.xlu0 %3555
        %v3557 = vsel %vm628, %v3515, 0.0
        %3558 = vadd.xlane.f32.xlu0 %v3557
        %v3559 = vpop.xlane.xlu0 %3558
        %v3560 = vsel %vm628, %v3516, 0.0
        %3561 = vadd.xlane.f32.xlu0 %v3560
        %v3562 = vpop.xlane.xlu0 %3561
        %v3563 = vsel %vm628, %v3517, 0.0
        %3564 = vadd.xlane.f32.xlu0 %v3563
        %v3565 = vpop.xlane.xlu0 %3564
        %v3566 = vmul.f32 %v3520, %v3469
        %v3567 = vmul.f32 %v3523, %v3469
        %v3568 = vmul.f32 %v3526, %v3469
        %v3569 = vmul.f32 %v3529, %v3469
        %v3570 = vmul.f32 %v3532, %v3469
        %v3571 = vmul.f32 %v3535, %v3469
        %v3572 = vmul.f32 %v3538, %v3469
        %v3573 = vmul.f32 %v3541, %v3469
        %v3574 = vmul.f32 %v3544, %v3469
        %v3575 = vmul.f32 %v3547, %v3469
        %v3576 = vmul.f32 %v3550, %v3469
        %v3577 = vmul.f32 %v3553, %v3469
        %v3578 = vmul.f32 %v3556, %v3469
        %v3579 = vmul.f32 %v3559, %v3469
        %v3580 = vmul.f32 %v3562, %v3469
        %v3581 = vmul.f32 %v3565, %v3469
        %v3582 = vadd.f32 %v3566, 1e-06
        %v3583 = vadd.f32 %v3567, 1e-06
        %v3584 = vadd.f32 %v3568, 1e-06
        %v3585 = vadd.f32 %v3569, 1e-06
        %v3586 = vadd.f32 %v3570, 1e-06
        %v3587 = vadd.f32 %v3571, 1e-06
        %v3588 = vadd.f32 %v3572, 1e-06
        %v3589 = vadd.f32 %v3573, 1e-06
        %v3590 = vadd.f32 %v3574, 1e-06
        %v3591 = vadd.f32 %v3575, 1e-06
        %v3592 = vadd.f32 %v3576, 1e-06
        %v3593 = vadd.f32 %v3577, 1e-06
        %v3594 = vadd.f32 %v3578, 1e-06
        %v3595 = vadd.f32 %v3579, 1e-06
        %v3596 = vadd.f32 %v3580, 1e-06
        %v3597 = vadd.f32 %v3581, 1e-06
        %v3598 = vrsqrt.pop %v3582
        %v3599 = vrsqrt.pop %v3583
        %v3600 = vrsqrt.pop %v3584
        %v3601 = vrsqrt.pop %v3585
        %v3602 = vrsqrt.pop %v3586
        %v3603 = vrsqrt.pop %v3587
        %v3604 = vrsqrt.pop %v3588
        %v3605 = vrsqrt.pop %v3589
        %v3606 = vrsqrt.pop %v3590
        %v3607 = vrsqrt.pop %v3591
        %v3608 = vrsqrt.pop %v3592
        %v3609 = vrsqrt.pop %v3593
        %v3610 = vrsqrt.pop %v3594
        %v3611 = vrsqrt.pop %v3595
        %v3612 = vrsqrt.pop %v3596
        %v3613 = vrsqrt.pop %v3597
        %v3614 = vmul.f32 %v3486, %v3598
        %v3615 = vmul.f32 %v3487, %v3599
        %v3616 = vmul.f32 %v3488, %v3600
        %v3617 = vmul.f32 %v3489, %v3601
        %v3618 = vmul.f32 %v3490, %v3602
        %v3619 = vmul.f32 %v3491, %v3603
        %v3620 = vmul.f32 %v3492, %v3604
        %v3621 = vmul.f32 %v3493, %v3605
        %v3622 = vmul.f32 %v3494, %v3606
        %v3623 = vmul.f32 %v3495, %v3607
        %v3624 = vmul.f32 %v3496, %v3608
        %v3625 = vmul.f32 %v3497, %v3609
        %v3626 = vmul.f32 %v3498, %v3610
        %v3627 = vmul.f32 %v3499, %v3611
        %v3628 = vmul.f32 %v3500, %v3612
        %v3629 = vmul.f32 %v3501, %v3613
        %v3630 = vld [vmem:[%s12] sm:$0x1]
        %v3632 = vlaneseq
        %v3633 = vshrl.u32 %v3632, 7
        %v3634 = vsub.s32 0, %v3633
        %v3635 = vrot.slane %v3630, %v3634
        %v3637 = vmul.f32 %v3614, %v3635
        %v3638 = vmul.f32 %v3615, %v3635
        %v3639 = vmul.f32 %v3616, %v3635
        %v3640 = vmul.f32 %v3617, %v3635
        %v3641 = vmul.f32 %v3618, %v3635
        %v3642 = vmul.f32 %v3619, %v3635
        %v3643 = vmul.f32 %v3620, %v3635
        %v3644 = vmul.f32 %v3621, %v3635
        %v3645 = vmul.f32 %v3622, %v3635
        %v3646 = vmul.f32 %v3623, %v3635
        %v3647 = vmul.f32 %v3624, %v3635
        %v3648 = vmul.f32 %v3625, %v3635
        %v3649 = vmul.f32 %v3626, %v3635
        %v3650 = vmul.f32 %v3627, %v3635
        %v3651 = vmul.f32 %v3628, %v3635
        %v3652 = vmul.f32 %v3629, %v3635
        %v3653 = vld [vmem:[%s13] sm:$0x1]
        %v3655 = vlaneseq
        %v3656 = vshrl.u32 %v3655, 7
        %v3657 = vsub.s32 0, %v3656
        %v3658 = vrot.slane %v3653, %v3657
        %v3660 = vadd.f32 %v3637, %v3658
        %v3661 = vadd.f32 %v3638, %v3658
        %v3662 = vadd.f32 %v3639, %v3658
        %v3663 = vadd.f32 %v3640, %v3658
        %v3664 = vadd.f32 %v3641, %v3658
        %v3665 = vadd.f32 %v3642, %v3658
        %v3666 = vadd.f32 %v3643, %v3658
        %v3667 = vadd.f32 %v3644, %v3658
        %v3668 = vadd.f32 %v3645, %v3658
        %v3669 = vadd.f32 %v3646, %v3658
        %v3670 = vadd.f32 %v3647, %v3658
        %v3671 = vadd.f32 %v3648, %v3658
        %v3672 = vadd.f32 %v3649, %v3658
        %v3673 = vadd.f32 %v3650, %v3658
        %v3674 = vadd.f32 %v3651, %v3658
        %v3675 = vadd.f32 %v3652, %v3658
        %3676 = vst.msk [vmem:[%s547] sm:$0xff] %vm628, %v3660
        %3677 = vst.msk [vmem:[%s547 + $0x8] sm:$0xff] %vm628, %v3661
        %3678 = vst.msk [vmem:[%s547 + $0x10] sm:$0xff] %vm628, %v3662
        %3679 = vst.msk [vmem:[%s547 + $0x18] sm:$0xff] %vm628, %v3663
        %3680 = vst.msk [vmem:[%s547 + $0x20] sm:$0xff] %vm628, %v3664
        %3681 = vst.msk [vmem:[%s547 + $0x28] sm:$0xff] %vm628, %v3665
        %3682 = vst.msk [vmem:[%s547 + $0x30] sm:$0xff] %vm628, %v3666
        %3683 = vst.msk [vmem:[%s547 + $0x38] sm:$0xff] %vm628, %v3667
        %3684 = vst.msk [vmem:[%s547 + $0x40] sm:$0xff] %vm628, %v3668
        %3685 = vst.msk [vmem:[%s547 + $0x48] sm:$0xff] %vm628, %v3669
        %3686 = vst.msk [vmem:[%s547 + $0x50] sm:$0xff] %vm628, %v3670
        %3687 = vst.msk [vmem:[%s547 + $0x58] sm:$0xff] %vm628, %v3671
        %3688 = vst.msk [vmem:[%s547 + $0x60] sm:$0xff] %vm628, %v3672
        %3689 = vst.msk [vmem:[%s547 + $0x68] sm:$0xff] %vm628, %v3673
        %3690 = vst.msk [vmem:[%s547 + $0x70] sm:$0xff] %vm628, %v3674
        %3691 = vst.msk [vmem:[%s547 + $0x78] sm:$0xff] %vm628, %v3675
        %p3692 = scmp.lt.s32.totalorder %s28, 1
        %s3693 = scalar_select %p3692, %s28, 1
        %s3694 = smul.addr %s3693, 16
        %s3695 = smul.addr %s3694, 8
        %s3696 = scalar_lea.vmem %s14, %s3695
        // Predicated region
        $region81: #{tpu_custom_call.1} parent=75 // pred_check
          %p3697 = pneg %p360
        $region82: #{tpu_custom_call.1} parent=75 // pred_check_branch
          %3699 = sbr.rel (%p3697) target = $region84
        $region83: #{tpu_custom_call.1} parent=75 // pred_region
          _
        $region84: #{tpu_custom_call.1} parent=75 // pred_fallthru
          _
      $region76: #{tpu_custom_call.1} parent=5 // pred_fallthru
        _
      %p3700 = scmp.le.s32.totalorder 2, %s23
      // Predicated region
      $region85: #{tpu_custom_call.1} parent=5 // pred_check
        %p3701 = pneg %p3700
      $region86: #{tpu_custom_call.1} parent=5 // pred_check_branch
        %3703 = sbr.rel (%p3701) target = $region88
      $region87: #{tpu_custom_call.1} parent=5 // pred_region
        %s3704 = ssub.s32 %s23, 2
        // Predicated region
        $region89: #{tpu_custom_call.1} parent=87 // pred_check
          %p3705 = pneg %p366
        $region90: #{tpu_custom_call.1} parent=87 // pred_check_branch
          %3707 = sbr.rel (%p3705) target = $region92
        $region91: #{tpu_custom_call.1} parent=87 // pred_region
          %p3708 = scmp.lt.s32.totalorder %s29, 1
          %s3709 = scalar_select %p3708, %s29, 1
          %s3710 = smul.addr %s3709, 16
          %s3711 = smul.addr %s3710, 8
          %s3712 = scalar_lea.vmem %s14, %s3711
        $region92: #{tpu_custom_call.1} parent=87 // pred_fallthru
          _
      $region88: #{tpu_custom_call.1} parent=5 // pred_fallthru
        _
    $region6: #{tpu_custom_call.1} parent=1 // loop_footer
      %s27 = sadd.s32 1, %s23
    $region7: #{tpu_custom_call.1} parent=1 // loop_footer_branch
      %22 = sbr.rel target = $region3
    $region8: #{tpu_custom_call.1} parent=1 // loop_exit
      _
    %3713 = vsyncpa [#allocation4], 1
    %s3714 = scalar_lea.sflag [#allocation4], 1
    %3715 = vsyncpa %s3714, 1

</llo_original>
